<compile_context>
chip_gen: v7x
topology: tpu7x:2x2x1
jax: 0.10.0
libtpu: 0.0.40
codegen_flags: <defaults>
</compile_context>

<pallas_src>
import functools

import jax
import jax.numpy as jnp
from jax.experimental import pallas as pl
from jax.experimental.pallas import tpu as pltpu


# ----------------------------- kernel helpers -----------------------------

def _layernorm(x, g, b, eps=1e-5):
    mu = jnp.mean(x, axis=-1, keepdims=True)
    var = jnp.mean((x - mu) ** 2, axis=-1, keepdims=True)
    return (x - mu) * jax.lax.rsqrt(var + eps) * g + b


def _attention(q_in, k_in, v_in, wq, wk, wv, wo, bq, bk, bv, bo,
               *, nhead, ng, lq, lk, scale):
    """Multi-head attention over a flattened batch group.

    q_in:(ng*lq,E) f32, k_in/v_in:(ng*lk,E) f32; weights (E,E) bf16 (promoted
    to f32 for the MXU matmuls); biases (1,E) f32.

    K is transposed ONCE per attention so per-head scores are plain
    (lq,Dh)@(Dh,lk) matmuls (no implicit per-head transpose).  Each head's AV
    is immediately contracted against its K=Dh slice of W_o and accumulated in
    vregs (no VMEM scratch, no sub-lane masked stores).
    """
    E = q_in.shape[-1]
    Dh = E // nhead
    # PyTorch MHA scales q *after* the in-projection (bias included).
    q = (jnp.dot(q_in, wq, preferred_element_type=jnp.float32) + bq) * scale
    k = jnp.dot(k_in, wk, preferred_element_type=jnp.float32) + bk
    v = jnp.dot(v_in, wv, preferred_element_type=jnp.float32) + bv
    kT = k.T                                  # one XLU transpose per attention
    wo_f = wo.astype(jnp.float32)             # cast once, sliced per head below
    outs = []
    for b in range(ng):                       # static unroll over batch-in-group
        qb = q[b * lq:(b + 1) * lq]           # (lq, E)
        kTb = kT[:, b * lk:(b + 1) * lk]      # (E, lk)
        vb = v[b * lk:(b + 1) * lk]           # (lk, E)
        acc = None
        for h in range(nhead):                # static unroll over heads
            sl = slice(h * Dh, (h + 1) * Dh)
            s = jnp.dot(qb[:, sl], kTb[sl, :], preferred_element_type=jnp.float32)
            s = s - jnp.max(s, axis=-1, keepdims=True)
            p = jnp.exp(s)
            p = p / jnp.sum(p, axis=-1, keepdims=True)
            av = jnp.dot(p, vb[:, sl], preferred_element_type=jnp.float32)
            contrib = jnp.dot(av, wo_f[sl, :], preferred_element_type=jnp.float32)
            acc = contrib if acc is None else acc + contrib
        outs.append(acc + bo)
    return outs[0] if ng == 1 else jnp.concatenate(outs, axis=0)


# ------------------------- fused decoder-stack kernel -------------------------

def fused_decoder_kernel(tq_ref, tkv_ref, mk_ref, mv_ref,
                         aw_ref, w1_ref, w2_ref, vec_ref, b1_ref, fgb_ref,
                         out_ref, *, nhead, ng, lq, lkv, ls):
    l = pl.program_id(1)

    # Layer 0 seeds the resident activation.  The output block index depends
    # only on the (parallel) batch-group axis, so the block stays in VMEM
    # across the whole (arbitrary) layer axis.
    @pl.when(l == 0)
    def _():
        out_ref[...] = tq_ref[...]

    E = out_ref.shape[-1]
    scale = 1.0 / float(E // nhead) ** 0.5

    x = out_ref[0]            # (ng*lq, E)  current-layer input (prev layer output)
    vec = vec_ref[0]          # (16, E): 0-7 attn biases, 8-13 LN g/b, 14 ffn b2

    # --- self attention: q = x, k = v = tgt_kv (dropout = identity, eval) ---
    sa = _attention(x, tkv_ref[0], tkv_ref[0],
                    aw_ref[0, 0], aw_ref[0, 1], aw_ref[0, 2], aw_ref[0, 3],
                    vec[0:1], vec[1:2], vec[2:3], vec[3:4],
                    nhead=nhead, ng=ng, lq=lq, lk=lkv, scale=scale)
    x = _layernorm(x + sa, vec[8:9], vec[9:10])

    # --- cross attention: query = x (query_pos dropped by layer.forward),
    #     key = memory + pos, value = memory ---
    ca = _attention(x, mk_ref[0], mv_ref[0],
                    aw_ref[0, 4], aw_ref[0, 5], aw_ref[0, 6], aw_ref[0, 7],
                    vec[4:5], vec[5:6], vec[6:7], vec[7:8],
                    nhead=nhead, ng=ng, lq=lq, lk=ls, scale=scale)
    x = _layernorm(x + ca, vec[10:11], vec[11:12])

    # --- feed-forward: linear2(relu(linear1(x))), residual, norm3 ---
    h = jnp.maximum(
        jnp.dot(x, w1_ref[0], preferred_element_type=jnp.float32) + b1_ref[0], 0.0)
    f = jnp.dot(h, w2_ref[0], preferred_element_type=jnp.float32) + vec[14:15]
    x = _layernorm(x + f, vec[12:13], vec[13:14])

    out_ref[0] = x

    # --- decoder-level final LayerNorm folded into the last layer step ---
    @pl.when(l == pl.num_programs(1) - 1)
    def _():
        fgb = fgb_ref[...]
        out_ref[0] = _layernorm(x, fgb[0:1], fgb[1:2])


# ------------------------------ JAX wrappers ------------------------------

def run_fused_decoder(tgt_q, tgt_kv, mem_k, mem_v, p, nhead, num_batch_groups=None):
    N, Lq, E = tgt_q.shape
    Lkv = tgt_kv.shape[1]
    S = mem_k.shape[1]
    NL = p['attn_w'].shape[0]
    Dff = p['w1'].shape[2]

    # >=2 batch groups keeps a "parallel" leading grid axis (both v7x TCs used);
    # per-layer weights are streamed once per GROUP (xNB) instead of once per
    # batch element (xN).
    NB = min(2, N) if num_batch_groups is None else num_batch_groups
    assert N % NB == 0
    Ng = N // NB
    Mq, Mkv, Ms = Ng * Lq, Ng * Lkv, Ng * S

    # Fold batch into the activation block (raises matmul M from Lq to Ng*Lq).
    tq = tgt_q.reshape(NB, Mq, E)
    tkv = tgt_kv.reshape(NB, Mkv, E)
    mk = mem_k.reshape(NB, Ms, E)
    mv = mem_v.reshape(NB, Ms, E)

    # Pack all small per-layer E-width vectors into one layer-indexed array:
    # rows 0-7 attn biases (sa q,k,v,o | ca q,k,v,o), 8-13 LayerNorm g/b x3,
    # 14 ffn output bias b2, 15 pad  -> one DMA descriptor instead of four.
    vecs = jnp.concatenate(
        [p['attn_b'], p['norms'], p['b2'],
         jnp.zeros((NL, 1, E), jnp.float32)], axis=1)

    def act_spec(M):
        return pl.BlockSpec((1, M, E), lambda g, l: (g, 0, 0))

    def layer_spec(*dims):
        n = len(dims)
        return pl.BlockSpec((1,) + dims, lambda g, l, n=n: (l,) + (0,) * n)

    flops = NL * N * (
        2 * E * E * (2 * Lq + 2 * Lkv)        # SA q,k,v,o projections
        + 2 * E * E * (2 * Lq + 2 * S)        # CA q,k,v,o projections
        + 4 * Lq * (Lkv + S) * E              # scores + AV (all heads)
        + 4 * Lq * E * Dff)                   # FFN
    weight_bytes = NB * NL * ((8 * E * E + 2 * E * Dff) * 2     # bf16 matmul weights
                              + (16 * E + Dff) * 4)             # packed vecs + b1
    act_bytes = 4 * N * (2 * Lq + Lkv + 2 * S) * E + 4 * 2 * E
    cost = pl.CostEstimate(
        flops=flops,
        transcendentals=NL * N * nhead * Lq * (Lkv + S),
        bytes_accessed=weight_bytes + act_bytes)

    out = pl.pallas_call(
        functools.partial(fused_decoder_kernel,
                          nhead=nhead, ng=Ng, lq=Lq, lkv=Lkv, ls=S),
        out_shape=jax.ShapeDtypeStruct((NB, Mq, E), jnp.float32),
        grid=(NB, NL),                         # batch-group (parallel), layer (carry)
        in_specs=[
            act_spec(Mq),                      # tgt_q          (NB, Mq, E)  f32
            act_spec(Mkv),                     # tgt_kv         (NB, Mkv, E) f32
            act_spec(Ms),                      # memory + pos   (NB, Ms, E)  f32
            act_spec(Ms),                      # memory         (NB, Ms, E)  f32
            layer_spec(8, E, E),               # attn weights   (L, 8, E, E) bf16
            layer_spec(E, Dff),                # w1             (L, E, Dff)  bf16
            layer_spec(Dff, E),                # w2             (L, Dff, E)  bf16
            layer_spec(16, E),                 # packed biases/norms (L,16,E) f32
            layer_spec(1, Dff),                # b1             (L, 1, Dff)  f32
            pl.BlockSpec((2, E), lambda g, l: (0, 0)),   # final norm (2, E)
        ],
        out_specs=act_spec(Mq),
        compiler_params=pltpu.CompilerParams(
            dimension_semantics=("parallel", "arbitrary"),
            # blocks here total ~1 MB; keep the limit well under v7x's 64 MiB.
            vmem_limit_bytes=48 * 1024 * 1024),
        cost_estimate=cost,
    )(tq, tkv, mk, mv,
      p['attn_w'], p['w1'], p['w2'], vecs, p['b1'], p['final_norm'])

    return out.reshape(N, Lq, E)


def transformer_dec_forward(params, feat, tgt, feat_len_s, pos, query_embed, nhead):
    """hs = decoder(tgt, memory=feat, pos=pos, query_pos=query_embed).

    feat_len_s and query_embed are unused by the reference forward path
    (feat_len_s is never read; layer.forward drops query_pos)."""
    del feat_len_s, query_embed
    tgt_q, tgt_kv = tgt
    mem_k = feat + pos      # layer-invariant cross-attention key input, computed once
    out = run_fused_decoder(tgt_q, tgt_kv, mem_k, feat, params, nhead)
    return [out, tgt_kv]


# ------------------------- deterministic parameters -------------------------

def _xavier(key, shape):
    limit = (6.0 / (shape[0] + shape[1])) ** 0.5
    return jax.random.uniform(key, shape, jnp.float32, -limit, limit)


def init_params(key, E, Dff, num_layers):
    aw, ab, w1, b1, w2, b2, norms = [], [], [], [], [], [], []
    for _ in range(num_layers):
        key, *ks = jax.random.split(key, 14)
        # rows 0-3: self-attn wq,wk,wv,wo ; rows 4-7: cross-attn wq,wk,wv,wo
        aw.append(jnp.stack([_xavier(ks[i], (E, E)) for i in range(8)]))
        ab.append(0.02 * jax.random.normal(ks[8], (8, E), jnp.float32))
        w1.append(_xavier(ks[9], (E, Dff)))
        b1.append(0.02 * jax.random.normal(ks[10], (1, Dff), jnp.float32))
        w2.append(_xavier(ks[11], (Dff, E)))
        b2.append(0.02 * jax.random.normal(ks[12], (1, E), jnp.float32))
        # LayerNorm default init (weight=1, bias=0) stacked [g1,b1,g2,b2,g3,b3]
        norms.append(jnp.stack([jnp.ones(E), jnp.zeros(E)] * 3).astype(jnp.float32))
    # Big matmul weights are stored/streamed in bf16 (roofline is weight DMA);
    # both the kernel and the reference consume the same bf16 values, promoted
    # to f32 before the matmuls.
    return {
        'attn_w': jnp.stack(aw).astype(jnp.bfloat16),    # (L, 8, E, E)
        'attn_b': jnp.stack(ab),                         # (L, 8, E)   f32
        'w1': jnp.stack(w1).astype(jnp.bfloat16),        # (L, E, Dff)
        'b1': jnp.stack(b1),                             # (L, 1, Dff) f32
        'w2': jnp.stack(w2).astype(jnp.bfloat16),        # (L, Dff, E)
        'b2': jnp.stack(b2),                             # (L, 1, E)   f32
        'norms': jnp.stack(norms),                       # (L, 6, E)   f32
        'final_norm': jnp.stack([jnp.ones(E), jnp.zeros(E)]).astype(jnp.float32),
    }


# ---------------------------- pure-JAX reference ----------------------------

def _ref_layer(tq, tkv, mem, pos, p, nhead):
    def per_batch(tq_b, tkv_b, mem_b, pos_b):
        def mha(qi, ki, vi, wq, wk, wv, wo, bq, bk, bv, bo):
            Lq, E = qi.shape
            Lk = ki.shape[0]
            Dh = E // nhead
            wq, wk, wv, wo = (w.astype(jnp.float32) for w in (wq, wk, wv, wo))
            q = (qi @ wq + bq).reshape(Lq, nhead, Dh).transpose(1, 0, 2)
            k = (ki @ wk + bk).reshape(Lk, nhead, Dh).transpose(1, 0, 2)
            v = (vi @ wv + bv).reshape(Lk, nhead, Dh).transpose(1, 0, 2)
            s = jnp.einsum('hqd,hkd->hqk', q, k) / (Dh ** 0.5)
            pr = jax.nn.softmax(s, axis=-1)
            o = jnp.einsum('hqk,hkd->hqd', pr, v).transpose(1, 0, 2).reshape(Lq, E)
            return o @ wo + bo

        def ln(x, g, b):
            mu = x.mean(-1, keepdims=True)
            var = ((x - mu) ** 2).mean(-1, keepdims=True)
            return (x - mu) / jnp.sqrt(var + 1e-5) * g + b

        aw, ab, n = p['attn_w'], p['attn_b'], p['norms']
        x = tq_b + mha(tq_b, tkv_b, tkv_b, aw[0], aw[1], aw[2], aw[3],
                       ab[0], ab[1], ab[2], ab[3])
        x = ln(x, n[0], n[1])
        x = x + mha(x, mem_b + pos_b, mem_b, aw[4], aw[5], aw[6], aw[7],
                    ab[4], ab[5], ab[6], ab[7])
        x = ln(x, n[2], n[3])
        h = jnp.maximum(x @ p['w1'].astype(jnp.float32) + p['b1'][0], 0.0)
        x = x + (h @ p['w2'].astype(jnp.float32) + p['b2'][0])
        x = ln(x, n[4], n[5])
        return x

    return jax.vmap(per_batch)(tq, tkv, mem, pos)


def _ref_forward(params, feat, tgt, pos, nhead):
    tgt_q, tgt_kv = tgt
    NL = params['attn_w'].shape[0]
    out = tgt_q
    for li in range(NL):
        lp = {k: params[k][li] for k in
              ('attn_w', 'attn_b', 'w1', 'b1', 'w2', 'b2', 'norms')}
        out = _ref_layer(out, tgt_kv, feat, pos, lp, nhead)
    gb = params['final_norm']
    mu = out.mean(-1, keepdims=True)
    var = ((out - mu) ** 2).mean(-1, keepdims=True)
    out = (out - mu) / jnp.sqrt(var + 1e-5) * gb[0] + gb[1]
    return [out, tgt_kv]


# ----------------------------------- main -----------------------------------

if __name__ == "__main__":
    # Small shapes consistent with the module, chosen lane-dense (E multiple of 128).
    E, H, DFF, NLAYERS = 128, 4, 256, 2
    N, LQ, LKV, S = 2, 8, 8, 16
    assert E % H == 0

    key = jax.random.PRNGKey(0)
    kp, k1, k2, k3, k4, k5 = jax.random.split(key, 6)
    params = init_params(kp, E, DFF, NLAYERS)

    feat = jax.random.normal(k1, (N, S, E), jnp.float32)          # memory
    tgt_q = jax.random.normal(k2, (N, LQ, E), jnp.float32)        # tgt[0]
    tgt_kv = jax.random.normal(k3, (N, LKV, E), jnp.float32)      # tgt[1]
    pos = jax.random.normal(k4, (N, S, E), jnp.float32)
    query_embed = jax.random.normal(k5, (N, LQ, E), jnp.float32)  # unused by fwd path
    feat_len_s = S                                                # unused by fwd path

    hs = transformer_dec_forward(params, feat, [tgt_q, tgt_kv],
                                 feat_len_s, pos, query_embed, H)
    hs0 = jax.block_until_ready(hs[0])

    ref = _ref_forward(params, feat, [tgt_q, tgt_kv], pos, H)
    err = float(jnp.max(jnp.abs(hs0 - ref[0])))
    assert jnp.allclose(hs0, ref[0], rtol=2e-4, atol=2e-4), err
    assert jnp.allclose(hs[1], ref[1])
    print("KERNEL_OK")
</pallas_src>

<mosaic_0001>
module attributes {stable_mosaic.version = 11 : i64} {
  func.func @fused_decoder_kernel(%arg0: i32, %arg1: i32, %arg2: memref<1x8x128xf32, #tpu.memory_space<vmem>>, %arg3: memref<1x8x128xf32, #tpu.memory_space<vmem>>, %arg4: memref<1x16x128xf32, #tpu.memory_space<vmem>>, %arg5: memref<1x16x128xf32, #tpu.memory_space<vmem>>, %arg6: memref<1x8x128x128xbf16, #tpu.memory_space<vmem>>, %arg7: memref<1x128x256xbf16, #tpu.memory_space<vmem>>, %arg8: memref<1x256x128xbf16, #tpu.memory_space<vmem>>, %arg9: memref<1x16x128xf32, #tpu.memory_space<vmem>>, %arg10: memref<1x1x256xf32, #tpu.memory_space<vmem>>, %arg11: memref<2x128xf32, #tpu.memory_space<vmem>>, %arg12: memref<1x8x128xf32, #tpu.memory_space<vmem>>) attributes {dimension_semantics = [#tpu.dimension_semantics<parallel>, #tpu.dimension_semantics<arbitrary>], iteration_bounds = array<i64: 2, 2>, scalar_prefetch = 0 : i64, scratch_operands = 0 : i64, tpu.core_type = #tpu.core_type<tc>, window_params = [{transform_indices = @transform_0, window_bounds = array<i64: 1, 8, 128>}, {transform_indices = @transform_1, window_bounds = array<i64: 1, 8, 128>}, {transform_indices = @transform_2, window_bounds = array<i64: 1, 16, 128>}, {transform_indices = @transform_3, window_bounds = array<i64: 1, 16, 128>}, {transform_indices = @transform_4, window_bounds = array<i64: 1, 8, 128, 128>}, {transform_indices = @transform_5, window_bounds = array<i64: 1, 128, 256>}, {transform_indices = @transform_6, window_bounds = array<i64: 1, 256, 128>}, {transform_indices = @transform_7, window_bounds = array<i64: 1, 16, 128>}, {transform_indices = @transform_8, window_bounds = array<i64: 1, 1, 256>}, {pipeline_mode = #tpu.pipeline_mode<synchronous>, transform_indices = @transform_9, window_bounds = array<i64: 2, 128>}, {transform_indices = @transform_10, window_bounds = array<i64: 1, 8, 128>}]} {
    %c0_i32 = arith.constant 0 : i32
    %0 = arith.cmpi eq, %arg1, %c0_i32 : i32
    %1 = arith.extui %0 : i1 to i32
    %c0_i32_0 = arith.constant 0 : i32
    %2 = arith.cmpi ne, %1, %c0_i32_0 : i32
    scf.if %2 {
      %c0_121 = arith.constant 0 : index
      %c0_122 = arith.constant 0 : index
      %c0_123 = arith.constant 0 : index
      %299 = vector.load %arg2[%c0_121, %c0_122, %c0_123] : memref<1x8x128xf32, #tpu.memory_space<vmem>>, vector<1x8x128xf32>
      %c0_124 = arith.constant 0 : index
      %c0_125 = arith.constant 0 : index
      %c0_126 = arith.constant 0 : index
      %300 = vector.load %arg12[%c0_124, %c0_125, %c0_126] : memref<1x8x128xf32, #tpu.memory_space<vmem>>, vector<1x8x128xf32>
      tpu.vector_store %arg12[%c0_124, %c0_125, %c0_126], %299 {strides = array<i32>} : memref<1x8x128xf32, #tpu.memory_space<vmem>>, vector<1x8x128xf32>,
    } else {
    }
    %c0 = arith.constant 0 : index
    %c0_1 = arith.constant 0 : index
    %c0_2 = arith.constant 0 : index
    %3 = vector.load %arg12[%c0, %c0_1, %c0_2] : memref<1x8x128xf32, #tpu.memory_space<vmem>>, vector<1x8x128xf32>
    %4 = vector.shape_cast %3 : vector<1x8x128xf32> to vector<8x128xf32>
    %c0_3 = arith.constant 0 : index
    %c0_4 = arith.constant 0 : index
    %c0_5 = arith.constant 0 : index
    %5 = vector.load %arg9[%c0_3, %c0_4, %c0_5] : memref<1x16x128xf32, #tpu.memory_space<vmem>>, vector<1x16x128xf32>
    %6 = vector.shape_cast %5 : vector<1x16x128xf32> to vector<16x128xf32>
    %c0_6 = arith.constant 0 : index
    %c0_7 = arith.constant 0 : index
    %c0_8 = arith.constant 0 : index
    %7 = vector.load %arg3[%c0_6, %c0_7, %c0_8] : memref<1x8x128xf32, #tpu.memory_space<vmem>>, vector<1x8x128xf32>
    %8 = vector.shape_cast %7 : vector<1x8x128xf32> to vector<8x128xf32>
    %c0_9 = arith.constant 0 : index
    %c0_10 = arith.constant 0 : index
    %c0_11 = arith.constant 0 : index
    %9 = vector.load %arg3[%c0_9, %c0_10, %c0_11] : memref<1x8x128xf32, #tpu.memory_space<vmem>>, vector<1x8x128xf32>
    %10 = vector.shape_cast %9 : vector<1x8x128xf32> to vector<8x128xf32>
    %c0_12 = arith.constant 0 : index
    %c0_13 = arith.constant 0 : index
    %c0_14 = arith.constant 0 : index
    %c0_15 = arith.constant 0 : index
    %11 = vector.load %arg6[%c0_12, %c0_13, %c0_14, %c0_15] : memref<1x8x128x128xbf16, #tpu.memory_space<vmem>>, vector<1x1x128x128xbf16>
    %12 = vector.shape_cast %11 : vector<1x1x128x128xbf16> to vector<128x128xbf16>
    %c0_16 = arith.constant 0 : index
    %c1 = arith.constant 1 : index
    %c0_17 = arith.constant 0 : index
    %c0_18 = arith.constant 0 : index
    %13 = vector.load %arg6[%c0_16, %c1, %c0_17, %c0_18] : memref<1x8x128x128xbf16, #tpu.memory_space<vmem>>, vector<1x1x128x128xbf16>
    %14 = vector.shape_cast %13 : vector<1x1x128x128xbf16> to vector<128x128xbf16>
    %c0_19 = arith.constant 0 : index
    %c2 = arith.constant 2 : index
    %c0_20 = arith.constant 0 : index
    %c0_21 = arith.constant 0 : index
    %15 = vector.load %arg6[%c0_19, %c2, %c0_20, %c0_21] : memref<1x8x128x128xbf16, #tpu.memory_space<vmem>>, vector<1x1x128x128xbf16>
    %16 = vector.shape_cast %15 : vector<1x1x128x128xbf16> to vector<128x128xbf16>
    %c0_22 = arith.constant 0 : index
    %c3 = arith.constant 3 : index
    %c0_23 = arith.constant 0 : index
    %c0_24 = arith.constant 0 : index
    %17 = vector.load %arg6[%c0_22, %c3, %c0_23, %c0_24] : memref<1x8x128x128xbf16, #tpu.memory_space<vmem>>, vector<1x1x128x128xbf16>
    %18 = vector.shape_cast %17 : vector<1x1x128x128xbf16> to vector<128x128xbf16>
    %19 = vector.extract_strided_slice %6 {offsets = [0, 0], sizes = [1, 128], strides = [1, 1]} : vector<16x128xf32> to vector<1x128xf32>
    %20 = vector.extract_strided_slice %6 {offsets = [1, 0], sizes = [1, 128], strides = [1, 1]} : vector<16x128xf32> to vector<1x128xf32>
    %21 = vector.extract_strided_slice %6 {offsets = [2, 0], sizes = [1, 128], strides = [1, 1]} : vector<16x128xf32> to vector<1x128xf32>
    %22 = vector.extract_strided_slice %6 {offsets = [3, 0], sizes = [1, 128], strides = [1, 1]} : vector<16x128xf32> to vector<1x128xf32>
    %cst = arith.constant dense<0.000000e+00> : vector<8x128xf32>
    %23 = tpu.matmul %4, %12, %cst {dimension_numbers = #tpu.dot_dimension_numbers<[1], [0], [0], [1], [0, 0, 1, 1], [], []>} : vector<8x128xf32>, vector<128x128xbf16>, vector<8x128xf32> -> vector<8x128xf32>
    %24 = vector.broadcast %19 : vector<1x128xf32> to vector<8x128xf32>
    %25 = arith.addf %23, %24 : vector<8x128xf32>
    %cst_25 = arith.constant 0.176776692 : f32
    %26 = vector.broadcast %cst_25 : f32 to vector<8x128xf32>
    %27 = arith.mulf %25, %26 : vector<8x128xf32>
    %cst_26 = arith.constant dense<0.000000e+00> : vector<8x128xf32>
    %28 = tpu.matmul %8, %14, %cst_26 {dimension_numbers = #tpu.dot_dimension_numbers<[1], [0], [0], [1], [0, 0, 1, 1], [], []>} : vector<8x128xf32>, vector<128x128xbf16>, vector<8x128xf32> -> vector<8x128xf32>
    %29 = vector.broadcast %20 : vector<1x128xf32> to vector<8x128xf32>
    %30 = arith.addf %28, %29 : vector<8x128xf32>
    %cst_27 = arith.constant dense<0.000000e+00> : vector<8x128xf32>
    %31 = tpu.matmul %10, %16, %cst_27 {dimension_numbers = #tpu.dot_dimension_numbers<[1], [0], [0], [1], [0, 0, 1, 1], [], []>} : vector<8x128xf32>, vector<128x128xbf16>, vector<8x128xf32> -> vector<8x128xf32>
    %32 = vector.broadcast %21 : vector<1x128xf32> to vector<8x128xf32>
    %33 = arith.addf %31, %32 : vector<8x128xf32>
    %34 = tpu.transpose %30, [1, 0] : vector<8x128xf32> -> vector<128x8xf32>
    %35 = arith.extf %18 : vector<128x128xbf16> to vector<128x128xf32>
    %36 = vector.extract_strided_slice %27 {offsets = [0, 0], sizes = [8, 32], strides = [1, 1]} : vector<8x128xf32> to vector<8x32xf32>
    %37 = vector.extract_strided_slice %34 {offsets = [0, 0], sizes = [32, 8], strides = [1, 1]} : vector<128x8xf32> to vector<32x8xf32>
    %cst_28 = arith.constant dense<0.000000e+00> : vector<8x8xf32>
    %38 = tpu.matmul %36, %37, %cst_28 {dimension_numbers = #tpu.dot_dimension_numbers<[1], [0], [0], [1], [0, 0, 1, 1], [], []>} : vector<8x32xf32>, vector<32x8xf32>, vector<8x8xf32> -> vector<8x8xf32>
    %cst_29 = arith.constant dense<0xFF800000> : vector<8xf32>
    %39 = vector.multi_reduction <maximumf>, %38, %cst_29 [1] : vector<8x8xf32> to vector<8xf32>
    %40 = vector.shape_cast %39 : vector<8xf32> to vector<8x1xf32>
    %41 = vector.broadcast %40 : vector<8x1xf32> to vector<8x8xf32>
    %42 = arith.subf %38, %41 : vector<8x8xf32>
    %43 = math.exp %42 : vector<8x8xf32>
    %cst_30 = arith.constant dense<0.000000e+00> : vector<8xf32>
    %44 = vector.multi_reduction <add>, %43, %cst_30 [1] : vector<8x8xf32> to vector<8xf32>
    %45 = vector.shape_cast %44 : vector<8xf32> to vector<8x1xf32>
    %46 = vector.broadcast %45 : vector<8x1xf32> to vector<8x8xf32>
    %47 = arith.divf %43, %46 : vector<8x8xf32>
    %48 = vector.extract_strided_slice %33 {offsets = [0, 0], sizes = [8, 32], strides = [1, 1]} : vector<8x128xf32> to vector<8x32xf32>
    %cst_31 = arith.constant dense<0.000000e+00> : vector<8x32xf32>
    %49 = tpu.matmul %47, %48, %cst_31 {dimension_numbers = #tpu.dot_dimension_numbers<[1], [0], [0], [1], [0, 0, 1, 1], [], []>} : vector<8x8xf32>, vector<8x32xf32>, vector<8x32xf32> -> vector<8x32xf32>
    %50 = vector.extract_strided_slice %35 {offsets = [0, 0], sizes = [32, 128], strides = [1, 1]} : vector<128x128xf32> to vector<32x128xf32>
    %cst_32 = arith.constant dense<0.000000e+00> : vector<8x128xf32>
    %51 = tpu.matmul %49, %50, %cst_32 {dimension_numbers = #tpu.dot_dimension_numbers<[1], [0], [0], [1], [0, 0, 1, 1], [], []>} : vector<8x32xf32>, vector<32x128xf32>, vector<8x128xf32> -> vector<8x128xf32>
    %52 = vector.extract_strided_slice %27 {offsets = [0, 32], sizes = [8, 32], strides = [1, 1]} : vector<8x128xf32> to vector<8x32xf32>
    %53 = vector.extract_strided_slice %34 {offsets = [32, 0], sizes = [32, 8], strides = [1, 1]} : vector<128x8xf32> to vector<32x8xf32>
    %cst_33 = arith.constant dense<0.000000e+00> : vector<8x8xf32>
    %54 = tpu.matmul %52, %53, %cst_33 {dimension_numbers = #tpu.dot_dimension_numbers<[1], [0], [0], [1], [0, 0, 1, 1], [], []>} : vector<8x32xf32>, vector<32x8xf32>, vector<8x8xf32> -> vector<8x8xf32>
    %cst_34 = arith.constant dense<0xFF800000> : vector<8xf32>
    %55 = vector.multi_reduction <maximumf>, %54, %cst_34 [1] : vector<8x8xf32> to vector<8xf32>
    %56 = vector.shape_cast %55 : vector<8xf32> to vector<8x1xf32>
    %57 = vector.broadcast %56 : vector<8x1xf32> to vector<8x8xf32>
    %58 = arith.subf %54, %57 : vector<8x8xf32>
    %59 = math.exp %58 : vector<8x8xf32>
    %cst_35 = arith.constant dense<0.000000e+00> : vector<8xf32>
    %60 = vector.multi_reduction <add>, %59, %cst_35 [1] : vector<8x8xf32> to vector<8xf32>
    %61 = vector.shape_cast %60 : vector<8xf32> to vector<8x1xf32>
    %62 = vector.broadcast %61 : vector<8x1xf32> to vector<8x8xf32>
    %63 = arith.divf %59, %62 : vector<8x8xf32>
    %64 = vector.extract_strided_slice %33 {offsets = [0, 32], sizes = [8, 32], strides = [1, 1]} : vector<8x128xf32> to vector<8x32xf32>
    %cst_36 = arith.constant dense<0.000000e+00> : vector<8x32xf32>
    %65 = tpu.matmul %63, %64, %cst_36 {dimension_numbers = #tpu.dot_dimension_numbers<[1], [0], [0], [1], [0, 0, 1, 1], [], []>} : vector<8x8xf32>, vector<8x32xf32>, vector<8x32xf32> -> vector<8x32xf32>
    %66 = vector.extract_strided_slice %35 {offsets = [32, 0], sizes = [32, 128], strides = [1, 1]} : vector<128x128xf32> to vector<32x128xf32>
    %cst_37 = arith.constant dense<0.000000e+00> : vector<8x128xf32>
    %67 = tpu.matmul %65, %66, %cst_37 {dimension_numbers = #tpu.dot_dimension_numbers<[1], [0], [0], [1], [0, 0, 1, 1], [], []>} : vector<8x32xf32>, vector<32x128xf32>, vector<8x128xf32> -> vector<8x128xf32>
    %68 = arith.addf %51, %67 : vector<8x128xf32>
    %69 = vector.extract_strided_slice %27 {offsets = [0, 64], sizes = [8, 32], strides = [1, 1]} : vector<8x128xf32> to vector<8x32xf32>
    %70 = vector.extract_strided_slice %34 {offsets = [64, 0], sizes = [32, 8], strides = [1, 1]} : vector<128x8xf32> to vector<32x8xf32>
    %cst_38 = arith.constant dense<0.000000e+00> : vector<8x8xf32>
    %71 = tpu.matmul %69, %70, %cst_38 {dimension_numbers = #tpu.dot_dimension_numbers<[1], [0], [0], [1], [0, 0, 1, 1], [], []>} : vector<8x32xf32>, vector<32x8xf32>, vector<8x8xf32> -> vector<8x8xf32>
    %cst_39 = arith.constant dense<0xFF800000> : vector<8xf32>
    %72 = vector.multi_reduction <maximumf>, %71, %cst_39 [1] : vector<8x8xf32> to vector<8xf32>
    %73 = vector.shape_cast %72 : vector<8xf32> to vector<8x1xf32>
    %74 = vector.broadcast %73 : vector<8x1xf32> to vector<8x8xf32>
    %75 = arith.subf %71, %74 : vector<8x8xf32>
    %76 = math.exp %75 : vector<8x8xf32>
    %cst_40 = arith.constant dense<0.000000e+00> : vector<8xf32>
    %77 = vector.multi_reduction <add>, %76, %cst_40 [1] : vector<8x8xf32> to vector<8xf32>
    %78 = vector.shape_cast %77 : vector<8xf32> to vector<8x1xf32>
    %79 = vector.broadcast %78 : vector<8x1xf32> to vector<8x8xf32>
    %80 = arith.divf %76, %79 : vector<8x8xf32>
    %81 = vector.extract_strided_slice %33 {offsets = [0, 64], sizes = [8, 32], strides = [1, 1]} : vector<8x128xf32> to vector<8x32xf32>
    %cst_41 = arith.constant dense<0.000000e+00> : vector<8x32xf32>
    %82 = tpu.matmul %80, %81, %cst_41 {dimension_numbers = #tpu.dot_dimension_numbers<[1], [0], [0], [1], [0, 0, 1, 1], [], []>} : vector<8x8xf32>, vector<8x32xf32>, vector<8x32xf32> -> vector<8x32xf32>
    %83 = vector.extract_strided_slice %35 {offsets = [64, 0], sizes = [32, 128], strides = [1, 1]} : vector<128x128xf32> to vector<32x128xf32>
    %cst_42 = arith.constant dense<0.000000e+00> : vector<8x128xf32>
    %84 = tpu.matmul %82, %83, %cst_42 {dimension_numbers = #tpu.dot_dimension_numbers<[1], [0], [0], [1], [0, 0, 1, 1], [], []>} : vector<8x32xf32>, vector<32x128xf32>, vector<8x128xf32> -> vector<8x128xf32>
    %85 = arith.addf %68, %84 : vector<8x128xf32>
    %86 = vector.extract_strided_slice %27 {offsets = [0, 96], sizes = [8, 32], strides = [1, 1]} : vector<8x128xf32> to vector<8x32xf32>
    %87 = vector.extract_strided_slice %34 {offsets = [96, 0], sizes = [32, 8], strides = [1, 1]} : vector<128x8xf32> to vector<32x8xf32>
    %cst_43 = arith.constant dense<0.000000e+00> : vector<8x8xf32>
    %88 = tpu.matmul %86, %87, %cst_43 {dimension_numbers = #tpu.dot_dimension_numbers<[1], [0], [0], [1], [0, 0, 1, 1], [], []>} : vector<8x32xf32>, vector<32x8xf32>, vector<8x8xf32> -> vector<8x8xf32>
    %cst_44 = arith.constant dense<0xFF800000> : vector<8xf32>
    %89 = vector.multi_reduction <maximumf>, %88, %cst_44 [1] : vector<8x8xf32> to vector<8xf32>
    %90 = vector.shape_cast %89 : vector<8xf32> to vector<8x1xf32>
    %91 = vector.broadcast %90 : vector<8x1xf32> to vector<8x8xf32>
    %92 = arith.subf %88, %91 : vector<8x8xf32>
    %93 = math.exp %92 : vector<8x8xf32>
    %cst_45 = arith.constant dense<0.000000e+00> : vector<8xf32>
    %94 = vector.multi_reduction <add>, %93, %cst_45 [1] : vector<8x8xf32> to vector<8xf32>
    %95 = vector.shape_cast %94 : vector<8xf32> to vector<8x1xf32>
    %96 = vector.broadcast %95 : vector<8x1xf32> to vector<8x8xf32>
    %97 = arith.divf %93, %96 : vector<8x8xf32>
    %98 = vector.extract_strided_slice %33 {offsets = [0, 96], sizes = [8, 32], strides = [1, 1]} : vector<8x128xf32> to vector<8x32xf32>
    %cst_46 = arith.constant dense<0.000000e+00> : vector<8x32xf32>
    %99 = tpu.matmul %97, %98, %cst_46 {dimension_numbers = #tpu.dot_dimension_numbers<[1], [0], [0], [1], [0, 0, 1, 1], [], []>} : vector<8x8xf32>, vector<8x32xf32>, vector<8x32xf32> -> vector<8x32xf32>
    %100 = vector.extract_strided_slice %35 {offsets = [96, 0], sizes = [32, 128], strides = [1, 1]} : vector<128x128xf32> to vector<32x128xf32>
    %cst_47 = arith.constant dense<0.000000e+00> : vector<8x128xf32>
    %101 = tpu.matmul %99, %100, %cst_47 {dimension_numbers = #tpu.dot_dimension_numbers<[1], [0], [0], [1], [0, 0, 1, 1], [], []>} : vector<8x32xf32>, vector<32x128xf32>, vector<8x128xf32> -> vector<8x128xf32>
    %102 = arith.addf %85, %101 : vector<8x128xf32>
    %103 = vector.broadcast %22 : vector<1x128xf32> to vector<8x128xf32>
    %104 = arith.addf %102, %103 : vector<8x128xf32>
    %105 = arith.addf %4, %104 : vector<8x128xf32>
    %106 = vector.extract_strided_slice %6 {offsets = [8, 0], sizes = [1, 128], strides = [1, 1]} : vector<16x128xf32> to vector<1x128xf32>
    %107 = vector.extract_strided_slice %6 {offsets = [9, 0], sizes = [1, 128], strides = [1, 1]} : vector<16x128xf32> to vector<1x128xf32>
    %cst_48 = arith.constant dense<0.000000e+00> : vector<8xf32>
    %108 = vector.multi_reduction <add>, %105, %cst_48 [1] : vector<8x128xf32> to vector<8xf32>
    %109 = vector.shape_cast %108 : vector<8xf32> to vector<8x1xf32>
    %cst_49 = arith.constant 1.280000e+02 : f32
    %110 = vector.broadcast %cst_49 : f32 to vector<8x1xf32>
    %111 = arith.divf %109, %110 : vector<8x1xf32>
    %112 = vector.broadcast %111 : vector<8x1xf32> to vector<8x128xf32>
    %113 = arith.subf %105, %112 : vector<8x128xf32>
    %114 = arith.mulf %113, %113 : vector<8x128xf32>
    %cst_50 = arith.constant dense<0.000000e+00> : vector<8xf32>
    %115 = vector.multi_reduction <add>, %114, %cst_50 [1] : vector<8x128xf32> to vector<8xf32>
    %116 = vector.shape_cast %115 : vector<8xf32> to vector<8x1xf32>
    %cst_51 = arith.constant 1.280000e+02 : f32
    %117 = vector.broadcast %cst_51 : f32 to vector<8x1xf32>
    %118 = arith.divf %116, %117 : vector<8x1xf32>
    %119 = vector.broadcast %111 : vector<8x1xf32> to vector<8x128xf32>
    %120 = arith.subf %105, %119 : vector<8x128xf32>
    %cst_52 = arith.constant 9.99999974E-6 : f32
    %121 = vector.broadcast %cst_52 : f32 to vector<8x1xf32>
    %122 = arith.addf %118, %121 : vector<8x1xf32>
    %123 = math.rsqrt %122 : vector<8x1xf32>
    %124 = vector.broadcast %123 : vector<8x1xf32> to vector<8x128xf32>
    %125 = arith.mulf %120, %124 : vector<8x128xf32>
    %126 = vector.broadcast %106 : vector<1x128xf32> to vector<8x128xf32>
    %127 = arith.mulf %125, %126 : vector<8x128xf32>
    %128 = vector.broadcast %107 : vector<1x128xf32> to vector<8x128xf32>
    %129 = arith.addf %127, %128 : vector<8x128xf32>
    %c0_53 = arith.constant 0 : index
    %c0_54 = arith.constant 0 : index
    %c0_55 = arith.constant 0 : index
    %130 = vector.load %arg4[%c0_53, %c0_54, %c0_55] : memref<1x16x128xf32, #tpu.memory_space<vmem>>, vector<1x16x128xf32>
    %131 = vector.shape_cast %130 : vector<1x16x128xf32> to vector<16x128xf32>
    %c0_56 = arith.constant 0 : index
    %c0_57 = arith.constant 0 : index
    %c0_58 = arith.constant 0 : index
    %132 = vector.load %arg5[%c0_56, %c0_57, %c0_58] : memref<1x16x128xf32, #tpu.memory_space<vmem>>, vector<1x16x128xf32>
    %133 = vector.shape_cast %132 : vector<1x16x128xf32> to vector<16x128xf32>
    %c0_59 = arith.constant 0 : index
    %c4 = arith.constant 4 : index
    %c0_60 = arith.constant 0 : index
    %c0_61 = arith.constant 0 : index
    %134 = vector.load %arg6[%c0_59, %c4, %c0_60, %c0_61] : memref<1x8x128x128xbf16, #tpu.memory_space<vmem>>, vector<1x1x128x128xbf16>
    %135 = vector.shape_cast %134 : vector<1x1x128x128xbf16> to vector<128x128xbf16>
    %c0_62 = arith.constant 0 : index
    %c5 = arith.constant 5 : index
    %c0_63 = arith.constant 0 : index
    %c0_64 = arith.constant 0 : index
    %136 = vector.load %arg6[%c0_62, %c5, %c0_63, %c0_64] : memref<1x8x128x128xbf16, #tpu.memory_space<vmem>>, vector<1x1x128x128xbf16>
    %137 = vector.shape_cast %136 : vector<1x1x128x128xbf16> to vector<128x128xbf16>
    %c0_65 = arith.constant 0 : index
    %c6 = arith.constant 6 : index
    %c0_66 = arith.constant 0 : index
    %c0_67 = arith.constant 0 : index
    %138 = vector.load %arg6[%c0_65, %c6, %c0_66, %c0_67] : memref<1x8x128x128xbf16, #tpu.memory_space<vmem>>, vector<1x1x128x128xbf16>
    %139 = vector.shape_cast %138 : vector<1x1x128x128xbf16> to vector<128x128xbf16>
    %c0_68 = arith.constant 0 : index
    %c7 = arith.constant 7 : index
    %c0_69 = arith.constant 0 : index
    %c0_70 = arith.constant 0 : index
    %140 = vector.load %arg6[%c0_68, %c7, %c0_69, %c0_70] : memref<1x8x128x128xbf16, #tpu.memory_space<vmem>>, vector<1x1x128x128xbf16>
    %141 = vector.shape_cast %140 : vector<1x1x128x128xbf16> to vector<128x128xbf16>
    %142 = vector.extract_strided_slice %6 {offsets = [4, 0], sizes = [1, 128], strides = [1, 1]} : vector<16x128xf32> to vector<1x128xf32>
    %143 = vector.extract_strided_slice %6 {offsets = [5, 0], sizes = [1, 128], strides = [1, 1]} : vector<16x128xf32> to vector<1x128xf32>
    %144 = vector.extract_strided_slice %6 {offsets = [6, 0], sizes = [1, 128], strides = [1, 1]} : vector<16x128xf32> to vector<1x128xf32>
    %145 = vector.extract_strided_slice %6 {offsets = [7, 0], sizes = [1, 128], strides = [1, 1]} : vector<16x128xf32> to vector<1x128xf32>
    %cst_71 = arith.constant dense<0.000000e+00> : vector<8x128xf32>
    %146 = tpu.matmul %129, %135, %cst_71 {dimension_numbers = #tpu.dot_dimension_numbers<[1], [0], [0], [1], [0, 0, 1, 1], [], []>} : vector<8x128xf32>, vector<128x128xbf16>, vector<8x128xf32> -> vector<8x128xf32>
    %147 = vector.broadcast %142 : vector<1x128xf32> to vector<8x128xf32>
    %148 = arith.addf %146, %147 : vector<8x128xf32>
    %cst_72 = arith.constant 0.176776692 : f32
    %149 = vector.broadcast %cst_72 : f32 to vector<8x128xf32>
    %150 = arith.mulf %148, %149 : vector<8x128xf32>
    %cst_73 = arith.constant dense<0.000000e+00> : vector<16x128xf32>
    %151 = tpu.matmul %131, %137, %cst_73 {dimension_numbers = #tpu.dot_dimension_numbers<[1], [0], [0], [1], [0, 0, 1, 1], [], []>} : vector<16x128xf32>, vector<128x128xbf16>, vector<16x128xf32> -> vector<16x128xf32>
    %152 = vector.broadcast %143 : vector<1x128xf32> to vector<16x128xf32>
    %153 = arith.addf %151, %152 : vector<16x128xf32>
    %cst_74 = arith.constant dense<0.000000e+00> : vector<16x128xf32>
    %154 = tpu.matmul %133, %139, %cst_74 {dimension_numbers = #tpu.dot_dimension_numbers<[1], [0], [0], [1], [0, 0, 1, 1], [], []>} : vector<16x128xf32>, vector<128x128xbf16>, vector<16x128xf32> -> vector<16x128xf32>
    %155 = vector.broadcast %144 : vector<1x128xf32> to vector<16x128xf32>
    %156 = arith.addf %154, %155 : vector<16x128xf32>
    %157 = tpu.transpose %153, [1, 0] : vector<16x128xf32> -> vector<128x16xf32>
    %158 = arith.extf %141 : vector<128x128xbf16> to vector<128x128xf32>
    %159 = vector.extract_strided_slice %150 {offsets = [0, 0], sizes = [8, 32], strides = [1, 1]} : vector<8x128xf32> to vector<8x32xf32>
    %160 = vector.extract_strided_slice %157 {offsets = [0, 0], sizes = [32, 16], strides = [1, 1]} : vector<128x16xf32> to vector<32x16xf32>
    %cst_75 = arith.constant dense<0.000000e+00> : vector<8x16xf32>
    %161 = tpu.matmul %159, %160, %cst_75 {dimension_numbers = #tpu.dot_dimension_numbers<[1], [0], [0], [1], [0, 0, 1, 1], [], []>} : vector<8x32xf32>, vector<32x16xf32>, vector<8x16xf32> -> vector<8x16xf32>
    %cst_76 = arith.constant dense<0xFF800000> : vector<8xf32>
    %162 = vector.multi_reduction <maximumf>, %161, %cst_76 [1] : vector<8x16xf32> to vector<8xf32>
    %163 = vector.shape_cast %162 : vector<8xf32> to vector<8x1xf32>
    %164 = vector.broadcast %163 : vector<8x1xf32> to vector<8x16xf32>
    %165 = arith.subf %161, %164 : vector<8x16xf32>
    %166 = math.exp %165 : vector<8x16xf32>
    %cst_77 = arith.constant dense<0.000000e+00> : vector<8xf32>
    %167 = vector.multi_reduction <add>, %166, %cst_77 [1] : vector<8x16xf32> to vector<8xf32>
    %168 = vector.shape_cast %167 : vector<8xf32> to vector<8x1xf32>
    %169 = vector.broadcast %168 : vector<8x1xf32> to vector<8x16xf32>
    %170 = arith.divf %166, %169 : vector<8x16xf32>
    %171 = vector.extract_strided_slice %156 {offsets = [0, 0], sizes = [16, 32], strides = [1, 1]} : vector<16x128xf32> to vector<16x32xf32>
    %cst_78 = arith.constant dense<0.000000e+00> : vector<8x32xf32>
    %172 = tpu.matmul %170, %171, %cst_78 {dimension_numbers = #tpu.dot_dimension_numbers<[1], [0], [0], [1], [0, 0, 1, 1], [], []>} : vector<8x16xf32>, vector<16x32xf32>, vector<8x32xf32> -> vector<8x32xf32>
    %173 = vector.extract_strided_slice %158 {offsets = [0, 0], sizes = [32, 128], strides = [1, 1]} : vector<128x128xf32> to vector<32x128xf32>
    %cst_79 = arith.constant dense<0.000000e+00> : vector<8x128xf32>
    %174 = tpu.matmul %172, %173, %cst_79 {dimension_numbers = #tpu.dot_dimension_numbers<[1], [0], [0], [1], [0, 0, 1, 1], [], []>} : vector<8x32xf32>, vector<32x128xf32>, vector<8x128xf32> -> vector<8x128xf32>
    %175 = vector.extract_strided_slice %150 {offsets = [0, 32], sizes = [8, 32], strides = [1, 1]} : vector<8x128xf32> to vector<8x32xf32>
    %176 = vector.extract_strided_slice %157 {offsets = [32, 0], sizes = [32, 16], strides = [1, 1]} : vector<128x16xf32> to vector<32x16xf32>
    %cst_80 = arith.constant dense<0.000000e+00> : vector<8x16xf32>
    %177 = tpu.matmul %175, %176, %cst_80 {dimension_numbers = #tpu.dot_dimension_numbers<[1], [0], [0], [1], [0, 0, 1, 1], [], []>} : vector<8x32xf32>, vector<32x16xf32>, vector<8x16xf32> -> vector<8x16xf32>
    %cst_81 = arith.constant dense<0xFF800000> : vector<8xf32>
    %178 = vector.multi_reduction <maximumf>, %177, %cst_81 [1] : vector<8x16xf32> to vector<8xf32>
    %179 = vector.shape_cast %178 : vector<8xf32> to vector<8x1xf32>
    %180 = vector.broadcast %179 : vector<8x1xf32> to vector<8x16xf32>
    %181 = arith.subf %177, %180 : vector<8x16xf32>
    %182 = math.exp %181 : vector<8x16xf32>
    %cst_82 = arith.constant dense<0.000000e+00> : vector<8xf32>
    %183 = vector.multi_reduction <add>, %182, %cst_82 [1] : vector<8x16xf32> to vector<8xf32>
    %184 = vector.shape_cast %183 : vector<8xf32> to vector<8x1xf32>
    %185 = vector.broadcast %184 : vector<8x1xf32> to vector<8x16xf32>
    %186 = arith.divf %182, %185 : vector<8x16xf32>
    %187 = vector.extract_strided_slice %156 {offsets = [0, 32], sizes = [16, 32], strides = [1, 1]} : vector<16x128xf32> to vector<16x32xf32>
    %cst_83 = arith.constant dense<0.000000e+00> : vector<8x32xf32>
    %188 = tpu.matmul %186, %187, %cst_83 {dimension_numbers = #tpu.dot_dimension_numbers<[1], [0], [0], [1], [0, 0, 1, 1], [], []>} : vector<8x16xf32>, vector<16x32xf32>, vector<8x32xf32> -> vector<8x32xf32>
    %189 = vector.extract_strided_slice %158 {offsets = [32, 0], sizes = [32, 128], strides = [1, 1]} : vector<128x128xf32> to vector<32x128xf32>
    %cst_84 = arith.constant dense<0.000000e+00> : vector<8x128xf32>
    %190 = tpu.matmul %188, %189, %cst_84 {dimension_numbers = #tpu.dot_dimension_numbers<[1], [0], [0], [1], [0, 0, 1, 1], [], []>} : vector<8x32xf32>, vector<32x128xf32>, vector<8x128xf32> -> vector<8x128xf32>
    %191 = arith.addf %174, %190 : vector<8x128xf32>
    %192 = vector.extract_strided_slice %150 {offsets = [0, 64], sizes = [8, 32], strides = [1, 1]} : vector<8x128xf32> to vector<8x32xf32>
    %193 = vector.extract_strided_slice %157 {offsets = [64, 0], sizes = [32, 16], strides = [1, 1]} : vector<128x16xf32> to vector<32x16xf32>
    %cst_85 = arith.constant dense<0.000000e+00> : vector<8x16xf32>
    %194 = tpu.matmul %192, %193, %cst_85 {dimension_numbers = #tpu.dot_dimension_numbers<[1], [0], [0], [1], [0, 0, 1, 1], [], []>} : vector<8x32xf32>, vector<32x16xf32>, vector<8x16xf32> -> vector<8x16xf32>
    %cst_86 = arith.constant dense<0xFF800000> : vector<8xf32>
    %195 = vector.multi_reduction <maximumf>, %194, %cst_86 [1] : vector<8x16xf32> to vector<8xf32>
    %196 = vector.shape_cast %195 : vector<8xf32> to vector<8x1xf32>
    %197 = vector.broadcast %196 : vector<8x1xf32> to vector<8x16xf32>
    %198 = arith.subf %194, %197 : vector<8x16xf32>
    %199 = math.exp %198 : vector<8x16xf32>
    %cst_87 = arith.constant dense<0.000000e+00> : vector<8xf32>
    %200 = vector.multi_reduction <add>, %199, %cst_87 [1] : vector<8x16xf32> to vector<8xf32>
    %201 = vector.shape_cast %200 : vector<8xf32> to vector<8x1xf32>
    %202 = vector.broadcast %201 : vector<8x1xf32> to vector<8x16xf32>
    %203 = arith.divf %199, %202 : vector<8x16xf32>
    %204 = vector.extract_strided_slice %156 {offsets = [0, 64], sizes = [16, 32], strides = [1, 1]} : vector<16x128xf32> to vector<16x32xf32>
    %cst_88 = arith.constant dense<0.000000e+00> : vector<8x32xf32>
    %205 = tpu.matmul %203, %204, %cst_88 {dimension_numbers = #tpu.dot_dimension_numbers<[1], [0], [0], [1], [0, 0, 1, 1], [], []>} : vector<8x16xf32>, vector<16x32xf32>, vector<8x32xf32> -> vector<8x32xf32>
    %206 = vector.extract_strided_slice %158 {offsets = [64, 0], sizes = [32, 128], strides = [1, 1]} : vector<128x128xf32> to vector<32x128xf32>
    %cst_89 = arith.constant dense<0.000000e+00> : vector<8x128xf32>
    %207 = tpu.matmul %205, %206, %cst_89 {dimension_numbers = #tpu.dot_dimension_numbers<[1], [0], [0], [1], [0, 0, 1, 1], [], []>} : vector<8x32xf32>, vector<32x128xf32>, vector<8x128xf32> -> vector<8x128xf32>
    %208 = arith.addf %191, %207 : vector<8x128xf32>
    %209 = vector.extract_strided_slice %150 {offsets = [0, 96], sizes = [8, 32], strides = [1, 1]} : vector<8x128xf32> to vector<8x32xf32>
    %210 = vector.extract_strided_slice %157 {offsets = [96, 0], sizes = [32, 16], strides = [1, 1]} : vector<128x16xf32> to vector<32x16xf32>
    %cst_90 = arith.constant dense<0.000000e+00> : vector<8x16xf32>
    %211 = tpu.matmul %209, %210, %cst_90 {dimension_numbers = #tpu.dot_dimension_numbers<[1], [0], [0], [1], [0, 0, 1, 1], [], []>} : vector<8x32xf32>, vector<32x16xf32>, vector<8x16xf32> -> vector<8x16xf32>
    %cst_91 = arith.constant dense<0xFF800000> : vector<8xf32>
    %212 = vector.multi_reduction <maximumf>, %211, %cst_91 [1] : vector<8x16xf32> to vector<8xf32>
    %213 = vector.shape_cast %212 : vector<8xf32> to vector<8x1xf32>
    %214 = vector.broadcast %213 : vector<8x1xf32> to vector<8x16xf32>
    %215 = arith.subf %211, %214 : vector<8x16xf32>
    %216 = math.exp %215 : vector<8x16xf32>
    %cst_92 = arith.constant dense<0.000000e+00> : vector<8xf32>
    %217 = vector.multi_reduction <add>, %216, %cst_92 [1] : vector<8x16xf32> to vector<8xf32>
    %218 = vector.shape_cast %217 : vector<8xf32> to vector<8x1xf32>
    %219 = vector.broadcast %218 : vector<8x1xf32> to vector<8x16xf32>
    %220 = arith.divf %216, %219 : vector<8x16xf32>
    %221 = vector.extract_strided_slice %156 {offsets = [0, 96], sizes = [16, 32], strides = [1, 1]} : vector<16x128xf32> to vector<16x32xf32>
    %cst_93 = arith.constant dense<0.000000e+00> : vector<8x32xf32>
    %222 = tpu.matmul %220, %221, %cst_93 {dimension_numbers = #tpu.dot_dimension_numbers<[1], [0], [0], [1], [0, 0, 1, 1], [], []>} : vector<8x16xf32>, vector<16x32xf32>, vector<8x32xf32> -> vector<8x32xf32>
    %223 = vector.extract_strided_slice %158 {offsets = [96, 0], sizes = [32, 128], strides = [1, 1]} : vector<128x128xf32> to vector<32x128xf32>
    %cst_94 = arith.constant dense<0.000000e+00> : vector<8x128xf32>
    %224 = tpu.matmul %222, %223, %cst_94 {dimension_numbers = #tpu.dot_dimension_numbers<[1], [0], [0], [1], [0, 0, 1, 1], [], []>} : vector<8x32xf32>, vector<32x128xf32>, vector<8x128xf32> -> vector<8x128xf32>
    %225 = arith.addf %208, %224 : vector<8x128xf32>
    %226 = vector.broadcast %145 : vector<1x128xf32> to vector<8x128xf32>
    %227 = arith.addf %225, %226 : vector<8x128xf32>
    %228 = arith.addf %129, %227 : vector<8x128xf32>
    %229 = vector.extract_strided_slice %6 {offsets = [10, 0], sizes = [1, 128], strides = [1, 1]} : vector<16x128xf32> to vector<1x128xf32>
    %230 = vector.extract_strided_slice %6 {offsets = [11, 0], sizes = [1, 128], strides = [1, 1]} : vector<16x128xf32> to vector<1x128xf32>
    %cst_95 = arith.constant dense<0.000000e+00> : vector<8xf32>
    %231 = vector.multi_reduction <add>, %228, %cst_95 [1] : vector<8x128xf32> to vector<8xf32>
    %232 = vector.shape_cast %231 : vector<8xf32> to vector<8x1xf32>
    %cst_96 = arith.constant 1.280000e+02 : f32
    %233 = vector.broadcast %cst_96 : f32 to vector<8x1xf32>
    %234 = arith.divf %232, %233 : vector<8x1xf32>
    %235 = vector.broadcast %234 : vector<8x1xf32> to vector<8x128xf32>
    %236 = arith.subf %228, %235 : vector<8x128xf32>
    %237 = arith.mulf %236, %236 : vector<8x128xf32>
    %cst_97 = arith.constant dense<0.000000e+00> : vector<8xf32>
    %238 = vector.multi_reduction <add>, %237, %cst_97 [1] : vector<8x128xf32> to vector<8xf32>
    %239 = vector.shape_cast %238 : vector<8xf32> to vector<8x1xf32>
    %cst_98 = arith.constant 1.280000e+02 : f32
    %240 = vector.broadcast %cst_98 : f32 to vector<8x1xf32>
    %241 = arith.divf %239, %240 : vector<8x1xf32>
    %242 = vector.broadcast %234 : vector<8x1xf32> to vector<8x128xf32>
    %243 = arith.subf %228, %242 : vector<8x128xf32>
    %cst_99 = arith.constant 9.99999974E-6 : f32
    %244 = vector.broadcast %cst_99 : f32 to vector<8x1xf32>
    %245 = arith.addf %241, %244 : vector<8x1xf32>
    %246 = math.rsqrt %245 : vector<8x1xf32>
    %247 = vector.broadcast %246 : vector<8x1xf32> to vector<8x128xf32>
    %248 = arith.mulf %243, %247 : vector<8x128xf32>
    %249 = vector.broadcast %229 : vector<1x128xf32> to vector<8x128xf32>
    %250 = arith.mulf %248, %249 : vector<8x128xf32>
    %251 = vector.broadcast %230 : vector<1x128xf32> to vector<8x128xf32>
    %252 = arith.addf %250, %251 : vector<8x128xf32>
    %c0_100 = arith.constant 0 : index
    %c0_101 = arith.constant 0 : index
    %c0_102 = arith.constant 0 : index
    %253 = vector.load %arg7[%c0_100, %c0_101, %c0_102] : memref<1x128x256xbf16, #tpu.memory_space<vmem>>, vector<1x128x256xbf16>
    %254 = vector.shape_cast %253 : vector<1x128x256xbf16> to vector<128x256xbf16>
    %cst_103 = arith.constant dense<0.000000e+00> : vector<8x256xf32>
    %255 = tpu.matmul %252, %254, %cst_103 {dimension_numbers = #tpu.dot_dimension_numbers<[1], [0], [0], [1], [0, 0, 1, 1], [], []>} : vector<8x128xf32>, vector<128x256xbf16>, vector<8x256xf32> -> vector<8x256xf32>
    %c0_104 = arith.constant 0 : index
    %c0_105 = arith.constant 0 : index
    %c0_106 = arith.constant 0 : index
    %256 = vector.load %arg10[%c0_104, %c0_105, %c0_106] : memref<1x1x256xf32, #tpu.memory_space<vmem>>, vector<1x1x256xf32>
    %257 = vector.shape_cast %256 : vector<1x1x256xf32> to vector<1x256xf32>
    %258 = vector.broadcast %257 : vector<1x256xf32> to vector<8x256xf32>
    %259 = arith.addf %255, %258 : vector<8x256xf32>
    %cst_107 = arith.constant 0.000000e+00 : f32
    %260 = vector.broadcast %cst_107 : f32 to vector<8x256xf32>
    %261 = arith.maximumf %259, %260 : vector<8x256xf32>
    %c0_108 = arith.constant 0 : index
    %c0_109 = arith.constant 0 : index
    %c0_110 = arith.constant 0 : index
    %262 = vector.load %arg8[%c0_108, %c0_109, %c0_110] : memref<1x256x128xbf16, #tpu.memory_space<vmem>>, vector<1x256x128xbf16>
    %263 = vector.shape_cast %262 : vector<1x256x128xbf16> to vector<256x128xbf16>
    %cst_111 = arith.constant dense<0.000000e+00> : vector<8x128xf32>
    %264 = tpu.matmul %261, %263, %cst_111 {dimension_numbers = #tpu.dot_dimension_numbers<[1], [0], [0], [1], [0, 0, 1, 1], [], []>} : vector<8x256xf32>, vector<256x128xbf16>, vector<8x128xf32> -> vector<8x128xf32>
    %265 = vector.extract_strided_slice %6 {offsets = [14, 0], sizes = [1, 128], strides = [1, 1]} : vector<16x128xf32> to vector<1x128xf32>
    %266 = vector.broadcast %265 : vector<1x128xf32> to vector<8x128xf32>
    %267 = arith.addf %264, %266 : vector<8x128xf32>
    %268 = arith.addf %252, %267 : vector<8x128xf32>
    %269 = vector.extract_strided_slice %6 {offsets = [12, 0], sizes = [1, 128], strides = [1, 1]} : vector<16x128xf32> to vector<1x128xf32>
    %270 = vector.extract_strided_slice %6 {offsets = [13, 0], sizes = [1, 128], strides = [1, 1]} : vector<16x128xf32> to vector<1x128xf32>
    %cst_112 = arith.constant dense<0.000000e+00> : vector<8xf32>
    %271 = vector.multi_reduction <add>, %268, %cst_112 [1] : vector<8x128xf32> to vector<8xf32>
    %272 = vector.shape_cast %271 : vector<8xf32> to vector<8x1xf32>
    %cst_113 = arith.constant 1.280000e+02 : f32
    %273 = vector.broadcast %cst_113 : f32 to vector<8x1xf32>
    %274 = arith.divf %272, %273 : vector<8x1xf32>
    %275 = vector.broadcast %274 : vector<8x1xf32> to vector<8x128xf32>
    %276 = arith.subf %268, %275 : vector<8x128xf32>
    %277 = arith.mulf %276, %276 : vector<8x128xf32>
    %cst_114 = arith.constant dense<0.000000e+00> : vector<8xf32>
    %278 = vector.multi_reduction <add>, %277, %cst_114 [1] : vector<8x128xf32> to vector<8xf32>
    %279 = vector.shape_cast %278 : vector<8xf32> to vector<8x1xf32>
    %cst_115 = arith.constant 1.280000e+02 : f32
    %280 = vector.broadcast %cst_115 : f32 to vector<8x1xf32>
    %281 = arith.divf %279, %280 : vector<8x1xf32>
    %282 = vector.broadcast %274 : vector<8x1xf32> to vector<8x128xf32>
    %283 = arith.subf %268, %282 : vector<8x128xf32>
    %cst_116 = arith.constant 9.99999974E-6 : f32
    %284 = vector.broadcast %cst_116 : f32 to vector<8x1xf32>
    %285 = arith.addf %281, %284 : vector<8x1xf32>
    %286 = math.rsqrt %285 : vector<8x1xf32>
    %287 = vector.broadcast %286 : vector<8x1xf32> to vector<8x128xf32>
    %288 = arith.mulf %283, %287 : vector<8x128xf32>
    %289 = vector.broadcast %269 : vector<1x128xf32> to vector<8x128xf32>
    %290 = arith.mulf %288, %289 : vector<8x128xf32>
    %291 = vector.broadcast %270 : vector<1x128xf32> to vector<8x128xf32>
    %292 = arith.addf %290, %291 : vector<8x128xf32>
    %c0_117 = arith.constant 0 : index
    %c0_118 = arith.constant 0 : index
    %c0_119 = arith.constant 0 : index
    %293 = vector.load %arg12[%c0_117, %c0_118, %c0_119] : memref<1x8x128xf32, #tpu.memory_space<vmem>>, vector<1x8x128xf32>
    %294 = vector.shape_cast %293 : vector<1x8x128xf32> to vector<8x128xf32>
    %295 = vector.shape_cast %292 : vector<8x128xf32> to vector<1x8x128xf32>
    tpu.vector_store %arg12[%c0_117, %c0_118, %c0_119], %295 {strides = array<i32>} : memref<1x8x128xf32, #tpu.memory_space<vmem>>, vector<1x8x128xf32>,
    %c1_i32 = arith.constant 1 : i32
    %296 = arith.cmpi eq, %arg1, %c1_i32 : i32
    %297 = arith.extui %296 : i1 to i32
    %c0_i32_120 = arith.constant 0 : i32
    %298 = arith.cmpi ne, %297, %c0_i32_120 : i32
    scf.if %298 {
      %c0_121 = arith.constant 0 : index
      %c0_122 = arith.constant 0 : index
      %299 = vector.load %arg11[%c0_121, %c0_122] : memref<2x128xf32, #tpu.memory_space<vmem>>, vector<2x128xf32>
      %300 = vector.extract_strided_slice %299 {offsets = [0, 0], sizes = [1, 128], strides = [1, 1]} : vector<2x128xf32> to vector<1x128xf32>
      %301 = vector.extract_strided_slice %299 {offsets = [1, 0], sizes = [1, 128], strides = [1, 1]} : vector<2x128xf32> to vector<1x128xf32>
      %cst_123 = arith.constant dense<0.000000e+00> : vector<8xf32>
      %302 = vector.multi_reduction <add>, %292, %cst_123 [1] : vector<8x128xf32> to vector<8xf32>
      %303 = vector.shape_cast %302 : vector<8xf32> to vector<8x1xf32>
      %cst_124 = arith.constant 1.280000e+02 : f32
      %304 = vector.broadcast %cst_124 : f32 to vector<8x1xf32>
      %305 = arith.divf %303, %304 : vector<8x1xf32>
      %306 = vector.broadcast %305 : vector<8x1xf32> to vector<8x128xf32>
      %307 = arith.subf %292, %306 : vector<8x128xf32>
      %308 = arith.mulf %307, %307 : vector<8x128xf32>
      %cst_125 = arith.constant dense<0.000000e+00> : vector<8xf32>
      %309 = vector.multi_reduction <add>, %308, %cst_125 [1] : vector<8x128xf32> to vector<8xf32>
      %310 = vector.shape_cast %309 : vector<8xf32> to vector<8x1xf32>
      %cst_126 = arith.constant 1.280000e+02 : f32
      %311 = vector.broadcast %cst_126 : f32 to vector<8x1xf32>
      %312 = arith.divf %310, %311 : vector<8x1xf32>
      %313 = vector.broadcast %305 : vector<8x1xf32> to vector<8x128xf32>
      %314 = arith.subf %292, %313 : vector<8x128xf32>
      %cst_127 = arith.constant 9.99999974E-6 : f32
      %315 = vector.broadcast %cst_127 : f32 to vector<8x1xf32>
      %316 = arith.addf %312, %315 : vector<8x1xf32>
      %317 = math.rsqrt %316 : vector<8x1xf32>
      %318 = vector.broadcast %317 : vector<8x1xf32> to vector<8x128xf32>
      %319 = arith.mulf %314, %318 : vector<8x128xf32>
      %320 = vector.broadcast %300 : vector<1x128xf32> to vector<8x128xf32>
      %321 = arith.mulf %319, %320 : vector<8x128xf32>
      %322 = vector.broadcast %301 : vector<1x128xf32> to vector<8x128xf32>
      %323 = arith.addf %321, %322 : vector<8x128xf32>
      %c0_128 = arith.constant 0 : index
      %c0_129 = arith.constant 0 : index
      %c0_130 = arith.constant 0 : index
      %324 = vector.load %arg12[%c0_128, %c0_129, %c0_130] : memref<1x8x128xf32, #tpu.memory_space<vmem>>, vector<1x8x128xf32>
      %325 = vector.shape_cast %324 : vector<1x8x128xf32> to vector<8x128xf32>
      %326 = vector.shape_cast %323 : vector<8x128xf32> to vector<1x8x128xf32>
      tpu.vector_store %arg12[%c0_128, %c0_129, %c0_130], %326 {strides = array<i32>} : memref<1x8x128xf32, #tpu.memory_space<vmem>>, vector<1x8x128xf32>,
    } else {
    }
    return
  }
  func.func @transform_0(%arg0: i32, %arg1: i32) -> (i32, i32, i32) {
    %c0_i32 = arith.constant 0 : i32
    %c0_i32_0 = arith.constant 0 : i32
    %c0_i32_1 = arith.constant 0 : i32
    return %arg0, %c0_i32, %c0_i32_0 : i32, i32, i32
  }
  func.func @transform_1(%arg0: i32, %arg1: i32) -> (i32, i32, i32) {
    %c0_i32 = arith.constant 0 : i32
    %c0_i32_0 = arith.constant 0 : i32
    %c0_i32_1 = arith.constant 0 : i32
    return %arg0, %c0_i32, %c0_i32_0 : i32, i32, i32
  }
  func.func @transform_2(%arg0: i32, %arg1: i32) -> (i32, i32, i32) {
    %c0_i32 = arith.constant 0 : i32
    %c0_i32_0 = arith.constant 0 : i32
    %c0_i32_1 = arith.constant 0 : i32
    return %arg0, %c0_i32, %c0_i32_0 : i32, i32, i32
  }
  func.func @transform_3(%arg0: i32, %arg1: i32) -> (i32, i32, i32) {
    %c0_i32 = arith.constant 0 : i32
    %c0_i32_0 = arith.constant 0 : i32
    %c0_i32_1 = arith.constant 0 : i32
    return %arg0, %c0_i32, %c0_i32_0 : i32, i32, i32
  }
  func.func @transform_4(%arg0: i32, %arg1: i32) -> (i32, i32, i32, i32) {
    %c0_i32 = arith.constant 0 : i32
    %c0_i32_0 = arith.constant 0 : i32
    %c0_i32_1 = arith.constant 0 : i32
    %c0_i32_2 = arith.constant 0 : i32
    return %arg1, %c0_i32, %c0_i32_0, %c0_i32_1 : i32, i32, i32, i32
  }
  func.func @transform_5(%arg0: i32, %arg1: i32) -> (i32, i32, i32) {
    %c0_i32 = arith.constant 0 : i32
    %c0_i32_0 = arith.constant 0 : i32
    %c0_i32_1 = arith.constant 0 : i32
    return %arg1, %c0_i32, %c0_i32_0 : i32, i32, i32
  }
  func.func @transform_6(%arg0: i32, %arg1: i32) -> (i32, i32, i32) {
    %c0_i32 = arith.constant 0 : i32
    %c0_i32_0 = arith.constant 0 : i32
    %c0_i32_1 = arith.constant 0 : i32
    return %arg1, %c0_i32, %c0_i32_0 : i32, i32, i32
  }
  func.func @transform_7(%arg0: i32, %arg1: i32) -> (i32, i32, i32) {
    %c0_i32 = arith.constant 0 : i32
    %c0_i32_0 = arith.constant 0 : i32
    %c0_i32_1 = arith.constant 0 : i32
    return %arg1, %c0_i32, %c0_i32_0 : i32, i32, i32
  }
  func.func @transform_8(%arg0: i32, %arg1: i32) -> (i32, i32, i32) {
    %c0_i32 = arith.constant 0 : i32
    %c0_i32_0 = arith.constant 0 : i32
    %c0_i32_1 = arith.constant 0 : i32
    return %arg1, %c0_i32, %c0_i32_0 : i32, i32, i32
  }
  func.func @transform_9(%arg0: i32, %arg1: i32) -> (i32, i32) {
    %c0_i32 = arith.constant 0 : i32
    %c0_i32_0 = arith.constant 0 : i32
    %c0_i32_1 = arith.constant 0 : i32
    return %c0_i32, %c0_i32_0 : i32, i32
  }
  func.func @transform_10(%arg0: i32, %arg1: i32) -> (i32, i32, i32) {
    %c0_i32 = arith.constant 0 : i32
    %c0_i32_0 = arith.constant 0 : i32
    %c0_i32_1 = arith.constant 0 : i32
    return %arg0, %c0_i32, %c0_i32_0 : i32, i32, i32
  }
}

</mosaic_0001>

<llo_original>
// kernel: tpu_custom_call.1
$region0: #{tpu_custom_call.1}
  #allocation0 [shape = 'u32[]', space=smem, size = 0x4, offset = 0x4, fixed_abs, tag = 'smem constant byte address 0x4 - core index']
  #allocation1 [shape = 'u32[144,128]{1,0:T(1,128)}', space=vmem, size = 0x12000, scoped, tag = 'internal scratch']
  %s0 = inlined_call_operand.hbm [shape: f32[2,8,128], index: 0, kind: input, shape index: {}]
  %s1 = inlined_call_operand.hbm [shape: f32[2,8,128], index: 1, kind: input, shape index: {}]
  %s2 = inlined_call_operand.hbm [shape: f32[2,16,128], index: 2, kind: input, shape index: {}]
  %s3 = inlined_call_operand.hbm [shape: f32[2,16,128], index: 3, kind: input, shape index: {}]
  %s4 = inlined_call_operand.hbm [shape: bf16[2,8,128,128], index: 4, kind: input, shape index: {}]
  %s5 = inlined_call_operand.hbm [shape: bf16[2,128,256], index: 5, kind: input, shape index: {}]
  %s6 = inlined_call_operand.hbm [shape: bf16[2,256,128], index: 6, kind: input, shape index: {}]
  %s7 = inlined_call_operand.hbm [shape: f32[2,16,128], index: 7, kind: input, shape index: {}]
  %s8 = inlined_call_operand.vmem [shape: f32[2,1,256], index: 8, kind: input, shape index: {}]
  %s9 = inlined_call_operand.vmem [shape: f32[2,128], index: 9, kind: input, shape index: {}]
  %s10 = inlined_call_operand.hbm [shape: f32[2,8,128], index: 10, kind: output, shape index: {}]
  %s11 = sld [smem:[#allocation0]]
  $region113: #{tpu_custom_call.1} parent=0
    _
  %s13 = ssub.s32 1, %s11
  %s14 = scalar_select 0, %s13, %s11
  $region1: #{tpu_custom_call.1} parent=0
    #allocation2 [shape = 'u8[8192]{0}', space=vmem, size = 0x2000, scoped, tag = 'input window, operand 0']
    #allocation3 [shape = 's32[2]{0}', space=sflag, size = 0x8, scoped, tag = 'scoped memory for tpu_custom_call.1']
    #allocation4 [shape = 's32[2]{0}', space=sflag, size = 0x8, scoped, tag = 'scoped memory for tpu_custom_call.1']
    #allocation5 [shape = 'u8[8192]{0}', space=vmem, size = 0x2000, scoped, tag = 'input window, operand 1']
    #allocation6 [shape = 's32[2]{0}', space=sflag, size = 0x8, scoped, tag = 'scoped memory for tpu_custom_call.1']
    #allocation7 [shape = 'u8[16384]{0}', space=vmem, size = 0x4000, scoped, tag = 'input window, operand 2']
    #allocation8 [shape = 'u8[16384]{0}', space=vmem, size = 0x4000, scoped, tag = 'input window, operand 3']
    #allocation9 [shape = 's32[2]{0}', space=sflag, size = 0x8, scoped, tag = 'scoped memory for tpu_custom_call.1']
    #allocation10 [shape = 'u8[524288]{0}', space=vmem, size = 0x80000, scoped, tag = 'input window, operand 4']
    #allocation11 [shape = 'u8[131072]{0}', space=vmem, size = 0x20000, scoped, tag = 'input window, operand 5']
    #allocation12 [shape = 's32[2]{0}', space=sflag, size = 0x8, scoped, tag = 'scoped memory for tpu_custom_call.1']
    #allocation13 [shape = 'u8[131072]{0}', space=vmem, size = 0x20000, scoped, tag = 'input window, operand 6']
    #allocation14 [shape = 'u8[16384]{0}', space=vmem, size = 0x4000, scoped, tag = 'input window, operand 7']
    #allocation15 [shape = 's32[2]{0}', space=sflag, size = 0x8, scoped, tag = 'scoped memory for tpu_custom_call.1']
    #allocation16 [shape = 'u8[8192]{0}', space=vmem, size = 0x2000, scoped, tag = 'output window, operand 0']
    %15 = vsyncpa [#allocation3], 0
    %s16 = scalar_lea.sflag [#allocation3], 1
    %17 = vsyncpa %s16, 0
    %18 = vsyncpa [#allocation6], 0
    %s19 = scalar_lea.sflag [#allocation6], 1
    %20 = vsyncpa %s19, 0
    %21 = vsyncpa [#allocation9], 0
    %s22 = scalar_lea.sflag [#allocation9], 1
    %23 = vsyncpa %s22, 0
    %24 = vsyncpa [#allocation12], 0
    %s25 = scalar_lea.sflag [#allocation12], 1
    %26 = vsyncpa %s25, 0
    %27 = vsyncpa [#allocation15], 0
    %s28 = scalar_lea.sflag [#allocation15], 1
    %29 = vsyncpa %s28, 0
    %30 = vsyncpa [#allocation4], 0
    %s31 = scalar_lea.sflag [#allocation4], 1
    %32 = vsyncpa %s31, 0
    loop: start=0, step=1, limit=6
    $region2: #{tpu_custom_call.1} parent=1 // loop_pre_header
      _
    $region3: #{tpu_custom_call.1} parent=1 // loop_header
      %s34 = sphi 0, %s38
      %p35 = scmp.ge.s32.totalorder %s34, 6
      %s41 = sphi 0, %s53
      %s42 = sphi 0, %s49
      %s43 = sphi 0, %s41
      %s44 = sphi 0, %s42
      %s45 = sphi 0, %s43
      %s46 = sphi 0, %s44
      %s56 = sphi 0, %s58
      %s59 = sphi 0, %s56
      %s60 = sphi 0, %s59
      %s76 = sphi 0, %s60
      %s82 = sphi 0, %s84
      %s85 = sphi 0, %s82
      %s86 = sphi 0, %s85
      %s102 = sphi 0, %s86
      %s108 = sphi 0, %s110
      %s111 = sphi 0, %s108
      %s112 = sphi 0, %s111
      %s128 = sphi 0, %s112
      %s134 = sphi 0, %s136
      %s137 = sphi 0, %s134
      %s138 = sphi 0, %s137
      %s154 = sphi 0, %s138
      %s160 = sphi 0, %s162
      %s163 = sphi 0, %s160
      %s164 = sphi 0, %s163
      %s180 = sphi 0, %s164
      %s186 = sphi 0, %s188
      %s189 = sphi 0, %s186
      %s190 = sphi 0, %s189
      %s206 = sphi 0, %s190
      %s212 = sphi 0, %s214
      %s215 = sphi 0, %s212
      %s216 = sphi 0, %s215
      %s232 = sphi 0, %s216
      %s238 = sphi 0, %s240
      %s241 = sphi 0, %s238
      %s242 = sphi 0, %s241
      %s258 = sphi 0, %s242
      %s264 = sphi 0, %s266
      %s267 = sphi 0, %s264
      %s268 = sphi 0, %s267
      %s284 = sphi 0, %s268
      %s288 = sphi 0, %s288
      %s290 = sphi 0, %s288
      %s291 = sphi 0, %s290
      %s305 = sphi 0, %s291
      %s311 = sphi 0, %s313
      %s314 = sphi 0, %s311
      %s315 = sphi 0, %s314
      %s331 = sphi 0, %s315
    $region4: #{tpu_custom_call.1} parent=1 // loop_header_branch
      %37 = sbr.rel (%p35) target = $region8
    $region5: #{tpu_custom_call.1} parent=1 // loop_body
      %s39 = ssub.s32 %s34, 1
      %s40 = ssub.s32 %s34, 2
      %s47 = sadd.s32 1, %s42
      %p48 = scmp.ge.s32.totalorder %s47, 2
      %s49 = scalar_select %p48, 0, %s47
      %s50 = sadd.s32 1, %s41
      %s51 = scalar_select %p48, %s50, %s41
      %p52 = scmp.ge.s32.totalorder %s51, 2
      %s53 = scalar_select %p52, 0, %s51
      %s54 = ssub.s32 %s41, %s53
      %p55 = scmp.eq.s32.totalorder %s54, 0
      %s57 = sadd.s32 %s56, 1
      %s58 = scalar_select %p55, %s56, %s57
      %p61 = pneg %p55
      %p62 = scmp.eq.s32.totalorder %s34, 3
      %p63 = por %p61, %p62
      %p64 = scmp.ne.s32.totalorder %s56, %s59
      %p65 = scmp.eq.s32.totalorder %s34, 0
      %p66 = por %p64, %p65
      %p67 = scmp.ne.s32.totalorder %s56, %s59
      %p68 = scmp.eq.s32.totalorder %s39, 3
      %p69 = por %p67, %p68
      %p70 = scmp.ne.s32.totalorder %s59, %s60
      %p71 = scmp.eq.s32.totalorder %s39, 0
      %p72 = por %p70, %p71
      %p73 = scmp.ne.s32.totalorder %s59, %s60
      %p74 = scmp.eq.s32.totalorder %s40, 3
      %p75 = por %p73, %p74
      %p77 = scmp.ne.s32.totalorder %s60, %s76
      %p78 = scmp.eq.s32.totalorder %s40, 0
      %p79 = por %p77, %p78
      %s80 = ssub.s32 %s41, %s53
      %p81 = scmp.eq.s32.totalorder %s80, 0
      %s83 = sadd.s32 %s82, 1
      %s84 = scalar_select %p81, %s82, %s83
      %p87 = pneg %p81
      %p88 = scmp.eq.s32.totalorder %s34, 3
      %p89 = por %p87, %p88
      %p90 = scmp.ne.s32.totalorder %s82, %s85
      %p91 = scmp.eq.s32.totalorder %s34, 0
      %p92 = por %p90, %p91
      %p93 = scmp.ne.s32.totalorder %s82, %s85
      %p94 = scmp.eq.s32.totalorder %s39, 3
      %p95 = por %p93, %p94
      %p96 = scmp.ne.s32.totalorder %s85, %s86
      %p97 = scmp.eq.s32.totalorder %s39, 0
      %p98 = por %p96, %p97
      %p99 = scmp.ne.s32.totalorder %s85, %s86
      %p100 = scmp.eq.s32.totalorder %s40, 3
      %p101 = por %p99, %p100
      %p103 = scmp.ne.s32.totalorder %s86, %s102
      %p104 = scmp.eq.s32.totalorder %s40, 0
      %p105 = por %p103, %p104
      %s106 = ssub.s32 %s41, %s53
      %p107 = scmp.eq.s32.totalorder %s106, 0
      %s109 = sadd.s32 %s108, 1
      %s110 = scalar_select %p107, %s108, %s109
      %p113 = pneg %p107
      %p114 = scmp.eq.s32.totalorder %s34, 3
      %p115 = por %p113, %p114
      %p116 = scmp.ne.s32.totalorder %s108, %s111
      %p117 = scmp.eq.s32.totalorder %s34, 0
      %p118 = por %p116, %p117
      %p119 = scmp.ne.s32.totalorder %s108, %s111
      %p120 = scmp.eq.s32.totalorder %s39, 3
      %p121 = por %p119, %p120
      %p122 = scmp.ne.s32.totalorder %s111, %s112
      %p123 = scmp.eq.s32.totalorder %s39, 0
      %p124 = por %p122, %p123
      %p125 = scmp.ne.s32.totalorder %s111, %s112
      %p126 = scmp.eq.s32.totalorder %s40, 3
      %p127 = por %p125, %p126
      %p129 = scmp.ne.s32.totalorder %s112, %s128
      %p130 = scmp.eq.s32.totalorder %s40, 0
      %p131 = por %p129, %p130
      %s132 = ssub.s32 %s41, %s53
      %p133 = scmp.eq.s32.totalorder %s132, 0
      %s135 = sadd.s32 %s134, 1
      %s136 = scalar_select %p133, %s134, %s135
      %p139 = pneg %p133
      %p140 = scmp.eq.s32.totalorder %s34, 3
      %p141 = por %p139, %p140
      %p142 = scmp.ne.s32.totalorder %s134, %s137
      %p143 = scmp.eq.s32.totalorder %s34, 0
      %p144 = por %p142, %p143
      %p145 = scmp.ne.s32.totalorder %s134, %s137
      %p146 = scmp.eq.s32.totalorder %s39, 3
      %p147 = por %p145, %p146
      %p148 = scmp.ne.s32.totalorder %s137, %s138
      %p149 = scmp.eq.s32.totalorder %s39, 0
      %p150 = por %p148, %p149
      %p151 = scmp.ne.s32.totalorder %s137, %s138
      %p152 = scmp.eq.s32.totalorder %s40, 3
      %p153 = por %p151, %p152
      %p155 = scmp.ne.s32.totalorder %s138, %s154
      %p156 = scmp.eq.s32.totalorder %s40, 0
      %p157 = por %p155, %p156
      %s158 = ssub.s32 %s42, %s49
      %p159 = scmp.eq.s32.totalorder %s158, 0
      %s161 = sadd.s32 %s160, 1
      %s162 = scalar_select %p159, %s160, %s161
      %p165 = pneg %p159
      %p166 = scmp.eq.s32.totalorder %s34, 3
      %p167 = por %p165, %p166
      %p168 = scmp.ne.s32.totalorder %s160, %s163
      %p169 = scmp.eq.s32.totalorder %s34, 0
      %p170 = por %p168, %p169
      %p171 = scmp.ne.s32.totalorder %s160, %s163
      %p172 = scmp.eq.s32.totalorder %s39, 3
      %p173 = por %p171, %p172
      %p174 = scmp.ne.s32.totalorder %s163, %s164
      %p175 = scmp.eq.s32.totalorder %s39, 0
      %p176 = por %p174, %p175
      %p177 = scmp.ne.s32.totalorder %s163, %s164
      %p178 = scmp.eq.s32.totalorder %s40, 3
      %p179 = por %p177, %p178
      %p181 = scmp.ne.s32.totalorder %s164, %s180
      %p182 = scmp.eq.s32.totalorder %s40, 0
      %p183 = por %p181, %p182
      %s184 = ssub.s32 %s42, %s49
      %p185 = scmp.eq.s32.totalorder %s184, 0
      %s187 = sadd.s32 %s186, 1
      %s188 = scalar_select %p185, %s186, %s187
      %p191 = pneg %p185
      %p192 = scmp.eq.s32.totalorder %s34, 3
      %p193 = por %p191, %p192
      %p194 = scmp.ne.s32.totalorder %s186, %s189
      %p195 = scmp.eq.s32.totalorder %s34, 0
      %p196 = por %p194, %p195
      %p197 = scmp.ne.s32.totalorder %s186, %s189
      %p198 = scmp.eq.s32.totalorder %s39, 3
      %p199 = por %p197, %p198
      %p200 = scmp.ne.s32.totalorder %s189, %s190
      %p201 = scmp.eq.s32.totalorder %s39, 0
      %p202 = por %p200, %p201
      %p203 = scmp.ne.s32.totalorder %s189, %s190
      %p204 = scmp.eq.s32.totalorder %s40, 3
      %p205 = por %p203, %p204
      %p207 = scmp.ne.s32.totalorder %s190, %s206
      %p208 = scmp.eq.s32.totalorder %s40, 0
      %p209 = por %p207, %p208
      %s210 = ssub.s32 %s42, %s49
      %p211 = scmp.eq.s32.totalorder %s210, 0
      %s213 = sadd.s32 %s212, 1
      %s214 = scalar_select %p211, %s212, %s213
      %p217 = pneg %p211
      %p218 = scmp.eq.s32.totalorder %s34, 3
      %p219 = por %p217, %p218
      %p220 = scmp.ne.s32.totalorder %s212, %s215
      %p221 = scmp.eq.s32.totalorder %s34, 0
      %p222 = por %p220, %p221
      %p223 = scmp.ne.s32.totalorder %s212, %s215
      %p224 = scmp.eq.s32.totalorder %s39, 3
      %p225 = por %p223, %p224
      %p226 = scmp.ne.s32.totalorder %s215, %s216
      %p227 = scmp.eq.s32.totalorder %s39, 0
      %p228 = por %p226, %p227
      %p229 = scmp.ne.s32.totalorder %s215, %s216
      %p230 = scmp.eq.s32.totalorder %s40, 3
      %p231 = por %p229, %p230
      %p233 = scmp.ne.s32.totalorder %s216, %s232
      %p234 = scmp.eq.s32.totalorder %s40, 0
      %p235 = por %p233, %p234
      %s236 = ssub.s32 %s42, %s49
      %p237 = scmp.eq.s32.totalorder %s236, 0
      %s239 = sadd.s32 %s238, 1
      %s240 = scalar_select %p237, %s238, %s239
      %p243 = pneg %p237
      %p244 = scmp.eq.s32.totalorder %s34, 3
      %p245 = por %p243, %p244
      %p246 = scmp.ne.s32.totalorder %s238, %s241
      %p247 = scmp.eq.s32.totalorder %s34, 0
      %p248 = por %p246, %p247
      %p249 = scmp.ne.s32.totalorder %s238, %s241
      %p250 = scmp.eq.s32.totalorder %s39, 3
      %p251 = por %p249, %p250
      %p252 = scmp.ne.s32.totalorder %s241, %s242
      %p253 = scmp.eq.s32.totalorder %s39, 0
      %p254 = por %p252, %p253
      %p255 = scmp.ne.s32.totalorder %s241, %s242
      %p256 = scmp.eq.s32.totalorder %s40, 3
      %p257 = por %p255, %p256
      %p259 = scmp.ne.s32.totalorder %s242, %s258
      %p260 = scmp.eq.s32.totalorder %s40, 0
      %p261 = por %p259, %p260
      %s262 = ssub.s32 %s42, %s49
      %p263 = scmp.eq.s32.totalorder %s262, 0
      %s265 = sadd.s32 %s264, 1
      %s266 = scalar_select %p263, %s264, %s265
      %p269 = pneg %p263
      %p270 = scmp.eq.s32.totalorder %s34, 3
      %p271 = por %p269, %p270
      %p272 = scmp.ne.s32.totalorder %s264, %s267
      %p273 = scmp.eq.s32.totalorder %s34, 0
      %p274 = por %p272, %p273
      %p275 = scmp.ne.s32.totalorder %s264, %s267
      %p276 = scmp.eq.s32.totalorder %s39, 3
      %p277 = por %p275, %p276
      %p278 = scmp.ne.s32.totalorder %s267, %s268
      %p279 = scmp.eq.s32.totalorder %s39, 0
      %p280 = por %p278, %p279
      %p281 = scmp.ne.s32.totalorder %s267, %s268
      %p282 = scmp.eq.s32.totalorder %s40, 3
      %p283 = por %p281, %p282
      %p285 = scmp.ne.s32.totalorder %s268, %s284
      %p286 = scmp.eq.s32.totalorder %s40, 0
      %p287 = por %p285, %p286
      %s289 = sadd.s32 %s288, 1
      %p292 = scmp.eq.s32.totalorder %s34, 3
      %p293 = scmp.ne.s32.totalorder %s288, %s290
      %p294 = scmp.eq.s32.totalorder %s34, 0
      %p295 = por %p293, %p294
      %p296 = scmp.ne.s32.totalorder %s288, %s290
      %p297 = scmp.eq.s32.totalorder %s39, 3
      %p298 = por %p296, %p297
      %p299 = scmp.ne.s32.totalorder %s290, %s291
      %p300 = scmp.eq.s32.totalorder %s39, 0
      %p301 = por %p299, %p300
      %p302 = scmp.ne.s32.totalorder %s290, %s291
      %p303 = scmp.eq.s32.totalorder %s40, 3
      %p304 = por %p302, %p303
      %p306 = scmp.ne.s32.totalorder %s291, %s305
      %p307 = scmp.eq.s32.totalorder %s40, 0
      %p308 = por %p306, %p307
      %s309 = ssub.s32 %s41, %s53
      %p310 = scmp.eq.s32.totalorder %s309, 0
      %s312 = sadd.s32 %s311, 1
      %s313 = scalar_select %p310, %s311, %s312
      %p316 = pneg %p310
      %p317 = scmp.eq.s32.totalorder %s34, 3
      %p318 = por %p316, %p317
      %p319 = scmp.ne.s32.totalorder %s311, %s314
      %p320 = scmp.eq.s32.totalorder %s34, 0
      %p321 = por %p319, %p320
      %p322 = scmp.ne.s32.totalorder %s311, %s314
      %p323 = scmp.eq.s32.totalorder %s39, 3
      %p324 = por %p322, %p323
      %p325 = scmp.ne.s32.totalorder %s314, %s315
      %p326 = scmp.eq.s32.totalorder %s39, 0
      %p327 = por %p325, %p326
      %p328 = scmp.ne.s32.totalorder %s314, %s315
      %p329 = scmp.eq.s32.totalorder %s40, 3
      %p330 = por %p328, %p329
      %p332 = scmp.ne.s32.totalorder %s315, %s331
      %p333 = scmp.eq.s32.totalorder %s40, 0
      %p334 = por %p332, %p333
      %p335 = scmp.le.s32.totalorder 1, %s34
      %p336 = scmp.lt.s32.totalorder %s34, 5
      %p337 = pnand %p335, %p336
      %p338 = pneg %p337
      // Predicated region
      $region9: #{tpu_custom_call.1} parent=5 // pred_check
        _
      $region10: #{tpu_custom_call.1} parent=5 // pred_check_branch
        %340 = sbr.rel (%p337) target = $region12
      $region11: #{tpu_custom_call.1} parent=5 // pred_region
        %s341 = ssub.s32 %s34, 1
        // Predicated region
        $region13: #{tpu_custom_call.1} parent=11 // pred_check
          %p342 = pneg %p301
        $region14: #{tpu_custom_call.1} parent=11 // pred_check_branch
          %344 = sbr.rel (%p342) target = $region16
        $region15: #{tpu_custom_call.1} parent=11 // pred_region
          _
        $region16: #{tpu_custom_call.1} parent=11 // pred_fallthru
          _
      $region12: #{tpu_custom_call.1} parent=5 // pred_fallthru
        _
      %p345 = scmp.lt.s32.totalorder %s34, 4
      // Predicated region
      $region17: #{tpu_custom_call.1} parent=5 // pred_check
        %p346 = pneg %p345
      $region18: #{tpu_custom_call.1} parent=5 // pred_check_branch
        %348 = sbr.rel (%p346) target = $region20
      $region19: #{tpu_custom_call.1} parent=5 // pred_region
        // Predicated region
        $region21: #{tpu_custom_call.1} parent=19 // pred_check
          %p349 = pneg %p66
        $region22: #{tpu_custom_call.1} parent=19 // pred_check_branch
          %351 = sbr.rel (%p349) target = $region24
        $region23: #{tpu_custom_call.1} parent=19 // pred_region
          %s352 = sand.u32 %s56, 1
          %s353 = scalar_lea.sflag [#allocation3], %s352
          %s354 = sand.u32 %s56, 1
          %s355 = smul.addr %s354, 8
          %s356 = scalar_lea.vmem [#allocation2], %s355
          %s358 = ssub.s32 128, 128
          %359 = vsyncadd %s353, %s358
          %s360 = smul.addr %s41, 128
          %s361 = scalar_lea.hbm %s0, %s360
          %s363 = sshll.u32 %s356, 4
          %s364 = int_to_ptr.vmem [resolvable:$true] %s363
          %366 = dma.hbm_to_vmem [thread:$0]  %s361, 128, %s364, %s353
        $region24: #{tpu_custom_call.1} parent=19 // pred_fallthru
          _
        // Predicated region
        $region25: #{tpu_custom_call.1} parent=19 // pred_check
          %p367 = pneg %p92
        $region26: #{tpu_custom_call.1} parent=19 // pred_check_branch
          %369 = sbr.rel (%p367) target = $region28
        $region27: #{tpu_custom_call.1} parent=19 // pred_region
          %s370 = sand.u32 %s34, 1
          %s371 = scalar_lea.sflag [#allocation6], %s370
          %s372 = sand.u32 %s82, 1
          %s373 = smul.addr %s372, 8
          %s374 = scalar_lea.vmem [#allocation5], %s373
          %s376 = ssub.s32 128, 128
          %377 = vsyncadd %s371, %s376
          %s378 = smul.addr %s41, 128
          %s379 = scalar_lea.hbm %s1, %s378
          %s381 = sshll.u32 %s374, 4
          %s382 = int_to_ptr.vmem [resolvable:$true] %s381
          %384 = dma.hbm_to_vmem [thread:$0]  %s379, 128, %s382, %s371
        $region28: #{tpu_custom_call.1} parent=19 // pred_fallthru
          _
        // Predicated region
        $region29: #{tpu_custom_call.1} parent=19 // pred_check
          %p385 = pneg %p118
        $region30: #{tpu_custom_call.1} parent=19 // pred_check_branch
          %387 = sbr.rel (%p385) target = $region32
        $region31: #{tpu_custom_call.1} parent=19 // pred_region
          %s388 = sand.u32 %s34, 1
          %s389 = scalar_lea.sflag [#allocation6], %s388
          %s390 = sand.u32 %s108, 1
          %s391 = smul.addr %s390, 16
          %s392 = scalar_lea.vmem [#allocation7], %s391
          %s394 = ssub.s32 256, 256
          %395 = vsyncadd %s389, %s394
          %s396 = smul.addr %s41, 2
          %s397 = smul.addr %s396, 128
          %s398 = scalar_lea.hbm %s2, %s397
          %s399 = sshll.u32 %s392, 4
          %s400 = int_to_ptr.vmem [resolvable:$true] %s399
          %405 = dma.hbm_to_vmem [thread:$0]  %s398, 256, %s400, %s389, 128, 128, 8
        $region32: #{tpu_custom_call.1} parent=19 // pred_fallthru
          _
        // Predicated region
        $region33: #{tpu_custom_call.1} parent=19 // pred_check
          %p406 = pneg %p144
        $region34: #{tpu_custom_call.1} parent=19 // pred_check_branch
          %408 = sbr.rel (%p406) target = $region36
        $region35: #{tpu_custom_call.1} parent=19 // pred_region
          %s409 = sand.u32 %s34, 1
          %s410 = scalar_lea.sflag [#allocation9], %s409
          %s411 = sand.u32 %s134, 1
          %s412 = smul.addr %s411, 16
          %s413 = scalar_lea.vmem [#allocation8], %s412
          %s415 = ssub.s32 256, 256
          %416 = vsyncadd %s410, %s415
          %s417 = smul.addr %s41, 2
          %s418 = smul.addr %s417, 128
          %s419 = scalar_lea.hbm %s3, %s418
          %s420 = sshll.u32 %s413, 4
          %s421 = int_to_ptr.vmem [resolvable:$true] %s420
          %426 = dma.hbm_to_vmem [thread:$0]  %s419, 256, %s421, %s410, 128, 128, 8
        $region36: #{tpu_custom_call.1} parent=19 // pred_fallthru
          _
        // Predicated region
        $region37: #{tpu_custom_call.1} parent=19 // pred_check
          %p427 = pneg %p170
        $region38: #{tpu_custom_call.1} parent=19 // pred_check_branch
          %429 = sbr.rel (%p427) target = $region40
        $region39: #{tpu_custom_call.1} parent=19 // pred_region
          %s430 = sand.u32 %s34, 1
          %s431 = scalar_lea.sflag [#allocation9], %s430
          %s432 = sand.u32 %s160, 1
          %s433 = smul.addr %s432, 512
          %s434 = scalar_lea.vmem [#allocation10], %s433
          %s436 = ssub.s32 8192, 8192
          %437 = vsyncadd %s431, %s436
          %s438 = smul.addr %s42, 128
          %s439 = smul.addr %s438, 64
          %s440 = scalar_lea.hbm %s4, %s439
          %s441 = sshll.u32 %s434, 4
          %s442 = int_to_ptr.vmem [resolvable:$true] %s441
          %447 = dma.hbm_to_vmem [thread:$0]  %s440, 8192, %s442, %s431, 64, 64, 4
        $region40: #{tpu_custom_call.1} parent=19 // pred_fallthru
          _
        // Predicated region
        $region41: #{tpu_custom_call.1} parent=19 // pred_check
          %p448 = pneg %p196
        $region42: #{tpu_custom_call.1} parent=19 // pred_check_branch
          %450 = sbr.rel (%p448) target = $region44
        $region43: #{tpu_custom_call.1} parent=19 // pred_region
          %s451 = sand.u32 %s34, 1
          %s452 = scalar_lea.sflag [#allocation12], %s451
          %s453 = sand.u32 %s186, 1
          %s454 = smul.addr %s453, 128
          %s455 = scalar_lea.vmem [#allocation11], %s454
          %s457 = ssub.s32 2048, 2048
          %458 = vsyncadd %s452, %s457
          %s459 = smul.addr %s42, 32
          %s460 = smul.addr %s459, 64
          %s461 = scalar_lea.hbm %s5, %s460
          %s462 = sshll.u32 %s455, 4
          %s463 = int_to_ptr.vmem [resolvable:$true] %s462
          %468 = dma.hbm_to_vmem [thread:$0]  %s461, 2048, %s463, %s452, 128, 128, 8
        $region44: #{tpu_custom_call.1} parent=19 // pred_fallthru
          _
        // Predicated region
        $region45: #{tpu_custom_call.1} parent=19 // pred_check
          %p469 = pneg %p222
        $region46: #{tpu_custom_call.1} parent=19 // pred_check_branch
          %471 = sbr.rel (%p469) target = $region48
        $region47: #{tpu_custom_call.1} parent=19 // pred_region
          %s472 = sand.u32 %s34, 1
          %s473 = scalar_lea.sflag [#allocation12], %s472
          %s474 = sand.u32 %s212, 1
          %s475 = smul.addr %s474, 128
          %s476 = scalar_lea.vmem [#allocation13], %s475
          %s478 = ssub.s32 2048, 2048
          %479 = vsyncadd %s473, %s478
          %s480 = smul.addr %s42, 32
          %s481 = smul.addr %s480, 64
          %s482 = scalar_lea.hbm %s6, %s481
          %s483 = sshll.u32 %s476, 4
          %s484 = int_to_ptr.vmem [resolvable:$true] %s483
          %489 = dma.hbm_to_vmem [thread:$0]  %s482, 2048, %s484, %s473, 64, 64, 4
        $region48: #{tpu_custom_call.1} parent=19 // pred_fallthru
          _
        // Predicated region
        $region49: #{tpu_custom_call.1} parent=19 // pred_check
          %p490 = pneg %p248
        $region50: #{tpu_custom_call.1} parent=19 // pred_check_branch
          %492 = sbr.rel (%p490) target = $region52
        $region51: #{tpu_custom_call.1} parent=19 // pred_region
          %s493 = sand.u32 %s238, 1
          %s494 = scalar_lea.sflag [#allocation15], %s493
          %s495 = sand.u32 %s238, 1
          %s496 = smul.addr %s495, 16
          %s497 = scalar_lea.vmem [#allocation14], %s496
          %s499 = ssub.s32 256, 256
          %500 = vsyncadd %s494, %s499
          %s501 = smul.addr %s42, 2
          %s502 = smul.addr %s501, 128
          %s503 = scalar_lea.hbm %s7, %s502
          %s504 = sshll.u32 %s497, 4
          %s505 = int_to_ptr.vmem [resolvable:$true] %s504
          %510 = dma.hbm_to_vmem [thread:$0]  %s503, 256, %s505, %s494, 128, 128, 8
        $region52: #{tpu_custom_call.1} parent=19 // pred_fallthru
          _
        // Predicated region
        $region53: #{tpu_custom_call.1} parent=19 // pred_check
          %p511 = pneg %p274
        $region54: #{tpu_custom_call.1} parent=19 // pred_check_branch
          %513 = sbr.rel (%p511) target = $region56
        $region55: #{tpu_custom_call.1} parent=19 // pred_region
          %p514 = scmp.lt.s32.totalorder %s42, 1
          %s515 = scalar_select %p514, %s42, 1
          %s516 = smul.addr %s515, 2
          %s517 = scalar_lea.vmem %s8, %s516
        $region56: #{tpu_custom_call.1} parent=19 // pred_fallthru
          _
      $region20: #{tpu_custom_call.1} parent=5 // pred_fallthru
        _
      %p518 = scmp.le.s32.totalorder 1, %s34
      %p519 = scmp.lt.s32.totalorder %s34, 5
      %p520 = pnand %p518, %p519
      %p521 = pneg %p520
      // Predicated region
      $region57: #{tpu_custom_call.1} parent=5 // pred_check
        _
      $region58: #{tpu_custom_call.1} parent=5 // pred_check_branch
        %523 = sbr.rel (%p520) target = $region60
      $region59: #{tpu_custom_call.1} parent=5 // pred_region
        %s524 = ssub.s32 %s34, 1
        %s525 = sand.u32 %s59, 1
        %s526 = scalar_lea.sflag [#allocation3], %s525
        %s527 = sand.u32 %s59, 1
        %s528 = smul.addr %s527, 8
        %s529 = scalar_lea.vmem [#allocation2], %s528
        // Predicated region
        $region61: #{tpu_custom_call.1} parent=59 // pred_check
          %p530 = pneg %p72
        $region62: #{tpu_custom_call.1} parent=59 // pred_check_branch
          %532 = sbr.rel (%p530) target = $region64
        $region63: #{tpu_custom_call.1} parent=59 // pred_region
          %533 = dma.done %s526, 128
        $region64: #{tpu_custom_call.1} parent=59 // pred_fallthru
          _
        %s534 = sand.u32 %s39, 1
        %s535 = scalar_lea.sflag [#allocation6], %s534
        %s536 = sand.u32 %s85, 1
        %s537 = smul.addr %s536, 8
        %s538 = scalar_lea.vmem [#allocation5], %s537
        // Predicated region
        $region65: #{tpu_custom_call.1} parent=59 // pred_check
          %p539 = pneg %p98
        $region66: #{tpu_custom_call.1} parent=59 // pred_check_branch
          %541 = sbr.rel (%p539) target = $region68
        $region67: #{tpu_custom_call.1} parent=59 // pred_region
          %542 = dma.done %s535, 128
        $region68: #{tpu_custom_call.1} parent=59 // pred_fallthru
          _
        %s543 = sand.u32 %s39, 1
        %s544 = scalar_lea.sflag [#allocation6], %s543
        %s545 = sand.u32 %s111, 1
        %s546 = smul.addr %s545, 16
        %s547 = scalar_lea.vmem [#allocation7], %s546
        // Predicated region
        $region69: #{tpu_custom_call.1} parent=59 // pred_check
          %p548 = pneg %p124
        $region70: #{tpu_custom_call.1} parent=59 // pred_check_branch
          %550 = sbr.rel (%p548) target = $region72
        $region71: #{tpu_custom_call.1} parent=59 // pred_region
          %551 = dma.done %s544, 256
        $region72: #{tpu_custom_call.1} parent=59 // pred_fallthru
          _
        %s552 = sand.u32 %s39, 1
        %s553 = scalar_lea.sflag [#allocation9], %s552
        %s554 = sand.u32 %s137, 1
        %s555 = smul.addr %s554, 16
        %s556 = scalar_lea.vmem [#allocation8], %s555
        // Predicated region
        $region73: #{tpu_custom_call.1} parent=59 // pred_check
          %p557 = pneg %p150
        $region74: #{tpu_custom_call.1} parent=59 // pred_check_branch
          %559 = sbr.rel (%p557) target = $region76
        $region75: #{tpu_custom_call.1} parent=59 // pred_region
          %560 = dma.done %s553, 256
        $region76: #{tpu_custom_call.1} parent=59 // pred_fallthru
          _
        %s561 = sand.u32 %s39, 1
        %s562 = scalar_lea.sflag [#allocation9], %s561
        %s563 = sand.u32 %s163, 1
        %s564 = smul.addr %s563, 512
        %s565 = scalar_lea.vmem [#allocation10], %s564
        // Predicated region
        $region77: #{tpu_custom_call.1} parent=59 // pred_check
          %p566 = pneg %p176
        $region78: #{tpu_custom_call.1} parent=59 // pred_check_branch
          %568 = sbr.rel (%p566) target = $region80
        $region79: #{tpu_custom_call.1} parent=59 // pred_region
          %569 = dma.done %s562, 8192
        $region80: #{tpu_custom_call.1} parent=59 // pred_fallthru
          _
        %s570 = sand.u32 %s39, 1
        %s571 = scalar_lea.sflag [#allocation12], %s570
        %s572 = sand.u32 %s189, 1
        %s573 = smul.addr %s572, 128
        %s574 = scalar_lea.vmem [#allocation11], %s573
        // Predicated region
        $region81: #{tpu_custom_call.1} parent=59 // pred_check
          %p575 = pneg %p202
        $region82: #{tpu_custom_call.1} parent=59 // pred_check_branch
          %577 = sbr.rel (%p575) target = $region84
        $region83: #{tpu_custom_call.1} parent=59 // pred_region
          %578 = dma.done %s571, 2048
        $region84: #{tpu_custom_call.1} parent=59 // pred_fallthru
          _
        %s579 = sand.u32 %s39, 1
        %s580 = scalar_lea.sflag [#allocation12], %s579
        %s581 = sand.u32 %s215, 1
        %s582 = smul.addr %s581, 128
        %s583 = scalar_lea.vmem [#allocation13], %s582
        // Predicated region
        $region85: #{tpu_custom_call.1} parent=59 // pred_check
          %p584 = pneg %p228
        $region86: #{tpu_custom_call.1} parent=59 // pred_check_branch
          %586 = sbr.rel (%p584) target = $region88
        $region87: #{tpu_custom_call.1} parent=59 // pred_region
          %587 = dma.done %s580, 2048
        $region88: #{tpu_custom_call.1} parent=59 // pred_fallthru
          _
        %s588 = sand.u32 %s241, 1
        %s589 = scalar_lea.sflag [#allocation15], %s588
        %s590 = sand.u32 %s241, 1
        %s591 = smul.addr %s590, 16
        %s592 = scalar_lea.vmem [#allocation14], %s591
        // Predicated region
        $region89: #{tpu_custom_call.1} parent=59 // pred_check
          %p593 = pneg %p254
        $region90: #{tpu_custom_call.1} parent=59 // pred_check_branch
          %595 = sbr.rel (%p593) target = $region92
        $region91: #{tpu_custom_call.1} parent=59 // pred_region
          %596 = dma.done %s589, 256
        $region92: #{tpu_custom_call.1} parent=59 // pred_fallthru
          _
        %s597 = sand.u32 %s59, 1
        %s598 = scalar_lea.sflag [#allocation3], %s597
        %s599 = sand.u32 %s59, 1
        %s600 = smul.addr %s599, 8
        %s601 = scalar_lea.vmem [#allocation2], %s600
        %p602 = pneg %p72
        %p603 = pneg %p69
        %s604 = sand.u32 %s39, 1
        %s605 = scalar_lea.sflag [#allocation6], %s604
        %s606 = sand.u32 %s85, 1
        %s607 = smul.addr %s606, 8
        %s608 = scalar_lea.vmem [#allocation5], %s607
        %p609 = pneg %p98
        %p610 = pneg %p95
        %s611 = sand.u32 %s39, 1
        %s612 = scalar_lea.sflag [#allocation6], %s611
        %s613 = sand.u32 %s111, 1
        %s614 = smul.addr %s613, 16
        %s615 = scalar_lea.vmem [#allocation7], %s614
        %p616 = pneg %p124
        %p617 = pneg %p121
        %s618 = sand.u32 %s39, 1
        %s619 = scalar_lea.sflag [#allocation9], %s618
        %s620 = sand.u32 %s137, 1
        %s621 = smul.addr %s620, 16
        %s622 = scalar_lea.vmem [#allocation8], %s621
        %p623 = pneg %p150
        %p624 = pneg %p147
        %s625 = sand.u32 %s39, 1
        %s626 = scalar_lea.sflag [#allocation9], %s625
        %s627 = sand.u32 %s163, 1
        %s628 = smul.addr %s627, 512
        %s629 = scalar_lea.vmem [#allocation10], %s628
        %p630 = pneg %p176
        %p631 = pneg %p173
        %s632 = sand.u32 %s39, 1
        %s633 = scalar_lea.sflag [#allocation12], %s632
        %s634 = sand.u32 %s189, 1
        %s635 = smul.addr %s634, 128
        %s636 = scalar_lea.vmem [#allocation11], %s635
        %p637 = pneg %p202
        %p638 = pneg %p199
        %s639 = sand.u32 %s39, 1
        %s640 = scalar_lea.sflag [#allocation12], %s639
        %s641 = sand.u32 %s215, 1
        %s642 = smul.addr %s641, 128
        %s643 = scalar_lea.vmem [#allocation13], %s642
        %p644 = pneg %p228
        %p645 = pneg %p225
        %s646 = sand.u32 %s241, 1
        %s647 = scalar_lea.sflag [#allocation15], %s646
        %s648 = sand.u32 %s241, 1
        %s649 = smul.addr %s648, 16
        %s650 = scalar_lea.vmem [#allocation14], %s649
        %p651 = pneg %p254
        %p652 = pneg %p251
        %p653 = scmp.lt.s32.totalorder %s44, 1
        %s654 = scalar_select %p653, %s44, 1
        %s655 = smul.addr %s654, 2
        %s656 = scalar_lea.vmem %s8, %s655
        %p657 = pneg %p280
        %p658 = pneg %p277
        %p659 = pneg %p301
        %p660 = pneg %p298
        %p661 = pneg %p327
        %p662 = pneg %p324
        %s663 = sand.u32 %s314, 1
        %s664 = scalar_lea.sflag [#allocation4], %s663
        %s665 = sand.u32 %s314, 1
        %s666 = smul.addr %s665, 8
        %s667 = scalar_lea.vmem [#allocation16], %s666
        %p668 = scmp.lt.s32.totalorder %s44, 1
        %s669 = scalar_select %p668, %s44, 1
        %s670 = smul.addr %s669, 2
        %s671 = scalar_lea.vmem %s8, %s670
        %p673 = scmp.eq.s32.totalorder %s44, 0
        // Predicated region
        $region93: #{tpu_custom_call.1} parent=59 // pred_check
          %p674 = pneg %p673
        $region94: #{tpu_custom_call.1} parent=59 // pred_check_branch
          %676 = sbr.rel (%p674) target = $region96
        $region95: #{tpu_custom_call.1} parent=59 // pred_region
          %v677 = vld [vmem:[%s529] sm:$0xff]
          %678 = vst [vmem:[%s667] sm:$0xff] %v677
        $region96: #{tpu_custom_call.1} parent=59 // pred_fallthru
          _
        %v679 = vld [vmem:[%s667] sm:$0xff]
        %v680 = vld [vmem:[%s592] sm:$0xff]
        %v681 = vld [vmem:[%s592 + $0x8] sm:$0xff]
        %v682 = vld [vmem:[%s538] sm:$0xff]
        %v683 = vld [vmem:[%s565] sm:$0xf]
        %v684 = vld [vmem:[%s565 + $0x4] sm:$0xf]
        %v685 = vld [vmem:[%s565 + $0x8] sm:$0xf]
        %v686 = vld [vmem:[%s565 + $0xc] sm:$0xf]
        %v687 = vld [vmem:[%s565 + $0x10] sm:$0xf]
        %v688 = vld [vmem:[%s565 + $0x14] sm:$0xf]
        %v689 = vld [vmem:[%s565 + $0x18] sm:$0xf]
        %v690 = vld [vmem:[%s565 + $0x1c] sm:$0xf]
        %v691 = vld [vmem:[%s565 + $0x20] sm:$0xf]
        %v692 = vld [vmem:[%s565 + $0x24] sm:$0xf]
        %v693 = vld [vmem:[%s565 + $0x28] sm:$0xf]
        %v694 = vld [vmem:[%s565 + $0x2c] sm:$0xf]
        %v695 = vld [vmem:[%s565 + $0x30] sm:$0xf]
        %v696 = vld [vmem:[%s565 + $0x34] sm:$0xf]
        %v697 = vld [vmem:[%s565 + $0x38] sm:$0xf]
        %v698 = vld [vmem:[%s565 + $0x3c] sm:$0xf]
        %s699 = scalar_lea.vmem %s565, 64 [#allocation10]
        %v700 = vld [vmem:[%s699] sm:$0xf]
        %v701 = vld [vmem:[%s699 + $0x4] sm:$0xf]
        %v702 = vld [vmem:[%s699 + $0x8] sm:$0xf]
        %v703 = vld [vmem:[%s699 + $0xc] sm:$0xf]
        %v704 = vld [vmem:[%s699 + $0x10] sm:$0xf]
        %v705 = vld [vmem:[%s699 + $0x14] sm:$0xf]
        %v706 = vld [vmem:[%s699 + $0x18] sm:$0xf]
        %v707 = vld [vmem:[%s699 + $0x1c] sm:$0xf]
        %v708 = vld [vmem:[%s699 + $0x20] sm:$0xf]
        %v709 = vld [vmem:[%s699 + $0x24] sm:$0xf]
        %v710 = vld [vmem:[%s699 + $0x28] sm:$0xf]
        %v711 = vld [vmem:[%s699 + $0x2c] sm:$0xf]
        %v712 = vld [vmem:[%s699 + $0x30] sm:$0xf]
        %v713 = vld [vmem:[%s699 + $0x34] sm:$0xf]
        %v714 = vld [vmem:[%s699 + $0x38] sm:$0xf]
        %v715 = vld [vmem:[%s699 + $0x3c] sm:$0xf]
        %s716 = scalar_lea.vmem %s565, 128 [#allocation10]
        %v717 = vld [vmem:[%s716] sm:$0xf]
        %v718 = vld [vmem:[%s716 + $0x4] sm:$0xf]
        %v719 = vld [vmem:[%s716 + $0x8] sm:$0xf]
        %v720 = vld [vmem:[%s716 + $0xc] sm:$0xf]
        %v721 = vld [vmem:[%s716 + $0x10] sm:$0xf]
        %v722 = vld [vmem:[%s716 + $0x14] sm:$0xf]
        %v723 = vld [vmem:[%s716 + $0x18] sm:$0xf]
        %v724 = vld [vmem:[%s716 + $0x1c] sm:$0xf]
        %v725 = vld [vmem:[%s716 + $0x20] sm:$0xf]
        %v726 = vld [vmem:[%s716 + $0x24] sm:$0xf]
        %v727 = vld [vmem:[%s716 + $0x28] sm:$0xf]
        %v728 = vld [vmem:[%s716 + $0x2c] sm:$0xf]
        %v729 = vld [vmem:[%s716 + $0x30] sm:$0xf]
        %v730 = vld [vmem:[%s716 + $0x34] sm:$0xf]
        %v731 = vld [vmem:[%s716 + $0x38] sm:$0xf]
        %v732 = vld [vmem:[%s716 + $0x3c] sm:$0xf]
        %s733 = scalar_lea.vmem %s565, 192 [#allocation10]
        %v734 = vld [vmem:[%s733] sm:$0xf]
        %v735 = vld [vmem:[%s733 + $0x4] sm:$0xf]
        %v736 = vld [vmem:[%s733 + $0x8] sm:$0xf]
        %v737 = vld [vmem:[%s733 + $0xc] sm:$0xf]
        %v738 = vld [vmem:[%s733 + $0x10] sm:$0xf]
        %v739 = vld [vmem:[%s733 + $0x14] sm:$0xf]
        %v740 = vld [vmem:[%s733 + $0x18] sm:$0xf]
        %v741 = vld [vmem:[%s733 + $0x1c] sm:$0xf]
        %v742 = vld [vmem:[%s733 + $0x20] sm:$0xf]
        %v743 = vld [vmem:[%s733 + $0x24] sm:$0xf]
        %v744 = vld [vmem:[%s733 + $0x28] sm:$0xf]
        %v745 = vld [vmem:[%s733 + $0x2c] sm:$0xf]
        %v746 = vld [vmem:[%s733 + $0x30] sm:$0xf]
        %v747 = vld [vmem:[%s733 + $0x34] sm:$0xf]
        %v748 = vld [vmem:[%s733 + $0x38] sm:$0xf]
        %v749 = vld [vmem:[%s733 + $0x3c] sm:$0xf]
        %v750 = vlaneseq
        %v751 = vshrl.u32 %v750, 7
        %v752 = vsub.s32 0, %v751
        %v753 = vrot.slane %v680, %v752
        %v770 = vunpack.c.l.b16 %v683
        %v771 = vunpack.c.l.b16 %v684
        %v772 = vunpack.c.l.b16 %v685
        %v773 = vunpack.c.l.b16 %v686
        %v774 = vunpack.c.l.b16 %v687
        %v775 = vunpack.c.l.b16 %v688
        %v776 = vunpack.c.l.b16 %v689
        %v777 = vunpack.c.l.b16 %v690
        %v778 = vunpack.c.l.b16 %v691
        %v779 = vunpack.c.l.b16 %v692
        %v780 = vunpack.c.l.b16 %v693
        %v781 = vunpack.c.l.b16 %v694
        %v782 = vunpack.c.l.b16 %v695
        %v783 = vunpack.c.l.b16 %v696
        %v784 = vunpack.c.l.b16 %v697
        %v785 = vunpack.c.l.b16 %v698
        %v786 = vpack.c.b16 %v771, %v770
        %v787 = vpack.c.b16 %v773, %v772
        %v788 = vpack.c.b16 %v775, %v774
        %v789 = vpack.c.b16 %v777, %v776
        %v790 = vpack.c.b16 %v779, %v778
        %v791 = vpack.c.b16 %v781, %v780
        %v792 = vpack.c.b16 %v783, %v782
        %v793 = vpack.c.b16 %v785, %v784
        %802 = vmatprep.subr.bf16.mxu0 0
        %803 = vmatpush1.bf16.msra.mxu0 %v786
        %804 = vmatprep.subr.bf16.mxu0 0
        %805 = vmatpush1.bf16.msra.mxu0 %v787
        %806 = vmatprep.subr.bf16.mxu0 0
        %807 = vmatpush1.bf16.msra.mxu0 %v788
        %808 = vmatprep.subr.bf16.mxu0 0
        %809 = vmatpush1.bf16.msra.mxu0 %v789
        %810 = vmatprep.subr.bf16.mxu0 0
        %811 = vmatpush1.bf16.msra.mxu0 %v790
        %812 = vmatprep.subr.bf16.mxu0 0
        %813 = vmatpush1.bf16.msra.mxu0 %v791
        %814 = vmatprep.subr.bf16.mxu0 0
        %815 = vmatpush1.bf16.msra.mxu0 %v792
        %816 = vmatprep.subr.bf16.mxu0 0
        %817 = vmatpush1.bf16.msra.mxu0 %v793
        %818 = vmatprep.subr.bf16.mxu0 0
        %819 = vmatpush1.bf16.msra.mxu0 0
        %820 = vmatprep.subr.bf16.mxu0 0
        %821 = vmatpush1.bf16.msra.mxu0 0
        %822 = vmatprep.subr.bf16.mxu0 0
        %823 = vmatpush1.bf16.msra.mxu0 0
        %824 = vmatprep.subr.bf16.mxu0 0
        %825 = vmatpush1.bf16.msra.mxu0 0
        %826 = vmatprep.subr.bf16.mxu0 0
        %827 = vmatpush1.bf16.msra.mxu0 0
        %828 = vmatprep.subr.bf16.mxu0 0
        %829 = vmatpush1.bf16.msra.mxu0 0
        %830 = vmatprep.subr.bf16.mxu0 0
        %831 = vmatpush1.bf16.msra.mxu0 0
        %832 = vmatprep.subr.bf16.mxu0 0
        %833 = vmatpush1.bf16.msra.mxu0 0
        %834 = vmatprep.mubr.f32.mxu0 0.0
        %835 = vmatmul.mubr.f32.gmra.mrb[0].mxu0 %v679
        %v836 = vpop.f32.mrb[0].mxu0
        %v837 = vadd.f32 %v753, %v836
        %v838 = vpop.f32.mrb[0].mxu0
        %839 = vdwg.mxu0
        %v840 = vmul.f32 %v837, 0.17677669
        %v841 = vlaneseq
        %v842 = vshrl.u32 %v841, 7
        %v843 = vsub.s32 1, %v842
        %v844 = vrot.slane %v680, %v843
        %v861 = vunpack.c.l.b16 %v700
        %v862 = vunpack.c.l.b16 %v701
        %v863 = vunpack.c.l.b16 %v702
        %v864 = vunpack.c.l.b16 %v703
        %v865 = vunpack.c.l.b16 %v704
        %v866 = vunpack.c.l.b16 %v705
        %v867 = vunpack.c.l.b16 %v706
        %v868 = vunpack.c.l.b16 %v707
        %v869 = vunpack.c.l.b16 %v708
        %v870 = vunpack.c.l.b16 %v709
        %v871 = vunpack.c.l.b16 %v710
        %v872 = vunpack.c.l.b16 %v711
        %v873 = vunpack.c.l.b16 %v712
        %v874 = vunpack.c.l.b16 %v713
        %v875 = vunpack.c.l.b16 %v714
        %v876 = vunpack.c.l.b16 %v715
        %v877 = vpack.c.b16 %v862, %v861
        %v878 = vpack.c.b16 %v864, %v863
        %v879 = vpack.c.b16 %v866, %v865
        %v880 = vpack.c.b16 %v868, %v867
        %v881 = vpack.c.b16 %v870, %v869
        %v882 = vpack.c.b16 %v872, %v871
        %v883 = vpack.c.b16 %v874, %v873
        %v884 = vpack.c.b16 %v876, %v875
        %893 = vmatprep.subr.bf16.mxu0 0
        %894 = vmatpush1.bf16.msra.mxu0 %v877
        %895 = vmatprep.subr.bf16.mxu0 0
        %896 = vmatpush1.bf16.msra.mxu0 %v878
        %897 = vmatprep.subr.bf16.mxu0 0
        %898 = vmatpush1.bf16.msra.mxu0 %v879
        %899 = vmatprep.subr.bf16.mxu0 0
        %900 = vmatpush1.bf16.msra.mxu0 %v880
        %901 = vmatprep.subr.bf16.mxu0 0
        %902 = vmatpush1.bf16.msra.mxu0 %v881
        %903 = vmatprep.subr.bf16.mxu0 0
        %904 = vmatpush1.bf16.msra.mxu0 %v882
        %905 = vmatprep.subr.bf16.mxu0 0
        %906 = vmatpush1.bf16.msra.mxu0 %v883
        %907 = vmatprep.subr.bf16.mxu0 0
        %908 = vmatpush1.bf16.msra.mxu0 %v884
        %909 = vmatprep.subr.bf16.mxu0 0
        %910 = vmatpush1.bf16.msra.mxu0 0
        %911 = vmatprep.subr.bf16.mxu0 0
        %912 = vmatpush1.bf16.msra.mxu0 0
        %913 = vmatprep.subr.bf16.mxu0 0
        %914 = vmatpush1.bf16.msra.mxu0 0
        %915 = vmatprep.subr.bf16.mxu0 0
        %916 = vmatpush1.bf16.msra.mxu0 0
        %917 = vmatprep.subr.bf16.mxu0 0
        %918 = vmatpush1.bf16.msra.mxu0 0
        %919 = vmatprep.subr.bf16.mxu0 0
        %920 = vmatpush1.bf16.msra.mxu0 0
        %921 = vmatprep.subr.bf16.mxu0 0
        %922 = vmatpush1.bf16.msra.mxu0 0
        %923 = vmatprep.subr.bf16.mxu0 0
        %924 = vmatpush1.bf16.msra.mxu0 0
        %925 = vmatprep.mubr.f32.mxu0 0.0
        %926 = vmatmul.mubr.f32.gmra.mrb[0].mxu0 %v682
        %v927 = vpop.f32.mrb[0].mxu0
        %v928 = vadd.f32 %v844, %v927
        %v929 = vpop.f32.mrb[0].mxu0
        %930 = vdwg.mxu0
        %v931 = vlaneseq
        %v932 = vshrl.u32 %v931, 7
        %v933 = vsub.s32 2, %v932
        %v934 = vrot.slane %v680, %v933
        %v951 = vunpack.c.l.b16 %v717
        %v952 = vunpack.c.l.b16 %v718
        %v953 = vunpack.c.l.b16 %v719
        %v954 = vunpack.c.l.b16 %v720
        %v955 = vunpack.c.l.b16 %v721
        %v956 = vunpack.c.l.b16 %v722
        %v957 = vunpack.c.l.b16 %v723
        %v958 = vunpack.c.l.b16 %v724
        %v959 = vunpack.c.l.b16 %v725
        %v960 = vunpack.c.l.b16 %v726
        %v961 = vunpack.c.l.b16 %v727
        %v962 = vunpack.c.l.b16 %v728
        %v963 = vunpack.c.l.b16 %v729
        %v964 = vunpack.c.l.b16 %v730
        %v965 = vunpack.c.l.b16 %v731
        %v966 = vunpack.c.l.b16 %v732
        %v967 = vpack.c.b16 %v952, %v951
        %v968 = vpack.c.b16 %v954, %v953
        %v969 = vpack.c.b16 %v956, %v955
        %v970 = vpack.c.b16 %v958, %v957
        %v971 = vpack.c.b16 %v960, %v959
        %v972 = vpack.c.b16 %v962, %v961
        %v973 = vpack.c.b16 %v964, %v963
        %v974 = vpack.c.b16 %v966, %v965
        %983 = vmatprep.subr.bf16.mxu0 0
        %984 = vmatpush1.bf16.msra.mxu0 %v967
        %985 = vmatprep.subr.bf16.mxu0 0
        %986 = vmatpush1.bf16.msra.mxu0 %v968
        %987 = vmatprep.subr.bf16.mxu0 0
        %988 = vmatpush1.bf16.msra.mxu0 %v969
        %989 = vmatprep.subr.bf16.mxu0 0
        %990 = vmatpush1.bf16.msra.mxu0 %v970
        %991 = vmatprep.subr.bf16.mxu0 0
        %992 = vmatpush1.bf16.msra.mxu0 %v971
        %993 = vmatprep.subr.bf16.mxu0 0
        %994 = vmatpush1.bf16.msra.mxu0 %v972
        %995 = vmatprep.subr.bf16.mxu0 0
        %996 = vmatpush1.bf16.msra.mxu0 %v973
        %997 = vmatprep.subr.bf16.mxu0 0
        %998 = vmatpush1.bf16.msra.mxu0 %v974
        %999 = vmatprep.subr.bf16.mxu0 0
        %1000 = vmatpush1.bf16.msra.mxu0 0
        %1001 = vmatprep.subr.bf16.mxu0 0
        %1002 = vmatpush1.bf16.msra.mxu0 0
        %1003 = vmatprep.subr.bf16.mxu0 0
        %1004 = vmatpush1.bf16.msra.mxu0 0
        %1005 = vmatprep.subr.bf16.mxu0 0
        %1006 = vmatpush1.bf16.msra.mxu0 0
        %1007 = vmatprep.subr.bf16.mxu0 0
        %1008 = vmatpush1.bf16.msra.mxu0 0
        %1009 = vmatprep.subr.bf16.mxu0 0
        %1010 = vmatpush1.bf16.msra.mxu0 0
        %1011 = vmatprep.subr.bf16.mxu0 0
        %1012 = vmatpush1.bf16.msra.mxu0 0
        %1013 = vmatprep.subr.bf16.mxu0 0
        %1014 = vmatpush1.bf16.msra.mxu0 0
        %1015 = vmatprep.mubr.f32.mxu0 0.0
        %1016 = vmatmul.mubr.f32.gmra.mrb[0].mxu0 %v682
        %v1017 = vpop.f32.mrb[0].mxu0
        %v1018 = vadd.f32 %v934, %v1017
        %v1019 = vpop.f32.mrb[0].mxu0
        %1020 = vdwg.mxu0
        %v1021 = vunpack.c.l.bf16 %v734
        %v1022 = vunpack.c.l.bf16 %v735
        %v1023 = vunpack.c.l.bf16 %v736
        %v1024 = vunpack.c.l.bf16 %v737
        %v1025 = vunpack.c.l.bf16 %v738
        %v1026 = vunpack.c.l.bf16 %v739
        %v1027 = vunpack.c.l.bf16 %v740
        %v1028 = vunpack.c.l.bf16 %v741
        %v1029 = vunpack.c.l.bf16 %v742
        %v1030 = vunpack.c.l.bf16 %v743
        %v1031 = vunpack.c.l.bf16 %v744
        %v1032 = vunpack.c.l.bf16 %v745
        %v1033 = vunpack.c.l.bf16 %v746
        %v1034 = vunpack.c.l.bf16 %v747
        %v1035 = vunpack.c.l.bf16 %v748
        %v1036 = vunpack.c.l.bf16 %v749
        %vm1037 = vcmask 261120
        %v1039 = vsel %vm1037, %v840, 0
        %v1042 = vsel %vm1037, %v928, 0
        %1044 = vmatprep.subr.mxu0 0.0
        %1045 = vmatpush1.xpose.msra.mxu0 %v1042
        %1046 = vmatprep.subr.mxu0 0.0
        %1047 = vmatpush1.xpose.msra.mxu0 0.0
        %1048 = vmatprep.subr.mxu0 0.0
        %1049 = vmatpush1.xpose.msra.mxu0 0.0
        %1050 = vmatprep.subr.mxu0 0.0
        %1051 = vmatpush1.xpose.msra.mxu0 0.0
        %1052 = vmatprep.subr.mxu0 0.0
        %1053 = vmatpush1.xpose.msra.mxu0 0.0
        %1054 = vmatprep.subr.mxu0 0.0
        %1055 = vmatpush1.xpose.msra.mxu0 0.0
        %1056 = vmatprep.subr.mxu0 0.0
        %1057 = vmatpush1.xpose.msra.mxu0 0.0
        %1058 = vmatprep.subr.mxu0 0.0
        %1059 = vmatpush1.xpose.msra.mxu0 0.0
        %1060 = vmatprep.subr.mxu0 0.0
        %1061 = vmatpush1.xpose.msra.mxu0 0.0
        %1062 = vmatprep.subr.mxu0 0.0
        %1063 = vmatpush1.xpose.msra.mxu0 0.0
        %1064 = vmatprep.subr.mxu0 0.0
        %1065 = vmatpush1.xpose.msra.mxu0 0.0
        %1066 = vmatprep.subr.mxu0 0.0
        %1067 = vmatpush1.xpose.msra.mxu0 0.0
        %1068 = vmatprep.subr.mxu0 0.0
        %1069 = vmatpush1.xpose.msra.mxu0 0.0
        %1070 = vmatprep.subr.mxu0 0.0
        %1071 = vmatpush1.xpose.msra.mxu0 0.0
        %1072 = vmatprep.subr.mxu0 0.0
        %1073 = vmatpush1.xpose.msra.mxu0 0.0
        %1074 = vmatprep.subr.mxu0 0.0
        %1075 = vmatpush1.xpose.msra.mxu0 0.0
        %1076 = vmatprep.subr.mxu0 0.0
        %1077 = vmatpush1.xpose.msra.mxu0 0.0
        %1078 = vmatprep.subr.mxu0 0.0
        %1079 = vmatpush1.xpose.msra.mxu0 0.0
        %1080 = vmatprep.subr.mxu0 0.0
        %1081 = vmatpush1.xpose.msra.mxu0 0.0
        %1082 = vmatprep.subr.mxu0 0.0
        %1083 = vmatpush1.xpose.msra.mxu0 0.0
        %1084 = vmatprep.subr.mxu0 0.0
        %1085 = vmatpush1.xpose.msra.mxu0 0.0
        %1086 = vmatprep.subr.mxu0 0.0
        %1087 = vmatpush1.xpose.msra.mxu0 0.0
        %1088 = vmatprep.subr.mxu0 0.0
        %1089 = vmatpush1.xpose.msra.mxu0 0.0
        %1090 = vmatprep.subr.mxu0 0.0
        %1091 = vmatpush1.xpose.msra.mxu0 0.0
        %1092 = vmatprep.subr.mxu0 0.0
        %1093 = vmatpush1.xpose.msra.mxu0 0.0
        %1094 = vmatprep.subr.mxu0 0.0
        %1095 = vmatpush1.xpose.msra.mxu0 0.0
        %1096 = vmatprep.subr.mxu0 0.0
        %1097 = vmatpush1.xpose.msra.mxu0 0.0
        %1098 = vmatprep.subr.mxu0 0.0
        %1099 = vmatpush1.xpose.msra.mxu0 0.0
        %1100 = vmatprep.subr.mxu0 0.0
        %1101 = vmatpush1.xpose.msra.mxu0 0.0
        %1102 = vmatprep.subr.mxu0 0.0
        %1103 = vmatpush1.xpose.msra.mxu0 0.0
        %1104 = vmatprep.subr.mxu0 0.0
        %1105 = vmatpush1.xpose.msra.mxu0 0.0
        %1106 = vmatprep.subr.mxu0 0.0
        %1107 = vmatpush1.xpose.msra.mxu0 0.0
        %1108 = vmatprep.mubr.f32.mxu0 0.0
        %1109 = vmatmul.mubr.f32.gmra.mrb[0].mxu0 %v1039
        %v1110 = vpop.f32.mrb[0].mxu0
        %v1111 = vadd.f32 0.0, %v1110
        %v1112 = vpop.f32.mrb[0].mxu0
        %1113 = vdwg.mxu0
        %vm1114 = vcmask 64512
        %v1115 = vsel %vm1114, %v1111, -inf
        %1116 = vmax.xlane.f32.xlu0 %v1115
        %v1117 = vpop.xlane.xlu0 %1116
        %v1118 = vsub.f32 %v1111, %v1117
        %v1119 = vmul.f32 %v1118, 1.442695
        %v1120 = vpow.pop %v1119
        %v1121 = vsel %vm1114, %v1120, 0.0
        %1122 = vadd.xlane.f32.xlu0 %v1121
        %v1123 = vpop.xlane.xlu0 %1122
        %v1124 = vrcp.pop %v1123
        %v1125 = vmul.f32 %v1120, %v1124
        %v1127 = vsel %vm1114, %v1125, 0
        %1129 = vmatprep.subr.mxu0 0.0
        %1130 = vmatpush1.msra.mxu0 %v1018
        %1131 = vmatprep.subr.mxu0 0.0
        %1132 = vmatpush1.msra.mxu0 0.0
        %1133 = vmatprep.subr.mxu0 0.0
        %1134 = vmatpush1.msra.mxu0 0.0
        %1135 = vmatprep.subr.mxu0 0.0
        %1136 = vmatpush1.msra.mxu0 0.0
        %1137 = vmatprep.subr.mxu0 0.0
        %1138 = vmatpush1.msra.mxu0 0.0
        %1139 = vmatprep.subr.mxu0 0.0
        %1140 = vmatpush1.msra.mxu0 0.0
        %1141 = vmatprep.subr.mxu0 0.0
        %1142 = vmatpush1.msra.mxu0 0.0
        %1143 = vmatprep.subr.mxu0 0.0
        %1144 = vmatpush1.msra.mxu0 0.0
        %1145 = vmatprep.subr.mxu0 0.0
        %1146 = vmatpush1.msra.mxu0 0.0
        %1147 = vmatprep.subr.mxu0 0.0
        %1148 = vmatpush1.msra.mxu0 0.0
        %1149 = vmatprep.subr.mxu0 0.0
        %1150 = vmatpush1.msra.mxu0 0.0
        %1151 = vmatprep.subr.mxu0 0.0
        %1152 = vmatpush1.msra.mxu0 0.0
        %1153 = vmatprep.subr.mxu0 0.0
        %1154 = vmatpush1.msra.mxu0 0.0
        %1155 = vmatprep.subr.mxu0 0.0
        %1156 = vmatpush1.msra.mxu0 0.0
        %1157 = vmatprep.subr.mxu0 0.0
        %1158 = vmatpush1.msra.mxu0 0.0
        %1159 = vmatprep.subr.mxu0 0.0
        %1160 = vmatpush1.msra.mxu0 0.0
        %1161 = vmatprep.subr.mxu0 0.0
        %1162 = vmatpush1.msra.mxu0 0.0
        %1163 = vmatprep.subr.mxu0 0.0
        %1164 = vmatpush1.msra.mxu0 0.0
        %1165 = vmatprep.subr.mxu0 0.0
        %1166 = vmatpush1.msra.mxu0 0.0
        %1167 = vmatprep.subr.mxu0 0.0
        %1168 = vmatpush1.msra.mxu0 0.0
        %1169 = vmatprep.subr.mxu0 0.0
        %1170 = vmatpush1.msra.mxu0 0.0
        %1171 = vmatprep.subr.mxu0 0.0
        %1172 = vmatpush1.msra.mxu0 0.0
        %1173 = vmatprep.subr.mxu0 0.0
        %1174 = vmatpush1.msra.mxu0 0.0
        %1175 = vmatprep.subr.mxu0 0.0
        %1176 = vmatpush1.msra.mxu0 0.0
        %1177 = vmatprep.subr.mxu0 0.0
        %1178 = vmatpush1.msra.mxu0 0.0
        %1179 = vmatprep.subr.mxu0 0.0
        %1180 = vmatpush1.msra.mxu0 0.0
        %1181 = vmatprep.subr.mxu0 0.0
        %1182 = vmatpush1.msra.mxu0 0.0
        %1183 = vmatprep.subr.mxu0 0.0
        %1184 = vmatpush1.msra.mxu0 0.0
        %1185 = vmatprep.subr.mxu0 0.0
        %1186 = vmatpush1.msra.mxu0 0.0
        %1187 = vmatprep.subr.mxu0 0.0
        %1188 = vmatpush1.msra.mxu0 0.0
        %1189 = vmatprep.subr.mxu0 0.0
        %1190 = vmatpush1.msra.mxu0 0.0
        %1191 = vmatprep.subr.mxu0 0.0
        %1192 = vmatpush1.msra.mxu0 0.0
        %1193 = vmatprep.mubr.f32.mxu0 0.0
        %1194 = vmatmul.mubr.f32.gmra.mrb[0].mxu0 %v1127
        %v1195 = vpop.f32.mrb[0].mxu0
        %v1196 = vadd.f32 0.0, %v1195
        %v1197 = vpop.f32.mrb[0].mxu0
        %1198 = vdwg.mxu0
        %1199 = vrot.lane.b32.xlu0 %v840, 96
        %v1200 = vpop.permute.xlu0 %1199
        %1201 = vrot.lane.b32.xlu0 %v928, 96
        %v1202 = vpop.permute.xlu0 %1201
        %v1203 = vsel %vm1037, %v1200, 0
        %v1205 = vsel %vm1037, %v1202, 0
        %1207 = vmatprep.subr.mxu0 0.0
        %1208 = vmatpush1.xpose.msra.mxu0 %v1205
        %1209 = vmatprep.subr.mxu0 0.0
        %1210 = vmatpush1.xpose.msra.mxu0 0.0
        %1211 = vmatprep.subr.mxu0 0.0
        %1212 = vmatpush1.xpose.msra.mxu0 0.0
        %1213 = vmatprep.subr.mxu0 0.0
        %1214 = vmatpush1.xpose.msra.mxu0 0.0
        %1215 = vmatprep.subr.mxu0 0.0
        %1216 = vmatpush1.xpose.msra.mxu0 0.0
        %1217 = vmatprep.subr.mxu0 0.0
        %1218 = vmatpush1.xpose.msra.mxu0 0.0
        %1219 = vmatprep.subr.mxu0 0.0
        %1220 = vmatpush1.xpose.msra.mxu0 0.0
        %1221 = vmatprep.subr.mxu0 0.0
        %1222 = vmatpush1.xpose.msra.mxu0 0.0
        %1223 = vmatprep.subr.mxu0 0.0
        %1224 = vmatpush1.xpose.msra.mxu0 0.0
        %1225 = vmatprep.subr.mxu0 0.0
        %1226 = vmatpush1.xpose.msra.mxu0 0.0
        %1227 = vmatprep.subr.mxu0 0.0
        %1228 = vmatpush1.xpose.msra.mxu0 0.0
        %1229 = vmatprep.subr.mxu0 0.0
        %1230 = vmatpush1.xpose.msra.mxu0 0.0
        %1231 = vmatprep.subr.mxu0 0.0
        %1232 = vmatpush1.xpose.msra.mxu0 0.0
        %1233 = vmatprep.subr.mxu0 0.0
        %1234 = vmatpush1.xpose.msra.mxu0 0.0
        %1235 = vmatprep.subr.mxu0 0.0
        %1236 = vmatpush1.xpose.msra.mxu0 0.0
        %1237 = vmatprep.subr.mxu0 0.0
        %1238 = vmatpush1.xpose.msra.mxu0 0.0
        %1239 = vmatprep.subr.mxu0 0.0
        %1240 = vmatpush1.xpose.msra.mxu0 0.0
        %1241 = vmatprep.subr.mxu0 0.0
        %1242 = vmatpush1.xpose.msra.mxu0 0.0
        %1243 = vmatprep.subr.mxu0 0.0
        %1244 = vmatpush1.xpose.msra.mxu0 0.0
        %1245 = vmatprep.subr.mxu0 0.0
        %1246 = vmatpush1.xpose.msra.mxu0 0.0
        %1247 = vmatprep.subr.mxu0 0.0
        %1248 = vmatpush1.xpose.msra.mxu0 0.0
        %1249 = vmatprep.subr.mxu0 0.0
        %1250 = vmatpush1.xpose.msra.mxu0 0.0
        %1251 = vmatprep.subr.mxu0 0.0
        %1252 = vmatpush1.xpose.msra.mxu0 0.0
        %1253 = vmatprep.subr.mxu0 0.0
        %1254 = vmatpush1.xpose.msra.mxu0 0.0
        %1255 = vmatprep.subr.mxu0 0.0
        %1256 = vmatpush1.xpose.msra.mxu0 0.0
        %1257 = vmatprep.subr.mxu0 0.0
        %1258 = vmatpush1.xpose.msra.mxu0 0.0
        %1259 = vmatprep.subr.mxu0 0.0
        %1260 = vmatpush1.xpose.msra.mxu0 0.0
        %1261 = vmatprep.subr.mxu0 0.0
        %1262 = vmatpush1.xpose.msra.mxu0 0.0
        %1263 = vmatprep.subr.mxu0 0.0
        %1264 = vmatpush1.xpose.msra.mxu0 0.0
        %1265 = vmatprep.subr.mxu0 0.0
        %1266 = vmatpush1.xpose.msra.mxu0 0.0
        %1267 = vmatprep.subr.mxu0 0.0
        %1268 = vmatpush1.xpose.msra.mxu0 0.0
        %1269 = vmatprep.subr.mxu0 0.0
        %1270 = vmatpush1.xpose.msra.mxu0 0.0
        %1271 = vmatprep.mubr.f32.mxu0 0.0
        %1272 = vmatmul.mubr.f32.gmra.mrb[0].mxu0 %v1203
        %v1273 = vpop.f32.mrb[0].mxu0
        %v1274 = vadd.f32 0.0, %v1273
        %v1275 = vpop.f32.mrb[0].mxu0
        %1276 = vdwg.mxu0
        %v1277 = vsel %vm1114, %v1274, -inf
        %1278 = vmax.xlane.f32.xlu0 %v1277
        %v1279 = vpop.xlane.xlu0 %1278
        %v1280 = vsub.f32 %v1274, %v1279
        %v1281 = vmul.f32 %v1280, 1.442695
        %v1282 = vpow.pop %v1281
        %v1283 = vsel %vm1114, %v1282, 0.0
        %1284 = vadd.xlane.f32.xlu0 %v1283
        %v1285 = vpop.xlane.xlu0 %1284
        %v1286 = vrcp.pop %v1285
        %v1287 = vmul.f32 %v1282, %v1286
        %1289 = vrot.lane.b32.xlu0 %v1018, 96
        %v1290 = vpop.permute.xlu0 %1289
        %v1293 = vsel %vm1114, %v1287, 0
        %1295 = vmatprep.subr.mxu0 0.0
        %1296 = vmatpush1.msra.mxu0 %v1290
        %1297 = vmatprep.subr.mxu0 0.0
        %1298 = vmatpush1.msra.mxu0 0.0
        %1299 = vmatprep.subr.mxu0 0.0
        %1300 = vmatpush1.msra.mxu0 0.0
        %1301 = vmatprep.subr.mxu0 0.0
        %1302 = vmatpush1.msra.mxu0 0.0
        %1303 = vmatprep.subr.mxu0 0.0
        %1304 = vmatpush1.msra.mxu0 0.0
        %1305 = vmatprep.subr.mxu0 0.0
        %1306 = vmatpush1.msra.mxu0 0.0
        %1307 = vmatprep.subr.mxu0 0.0
        %1308 = vmatpush1.msra.mxu0 0.0
        %1309 = vmatprep.subr.mxu0 0.0
        %1310 = vmatpush1.msra.mxu0 0.0
        %1311 = vmatprep.subr.mxu0 0.0
        %1312 = vmatpush1.msra.mxu0 0.0
        %1313 = vmatprep.subr.mxu0 0.0
        %1314 = vmatpush1.msra.mxu0 0.0
        %1315 = vmatprep.subr.mxu0 0.0
        %1316 = vmatpush1.msra.mxu0 0.0
        %1317 = vmatprep.subr.mxu0 0.0
        %1318 = vmatpush1.msra.mxu0 0.0
        %1319 = vmatprep.subr.mxu0 0.0
        %1320 = vmatpush1.msra.mxu0 0.0
        %1321 = vmatprep.subr.mxu0 0.0
        %1322 = vmatpush1.msra.mxu0 0.0
        %1323 = vmatprep.subr.mxu0 0.0
        %1324 = vmatpush1.msra.mxu0 0.0
        %1325 = vmatprep.subr.mxu0 0.0
        %1326 = vmatpush1.msra.mxu0 0.0
        %1327 = vmatprep.subr.mxu0 0.0
        %1328 = vmatpush1.msra.mxu0 0.0
        %1329 = vmatprep.subr.mxu0 0.0
        %1330 = vmatpush1.msra.mxu0 0.0
        %1331 = vmatprep.subr.mxu0 0.0
        %1332 = vmatpush1.msra.mxu0 0.0
        %1333 = vmatprep.subr.mxu0 0.0
        %1334 = vmatpush1.msra.mxu0 0.0
        %1335 = vmatprep.subr.mxu0 0.0
        %1336 = vmatpush1.msra.mxu0 0.0
        %1337 = vmatprep.subr.mxu0 0.0
        %1338 = vmatpush1.msra.mxu0 0.0
        %1339 = vmatprep.subr.mxu0 0.0
        %1340 = vmatpush1.msra.mxu0 0.0
        %1341 = vmatprep.subr.mxu0 0.0
        %1342 = vmatpush1.msra.mxu0 0.0
        %1343 = vmatprep.subr.mxu0 0.0
        %1344 = vmatpush1.msra.mxu0 0.0
        %1345 = vmatprep.subr.mxu0 0.0
        %1346 = vmatpush1.msra.mxu0 0.0
        %1347 = vmatprep.subr.mxu0 0.0
        %1348 = vmatpush1.msra.mxu0 0.0
        %1349 = vmatprep.subr.mxu0 0.0
        %1350 = vmatpush1.msra.mxu0 0.0
        %1351 = vmatprep.subr.mxu0 0.0
        %1352 = vmatpush1.msra.mxu0 0.0
        %1353 = vmatprep.subr.mxu0 0.0
        %1354 = vmatpush1.msra.mxu0 0.0
        %1355 = vmatprep.subr.mxu0 0.0
        %1356 = vmatpush1.msra.mxu0 0.0
        %1357 = vmatprep.subr.mxu0 0.0
        %1358 = vmatpush1.msra.mxu0 0.0
        %1359 = vmatprep.mubr.f32.mxu0 0.0
        %1360 = vmatmul.mubr.f32.gmra.mrb[0].mxu0 %v1293
        %v1361 = vpop.f32.mrb[0].mxu0
        %v1362 = vadd.f32 0.0, %v1361
        %v1363 = vpop.f32.mrb[0].mxu0
        %1364 = vdwg.mxu0
        %v1366 = vsel %vm1037, %v1362, 0
        %1368 = vmatprep.subr.mxu0 0.0
        %1369 = vmatpush1.msra.mxu0 %v1025
        %1370 = vmatprep.subr.mxu0 0.0
        %1371 = vmatpush1.msra.mxu0 %v1026
        %1372 = vmatprep.subr.mxu0 0.0
        %1373 = vmatpush1.msra.mxu0 %v1027
        %1374 = vmatprep.subr.mxu0 0.0
        %1375 = vmatpush1.msra.mxu0 %v1028
        %1376 = vmatprep.subr.mxu0 0.0
        %1377 = vmatpush1.msra.mxu0 0.0
        %1378 = vmatprep.subr.mxu0 0.0
        %1379 = vmatpush1.msra.mxu0 0.0
        %1380 = vmatprep.subr.mxu0 0.0
        %1381 = vmatpush1.msra.mxu0 0.0
        %1382 = vmatprep.subr.mxu0 0.0
        %1383 = vmatpush1.msra.mxu0 0.0
        %1384 = vmatprep.subr.mxu0 0.0
        %1385 = vmatpush1.msra.mxu0 0.0
        %1386 = vmatprep.subr.mxu0 0.0
        %1387 = vmatpush1.msra.mxu0 0.0
        %1388 = vmatprep.subr.mxu0 0.0
        %1389 = vmatpush1.msra.mxu0 0.0
        %1390 = vmatprep.subr.mxu0 0.0
        %1391 = vmatpush1.msra.mxu0 0.0
        %1392 = vmatprep.subr.mxu0 0.0
        %1393 = vmatpush1.msra.mxu0 0.0
        %1394 = vmatprep.subr.mxu0 0.0
        %1395 = vmatpush1.msra.mxu0 0.0
        %1396 = vmatprep.subr.mxu0 0.0
        %1397 = vmatpush1.msra.mxu0 0.0
        %1398 = vmatprep.subr.mxu0 0.0
        %1399 = vmatpush1.msra.mxu0 0.0
        %1400 = vmatprep.subr.mxu0 0.0
        %1401 = vmatpush1.msra.mxu0 0.0
        %1402 = vmatprep.subr.mxu0 0.0
        %1403 = vmatpush1.msra.mxu0 0.0
        %1404 = vmatprep.subr.mxu0 0.0
        %1405 = vmatpush1.msra.mxu0 0.0
        %1406 = vmatprep.subr.mxu0 0.0
        %1407 = vmatpush1.msra.mxu0 0.0
        %1408 = vmatprep.subr.mxu0 0.0
        %1409 = vmatpush1.msra.mxu0 0.0
        %1410 = vmatprep.subr.mxu0 0.0
        %1411 = vmatpush1.msra.mxu0 0.0
        %1412 = vmatprep.subr.mxu0 0.0
        %1413 = vmatpush1.msra.mxu0 0.0
        %1414 = vmatprep.subr.mxu0 0.0
        %1415 = vmatpush1.msra.mxu0 0.0
        %1416 = vmatprep.subr.mxu0 0.0
        %1417 = vmatpush1.msra.mxu0 0.0
        %1418 = vmatprep.subr.mxu0 0.0
        %1419 = vmatpush1.msra.mxu0 0.0
        %1420 = vmatprep.subr.mxu0 0.0
        %1421 = vmatpush1.msra.mxu0 0.0
        %1422 = vmatprep.subr.mxu0 0.0
        %1423 = vmatpush1.msra.mxu0 0.0
        %1424 = vmatprep.subr.mxu0 0.0
        %1425 = vmatpush1.msra.mxu0 0.0
        %1426 = vmatprep.subr.mxu0 0.0
        %1427 = vmatpush1.msra.mxu0 0.0
        %1428 = vmatprep.subr.mxu0 0.0
        %1429 = vmatpush1.msra.mxu0 0.0
        %1430 = vmatprep.subr.mxu0 0.0
        %1431 = vmatpush1.msra.mxu0 0.0
        %1432 = vmatprep.mubr.f32.mxu0 0.0
        %1433 = vmatmul.mubr.f32.gmra.mrb[0].mxu0 %v1366
        %v1434 = vpop.f32.mrb[0].mxu0
        %v1435 = vadd.f32 0.0, %v1434
        %v1436 = vpop.f32.mrb[0].mxu0
        %1437 = vdwg.mxu0
        %v1439 = vsel %vm1037, %v1196, 0
        %1441 = vmatprep.subr.mxu0 0.0
        %1442 = vmatpush1.msra.mxu0 %v1021
        %1443 = vmatprep.subr.mxu0 0.0
        %1444 = vmatpush1.msra.mxu0 %v1022
        %1445 = vmatprep.subr.mxu0 0.0
        %1446 = vmatpush1.msra.mxu0 %v1023
        %1447 = vmatprep.subr.mxu0 0.0
        %1448 = vmatpush1.msra.mxu0 %v1024
        %1449 = vmatprep.subr.mxu0 0.0
        %1450 = vmatpush1.msra.mxu0 0.0
        %1451 = vmatprep.subr.mxu0 0.0
        %1452 = vmatpush1.msra.mxu0 0.0
        %1453 = vmatprep.subr.mxu0 0.0
        %1454 = vmatpush1.msra.mxu0 0.0
        %1455 = vmatprep.subr.mxu0 0.0
        %1456 = vmatpush1.msra.mxu0 0.0
        %1457 = vmatprep.subr.mxu0 0.0
        %1458 = vmatpush1.msra.mxu0 0.0
        %1459 = vmatprep.subr.mxu0 0.0
        %1460 = vmatpush1.msra.mxu0 0.0
        %1461 = vmatprep.subr.mxu0 0.0
        %1462 = vmatpush1.msra.mxu0 0.0
        %1463 = vmatprep.subr.mxu0 0.0
        %1464 = vmatpush1.msra.mxu0 0.0
        %1465 = vmatprep.subr.mxu0 0.0
        %1466 = vmatpush1.msra.mxu0 0.0
        %1467 = vmatprep.subr.mxu0 0.0
        %1468 = vmatpush1.msra.mxu0 0.0
        %1469 = vmatprep.subr.mxu0 0.0
        %1470 = vmatpush1.msra.mxu0 0.0
        %1471 = vmatprep.subr.mxu0 0.0
        %1472 = vmatpush1.msra.mxu0 0.0
        %1473 = vmatprep.subr.mxu0 0.0
        %1474 = vmatpush1.msra.mxu0 0.0
        %1475 = vmatprep.subr.mxu0 0.0
        %1476 = vmatpush1.msra.mxu0 0.0
        %1477 = vmatprep.subr.mxu0 0.0
        %1478 = vmatpush1.msra.mxu0 0.0
        %1479 = vmatprep.subr.mxu0 0.0
        %1480 = vmatpush1.msra.mxu0 0.0
        %1481 = vmatprep.subr.mxu0 0.0
        %1482 = vmatpush1.msra.mxu0 0.0
        %1483 = vmatprep.subr.mxu0 0.0
        %1484 = vmatpush1.msra.mxu0 0.0
        %1485 = vmatprep.subr.mxu0 0.0
        %1486 = vmatpush1.msra.mxu0 0.0
        %1487 = vmatprep.subr.mxu0 0.0
        %1488 = vmatpush1.msra.mxu0 0.0
        %1489 = vmatprep.subr.mxu0 0.0
        %1490 = vmatpush1.msra.mxu0 0.0
        %1491 = vmatprep.subr.mxu0 0.0
        %1492 = vmatpush1.msra.mxu0 0.0
        %1493 = vmatprep.subr.mxu0 0.0
        %1494 = vmatpush1.msra.mxu0 0.0
        %1495 = vmatprep.subr.mxu0 0.0
        %1496 = vmatpush1.msra.mxu0 0.0
        %1497 = vmatprep.subr.mxu0 0.0
        %1498 = vmatpush1.msra.mxu0 0.0
        %1499 = vmatprep.subr.mxu0 0.0
        %1500 = vmatpush1.msra.mxu0 0.0
        %1501 = vmatprep.subr.mxu0 0.0
        %1502 = vmatpush1.msra.mxu0 0.0
        %1503 = vmatprep.subr.mxu0 0.0
        %1504 = vmatpush1.msra.mxu0 0.0
        %1505 = vmatprep.mubr.f32.mxu0 0.0
        %1506 = vmatmul.mubr.f32.gmra.mrb[0].mxu0 %v1439
        %v1507 = vpop.f32.mrb[0].mxu0
        %v1508 = vadd.f32 %v1435, %v1507
        %v1509 = vpop.f32.mrb[0].mxu0
        %1510 = vdwg.mxu0
        %1511 = vrot.lane.b32.xlu0 %v840, 64
        %v1512 = vpop.permute.xlu0 %1511
        %1513 = vrot.lane.b32.xlu0 %v928, 64
        %v1514 = vpop.permute.xlu0 %1513
        %v1515 = vsel %vm1037, %v1512, 0
        %v1517 = vsel %vm1037, %v1514, 0
        %1519 = vmatprep.subr.mxu0 0.0
        %1520 = vmatpush1.xpose.msra.mxu0 %v1517
        %1521 = vmatprep.subr.mxu0 0.0
        %1522 = vmatpush1.xpose.msra.mxu0 0.0
        %1523 = vmatprep.subr.mxu0 0.0
        %1524 = vmatpush1.xpose.msra.mxu0 0.0
        %1525 = vmatprep.subr.mxu0 0.0
        %1526 = vmatpush1.xpose.msra.mxu0 0.0
        %1527 = vmatprep.subr.mxu0 0.0
        %1528 = vmatpush1.xpose.msra.mxu0 0.0
        %1529 = vmatprep.subr.mxu0 0.0
        %1530 = vmatpush1.xpose.msra.mxu0 0.0
        %1531 = vmatprep.subr.mxu0 0.0
        %1532 = vmatpush1.xpose.msra.mxu0 0.0
        %1533 = vmatprep.subr.mxu0 0.0
        %1534 = vmatpush1.xpose.msra.mxu0 0.0
        %1535 = vmatprep.subr.mxu0 0.0
        %1536 = vmatpush1.xpose.msra.mxu0 0.0
        %1537 = vmatprep.subr.mxu0 0.0
        %1538 = vmatpush1.xpose.msra.mxu0 0.0
        %1539 = vmatprep.subr.mxu0 0.0
        %1540 = vmatpush1.xpose.msra.mxu0 0.0
        %1541 = vmatprep.subr.mxu0 0.0
        %1542 = vmatpush1.xpose.msra.mxu0 0.0
        %1543 = vmatprep.subr.mxu0 0.0
        %1544 = vmatpush1.xpose.msra.mxu0 0.0
        %1545 = vmatprep.subr.mxu0 0.0
        %1546 = vmatpush1.xpose.msra.mxu0 0.0
        %1547 = vmatprep.subr.mxu0 0.0
        %1548 = vmatpush1.xpose.msra.mxu0 0.0
        %1549 = vmatprep.subr.mxu0 0.0
        %1550 = vmatpush1.xpose.msra.mxu0 0.0
        %1551 = vmatprep.subr.mxu0 0.0
        %1552 = vmatpush1.xpose.msra.mxu0 0.0
        %1553 = vmatprep.subr.mxu0 0.0
        %1554 = vmatpush1.xpose.msra.mxu0 0.0
        %1555 = vmatprep.subr.mxu0 0.0
        %1556 = vmatpush1.xpose.msra.mxu0 0.0
        %1557 = vmatprep.subr.mxu0 0.0
        %1558 = vmatpush1.xpose.msra.mxu0 0.0
        %1559 = vmatprep.subr.mxu0 0.0
        %1560 = vmatpush1.xpose.msra.mxu0 0.0
        %1561 = vmatprep.subr.mxu0 0.0
        %1562 = vmatpush1.xpose.msra.mxu0 0.0
        %1563 = vmatprep.subr.mxu0 0.0
        %1564 = vmatpush1.xpose.msra.mxu0 0.0
        %1565 = vmatprep.subr.mxu0 0.0
        %1566 = vmatpush1.xpose.msra.mxu0 0.0
        %1567 = vmatprep.subr.mxu0 0.0
        %1568 = vmatpush1.xpose.msra.mxu0 0.0
        %1569 = vmatprep.subr.mxu0 0.0
        %1570 = vmatpush1.xpose.msra.mxu0 0.0
        %1571 = vmatprep.subr.mxu0 0.0
        %1572 = vmatpush1.xpose.msra.mxu0 0.0
        %1573 = vmatprep.subr.mxu0 0.0
        %1574 = vmatpush1.xpose.msra.mxu0 0.0
        %1575 = vmatprep.subr.mxu0 0.0
        %1576 = vmatpush1.xpose.msra.mxu0 0.0
        %1577 = vmatprep.subr.mxu0 0.0
        %1578 = vmatpush1.xpose.msra.mxu0 0.0
        %1579 = vmatprep.subr.mxu0 0.0
        %1580 = vmatpush1.xpose.msra.mxu0 0.0
        %1581 = vmatprep.subr.mxu0 0.0
        %1582 = vmatpush1.xpose.msra.mxu0 0.0
        %1583 = vmatprep.mubr.f32.mxu0 0.0
        %1584 = vmatmul.mubr.f32.gmra.mrb[0].mxu0 %v1515
        %v1585 = vpop.f32.mrb[0].mxu0
        %v1586 = vadd.f32 0.0, %v1585
        %v1587 = vpop.f32.mrb[0].mxu0
        %1588 = vdwg.mxu0
        %v1589 = vsel %vm1114, %v1586, -inf
        %1590 = vmax.xlane.f32.xlu0 %v1589
        %v1591 = vpop.xlane.xlu0 %1590
        %v1592 = vsub.f32 %v1586, %v1591
        %v1593 = vmul.f32 %v1592, 1.442695
        %v1594 = vpow.pop %v1593
        %v1595 = vsel %vm1114, %v1594, 0.0
        %1596 = vadd.xlane.f32.xlu0 %v1595
        %v1597 = vpop.xlane.xlu0 %1596
        %v1598 = vrcp.pop %v1597
        %v1599 = vmul.f32 %v1594, %v1598
        %1600 = vrot.lane.b32.xlu0 %v1018, 64
        %v1601 = vpop.permute.xlu0 %1600
        %v1604 = vsel %vm1114, %v1599, 0
        %1606 = vmatprep.subr.mxu0 0.0
        %1607 = vmatpush1.msra.mxu0 %v1601
        %1608 = vmatprep.subr.mxu0 0.0
        %1609 = vmatpush1.msra.mxu0 0.0
        %1610 = vmatprep.subr.mxu0 0.0
        %1611 = vmatpush1.msra.mxu0 0.0
        %1612 = vmatprep.subr.mxu0 0.0
        %1613 = vmatpush1.msra.mxu0 0.0
        %1614 = vmatprep.subr.mxu0 0.0
        %1615 = vmatpush1.msra.mxu0 0.0
        %1616 = vmatprep.subr.mxu0 0.0
        %1617 = vmatpush1.msra.mxu0 0.0
        %1618 = vmatprep.subr.mxu0 0.0
        %1619 = vmatpush1.msra.mxu0 0.0
        %1620 = vmatprep.subr.mxu0 0.0
        %1621 = vmatpush1.msra.mxu0 0.0
        %1622 = vmatprep.subr.mxu0 0.0
        %1623 = vmatpush1.msra.mxu0 0.0
        %1624 = vmatprep.subr.mxu0 0.0
        %1625 = vmatpush1.msra.mxu0 0.0
        %1626 = vmatprep.subr.mxu0 0.0
        %1627 = vmatpush1.msra.mxu0 0.0
        %1628 = vmatprep.subr.mxu0 0.0
        %1629 = vmatpush1.msra.mxu0 0.0
        %1630 = vmatprep.subr.mxu0 0.0
        %1631 = vmatpush1.msra.mxu0 0.0
        %1632 = vmatprep.subr.mxu0 0.0
        %1633 = vmatpush1.msra.mxu0 0.0
        %1634 = vmatprep.subr.mxu0 0.0
        %1635 = vmatpush1.msra.mxu0 0.0
        %1636 = vmatprep.subr.mxu0 0.0
        %1637 = vmatpush1.msra.mxu0 0.0
        %1638 = vmatprep.subr.mxu0 0.0
        %1639 = vmatpush1.msra.mxu0 0.0
        %1640 = vmatprep.subr.mxu0 0.0
        %1641 = vmatpush1.msra.mxu0 0.0
        %1642 = vmatprep.subr.mxu0 0.0
        %1643 = vmatpush1.msra.mxu0 0.0
        %1644 = vmatprep.subr.mxu0 0.0
        %1645 = vmatpush1.msra.mxu0 0.0
        %1646 = vmatprep.subr.mxu0 0.0
        %1647 = vmatpush1.msra.mxu0 0.0
        %1648 = vmatprep.subr.mxu0 0.0
        %1649 = vmatpush1.msra.mxu0 0.0
        %1650 = vmatprep.subr.mxu0 0.0
        %1651 = vmatpush1.msra.mxu0 0.0
        %1652 = vmatprep.subr.mxu0 0.0
        %1653 = vmatpush1.msra.mxu0 0.0
        %1654 = vmatprep.subr.mxu0 0.0
        %1655 = vmatpush1.msra.mxu0 0.0
        %1656 = vmatprep.subr.mxu0 0.0
        %1657 = vmatpush1.msra.mxu0 0.0
        %1658 = vmatprep.subr.mxu0 0.0
        %1659 = vmatpush1.msra.mxu0 0.0
        %1660 = vmatprep.subr.mxu0 0.0
        %1661 = vmatpush1.msra.mxu0 0.0
        %1662 = vmatprep.subr.mxu0 0.0
        %1663 = vmatpush1.msra.mxu0 0.0
        %1664 = vmatprep.subr.mxu0 0.0
        %1665 = vmatpush1.msra.mxu0 0.0
        %1666 = vmatprep.subr.mxu0 0.0
        %1667 = vmatpush1.msra.mxu0 0.0
        %1668 = vmatprep.subr.mxu0 0.0
        %1669 = vmatpush1.msra.mxu0 0.0
        %1670 = vmatprep.mubr.f32.mxu0 0.0
        %1671 = vmatmul.mubr.f32.gmra.mrb[0].mxu0 %v1604
        %v1672 = vpop.f32.mrb[0].mxu0
        %v1673 = vadd.f32 0.0, %v1672
        %v1674 = vpop.f32.mrb[0].mxu0
        %1675 = vdwg.mxu0
        %v1677 = vsel %vm1037, %v1673, 0
        %1679 = vmatprep.subr.mxu0 0.0
        %1680 = vmatpush1.msra.mxu0 %v1029
        %1681 = vmatprep.subr.mxu0 0.0
        %1682 = vmatpush1.msra.mxu0 %v1030
        %1683 = vmatprep.subr.mxu0 0.0
        %1684 = vmatpush1.msra.mxu0 %v1031
        %1685 = vmatprep.subr.mxu0 0.0
        %1686 = vmatpush1.msra.mxu0 %v1032
        %1687 = vmatprep.subr.mxu0 0.0
        %1688 = vmatpush1.msra.mxu0 0.0
        %1689 = vmatprep.subr.mxu0 0.0
        %1690 = vmatpush1.msra.mxu0 0.0
        %1691 = vmatprep.subr.mxu0 0.0
        %1692 = vmatpush1.msra.mxu0 0.0
        %1693 = vmatprep.subr.mxu0 0.0
        %1694 = vmatpush1.msra.mxu0 0.0
        %1695 = vmatprep.subr.mxu0 0.0
        %1696 = vmatpush1.msra.mxu0 0.0
        %1697 = vmatprep.subr.mxu0 0.0
        %1698 = vmatpush1.msra.mxu0 0.0
        %1699 = vmatprep.subr.mxu0 0.0
        %1700 = vmatpush1.msra.mxu0 0.0
        %1701 = vmatprep.subr.mxu0 0.0
        %1702 = vmatpush1.msra.mxu0 0.0
        %1703 = vmatprep.subr.mxu0 0.0
        %1704 = vmatpush1.msra.mxu0 0.0
        %1705 = vmatprep.subr.mxu0 0.0
        %1706 = vmatpush1.msra.mxu0 0.0
        %1707 = vmatprep.subr.mxu0 0.0
        %1708 = vmatpush1.msra.mxu0 0.0
        %1709 = vmatprep.subr.mxu0 0.0
        %1710 = vmatpush1.msra.mxu0 0.0
        %1711 = vmatprep.subr.mxu0 0.0
        %1712 = vmatpush1.msra.mxu0 0.0
        %1713 = vmatprep.subr.mxu0 0.0
        %1714 = vmatpush1.msra.mxu0 0.0
        %1715 = vmatprep.subr.mxu0 0.0
        %1716 = vmatpush1.msra.mxu0 0.0
        %1717 = vmatprep.subr.mxu0 0.0
        %1718 = vmatpush1.msra.mxu0 0.0
        %1719 = vmatprep.subr.mxu0 0.0
        %1720 = vmatpush1.msra.mxu0 0.0
        %1721 = vmatprep.subr.mxu0 0.0
        %1722 = vmatpush1.msra.mxu0 0.0
        %1723 = vmatprep.subr.mxu0 0.0
        %1724 = vmatpush1.msra.mxu0 0.0
        %1725 = vmatprep.subr.mxu0 0.0
        %1726 = vmatpush1.msra.mxu0 0.0
        %1727 = vmatprep.subr.mxu0 0.0
        %1728 = vmatpush1.msra.mxu0 0.0
        %1729 = vmatprep.subr.mxu0 0.0
        %1730 = vmatpush1.msra.mxu0 0.0
        %1731 = vmatprep.subr.mxu0 0.0
        %1732 = vmatpush1.msra.mxu0 0.0
        %1733 = vmatprep.subr.mxu0 0.0
        %1734 = vmatpush1.msra.mxu0 0.0
        %1735 = vmatprep.subr.mxu0 0.0
        %1736 = vmatpush1.msra.mxu0 0.0
        %1737 = vmatprep.subr.mxu0 0.0
        %1738 = vmatpush1.msra.mxu0 0.0
        %1739 = vmatprep.subr.mxu0 0.0
        %1740 = vmatpush1.msra.mxu0 0.0
        %1741 = vmatprep.subr.mxu0 0.0
        %1742 = vmatpush1.msra.mxu0 0.0
        %1743 = vmatprep.mubr.f32.mxu0 0.0
        %1744 = vmatmul.mubr.f32.gmra.mrb[0].mxu0 %v1677
        %v1745 = vpop.f32.mrb[0].mxu0
        %v1746 = vadd.f32 0.0, %v1745
        %v1747 = vpop.f32.mrb[0].mxu0
        %1748 = vdwg.mxu0
        %v1749 = vadd.f32 %v1508, %v1746
        %1750 = vrot.lane.b32.xlu0 %v840, 32
        %v1751 = vpop.permute.xlu0 %1750
        %1752 = vrot.lane.b32.xlu0 %v928, 32
        %v1753 = vpop.permute.xlu0 %1752
        %v1754 = vsel %vm1037, %v1751, 0
        %v1756 = vsel %vm1037, %v1753, 0
        %1758 = vmatprep.subr.mxu0 0.0
        %1759 = vmatpush1.xpose.msra.mxu0 %v1756
        %1760 = vmatprep.subr.mxu0 0.0
        %1761 = vmatpush1.xpose.msra.mxu0 0.0
        %1762 = vmatprep.subr.mxu0 0.0
        %1763 = vmatpush1.xpose.msra.mxu0 0.0
        %1764 = vmatprep.subr.mxu0 0.0
        %1765 = vmatpush1.xpose.msra.mxu0 0.0
        %1766 = vmatprep.subr.mxu0 0.0
        %1767 = vmatpush1.xpose.msra.mxu0 0.0
        %1768 = vmatprep.subr.mxu0 0.0
        %1769 = vmatpush1.xpose.msra.mxu0 0.0
        %1770 = vmatprep.subr.mxu0 0.0
        %1771 = vmatpush1.xpose.msra.mxu0 0.0
        %1772 = vmatprep.subr.mxu0 0.0
        %1773 = vmatpush1.xpose.msra.mxu0 0.0
        %1774 = vmatprep.subr.mxu0 0.0
        %1775 = vmatpush1.xpose.msra.mxu0 0.0
        %1776 = vmatprep.subr.mxu0 0.0
        %1777 = vmatpush1.xpose.msra.mxu0 0.0
        %1778 = vmatprep.subr.mxu0 0.0
        %1779 = vmatpush1.xpose.msra.mxu0 0.0
        %1780 = vmatprep.subr.mxu0 0.0
        %1781 = vmatpush1.xpose.msra.mxu0 0.0
        %1782 = vmatprep.subr.mxu0 0.0
        %1783 = vmatpush1.xpose.msra.mxu0 0.0
        %1784 = vmatprep.subr.mxu0 0.0
        %1785 = vmatpush1.xpose.msra.mxu0 0.0
        %1786 = vmatprep.subr.mxu0 0.0
        %1787 = vmatpush1.xpose.msra.mxu0 0.0
        %1788 = vmatprep.subr.mxu0 0.0
        %1789 = vmatpush1.xpose.msra.mxu0 0.0
        %1790 = vmatprep.subr.mxu0 0.0
        %1791 = vmatpush1.xpose.msra.mxu0 0.0
        %1792 = vmatprep.subr.mxu0 0.0
        %1793 = vmatpush1.xpose.msra.mxu0 0.0
        %1794 = vmatprep.subr.mxu0 0.0
        %1795 = vmatpush1.xpose.msra.mxu0 0.0
        %1796 = vmatprep.subr.mxu0 0.0
        %1797 = vmatpush1.xpose.msra.mxu0 0.0
        %1798 = vmatprep.subr.mxu0 0.0
        %1799 = vmatpush1.xpose.msra.mxu0 0.0
        %1800 = vmatprep.subr.mxu0 0.0
        %1801 = vmatpush1.xpose.msra.mxu0 0.0
        %1802 = vmatprep.subr.mxu0 0.0
        %1803 = vmatpush1.xpose.msra.mxu0 0.0
        %1804 = vmatprep.subr.mxu0 0.0
        %1805 = vmatpush1.xpose.msra.mxu0 0.0
        %1806 = vmatprep.subr.mxu0 0.0
        %1807 = vmatpush1.xpose.msra.mxu0 0.0
        %1808 = vmatprep.subr.mxu0 0.0
        %1809 = vmatpush1.xpose.msra.mxu0 0.0
        %1810 = vmatprep.subr.mxu0 0.0
        %1811 = vmatpush1.xpose.msra.mxu0 0.0
        %1812 = vmatprep.subr.mxu0 0.0
        %1813 = vmatpush1.xpose.msra.mxu0 0.0
        %1814 = vmatprep.subr.mxu0 0.0
        %1815 = vmatpush1.xpose.msra.mxu0 0.0
        %1816 = vmatprep.subr.mxu0 0.0
        %1817 = vmatpush1.xpose.msra.mxu0 0.0
        %1818 = vmatprep.subr.mxu0 0.0
        %1819 = vmatpush1.xpose.msra.mxu0 0.0
        %1820 = vmatprep.subr.mxu0 0.0
        %1821 = vmatpush1.xpose.msra.mxu0 0.0
        %1822 = vmatprep.mubr.f32.mxu0 0.0
        %1823 = vmatmul.mubr.f32.gmra.mrb[0].mxu0 %v1754
        %v1824 = vpop.f32.mrb[0].mxu0
        %v1825 = vadd.f32 0.0, %v1824
        %v1826 = vpop.f32.mrb[0].mxu0
        %1827 = vdwg.mxu0
        %v1828 = vsel %vm1114, %v1825, -inf
        %1829 = vmax.xlane.f32.xlu0 %v1828
        %v1830 = vpop.xlane.xlu0 %1829
        %v1831 = vsub.f32 %v1825, %v1830
        %v1832 = vmul.f32 %v1831, 1.442695
        %v1833 = vpow.pop %v1832
        %v1834 = vsel %vm1114, %v1833, 0.0
        %1835 = vadd.xlane.f32.xlu0 %v1834
        %v1836 = vpop.xlane.xlu0 %1835
        %v1837 = vrcp.pop %v1836
        %v1838 = vmul.f32 %v1833, %v1837
        %1839 = vrot.lane.b32.xlu0 %v1018, 32
        %v1840 = vpop.permute.xlu0 %1839
        %v1843 = vsel %vm1114, %v1838, 0
        %1845 = vmatprep.subr.mxu0 0.0
        %1846 = vmatpush1.msra.mxu0 %v1840
        %1847 = vmatprep.subr.mxu0 0.0
        %1848 = vmatpush1.msra.mxu0 0.0
        %1849 = vmatprep.subr.mxu0 0.0
        %1850 = vmatpush1.msra.mxu0 0.0
        %1851 = vmatprep.subr.mxu0 0.0
        %1852 = vmatpush1.msra.mxu0 0.0
        %1853 = vmatprep.subr.mxu0 0.0
        %1854 = vmatpush1.msra.mxu0 0.0
        %1855 = vmatprep.subr.mxu0 0.0
        %1856 = vmatpush1.msra.mxu0 0.0
        %1857 = vmatprep.subr.mxu0 0.0
        %1858 = vmatpush1.msra.mxu0 0.0
        %1859 = vmatprep.subr.mxu0 0.0
        %1860 = vmatpush1.msra.mxu0 0.0
        %1861 = vmatprep.subr.mxu0 0.0
        %1862 = vmatpush1.msra.mxu0 0.0
        %1863 = vmatprep.subr.mxu0 0.0
        %1864 = vmatpush1.msra.mxu0 0.0
        %1865 = vmatprep.subr.mxu0 0.0
        %1866 = vmatpush1.msra.mxu0 0.0
        %1867 = vmatprep.subr.mxu0 0.0
        %1868 = vmatpush1.msra.mxu0 0.0
        %1869 = vmatprep.subr.mxu0 0.0
        %1870 = vmatpush1.msra.mxu0 0.0
        %1871 = vmatprep.subr.mxu0 0.0
        %1872 = vmatpush1.msra.mxu0 0.0
        %1873 = vmatprep.subr.mxu0 0.0
        %1874 = vmatpush1.msra.mxu0 0.0
        %1875 = vmatprep.subr.mxu0 0.0
        %1876 = vmatpush1.msra.mxu0 0.0
        %1877 = vmatprep.subr.mxu0 0.0
        %1878 = vmatpush1.msra.mxu0 0.0
        %1879 = vmatprep.subr.mxu0 0.0
        %1880 = vmatpush1.msra.mxu0 0.0
        %1881 = vmatprep.subr.mxu0 0.0
        %1882 = vmatpush1.msra.mxu0 0.0
        %1883 = vmatprep.subr.mxu0 0.0
        %1884 = vmatpush1.msra.mxu0 0.0
        %1885 = vmatprep.subr.mxu0 0.0
        %1886 = vmatpush1.msra.mxu0 0.0
        %1887 = vmatprep.subr.mxu0 0.0
        %1888 = vmatpush1.msra.mxu0 0.0
        %1889 = vmatprep.subr.mxu0 0.0
        %1890 = vmatpush1.msra.mxu0 0.0
        %1891 = vmatprep.subr.mxu0 0.0
        %1892 = vmatpush1.msra.mxu0 0.0
        %1893 = vmatprep.subr.mxu0 0.0
        %1894 = vmatpush1.msra.mxu0 0.0
        %1895 = vmatprep.subr.mxu0 0.0
        %1896 = vmatpush1.msra.mxu0 0.0
        %1897 = vmatprep.subr.mxu0 0.0
        %1898 = vmatpush1.msra.mxu0 0.0
        %1899 = vmatprep.subr.mxu0 0.0
        %1900 = vmatpush1.msra.mxu0 0.0
        %1901 = vmatprep.subr.mxu0 0.0
        %1902 = vmatpush1.msra.mxu0 0.0
        %1903 = vmatprep.subr.mxu0 0.0
        %1904 = vmatpush1.msra.mxu0 0.0
        %1905 = vmatprep.subr.mxu0 0.0
        %1906 = vmatpush1.msra.mxu0 0.0
        %1907 = vmatprep.subr.mxu0 0.0
        %1908 = vmatpush1.msra.mxu0 0.0
        %1909 = vmatprep.mubr.f32.mxu0 0.0
        %1910 = vmatmul.mubr.f32.gmra.mrb[0].mxu0 %v1843
        %v1911 = vpop.f32.mrb[0].mxu0
        %v1912 = vadd.f32 0.0, %v1911
        %v1913 = vpop.f32.mrb[0].mxu0
        %1914 = vdwg.mxu0
        %v1916 = vsel %vm1037, %v1912, 0
        %1918 = vmatprep.subr.mxu0 0.0
        %1919 = vmatpush1.msra.mxu0 %v1033
        %1920 = vmatprep.subr.mxu0 0.0
        %1921 = vmatpush1.msra.mxu0 %v1034
        %1922 = vmatprep.subr.mxu0 0.0
        %1923 = vmatpush1.msra.mxu0 %v1035
        %1924 = vmatprep.subr.mxu0 0.0
        %1925 = vmatpush1.msra.mxu0 %v1036
        %1926 = vmatprep.subr.mxu0 0.0
        %1927 = vmatpush1.msra.mxu0 0.0
        %1928 = vmatprep.subr.mxu0 0.0
        %1929 = vmatpush1.msra.mxu0 0.0
        %1930 = vmatprep.subr.mxu0 0.0
        %1931 = vmatpush1.msra.mxu0 0.0
        %1932 = vmatprep.subr.mxu0 0.0
        %1933 = vmatpush1.msra.mxu0 0.0
        %1934 = vmatprep.subr.mxu0 0.0
        %1935 = vmatpush1.msra.mxu0 0.0
        %1936 = vmatprep.subr.mxu0 0.0
        %1937 = vmatpush1.msra.mxu0 0.0
        %1938 = vmatprep.subr.mxu0 0.0
        %1939 = vmatpush1.msra.mxu0 0.0
        %1940 = vmatprep.subr.mxu0 0.0
        %1941 = vmatpush1.msra.mxu0 0.0
        %1942 = vmatprep.subr.mxu0 0.0
        %1943 = vmatpush1.msra.mxu0 0.0
        %1944 = vmatprep.subr.mxu0 0.0
        %1945 = vmatpush1.msra.mxu0 0.0
        %1946 = vmatprep.subr.mxu0 0.0
        %1947 = vmatpush1.msra.mxu0 0.0
        %1948 = vmatprep.subr.mxu0 0.0
        %1949 = vmatpush1.msra.mxu0 0.0
        %1950 = vmatprep.subr.mxu0 0.0
        %1951 = vmatpush1.msra.mxu0 0.0
        %1952 = vmatprep.subr.mxu0 0.0
        %1953 = vmatpush1.msra.mxu0 0.0
        %1954 = vmatprep.subr.mxu0 0.0
        %1955 = vmatpush1.msra.mxu0 0.0
        %1956 = vmatprep.subr.mxu0 0.0
        %1957 = vmatpush1.msra.mxu0 0.0
        %1958 = vmatprep.subr.mxu0 0.0
        %1959 = vmatpush1.msra.mxu0 0.0
        %1960 = vmatprep.subr.mxu0 0.0
        %1961 = vmatpush1.msra.mxu0 0.0
        %1962 = vmatprep.subr.mxu0 0.0
        %1963 = vmatpush1.msra.mxu0 0.0
        %1964 = vmatprep.subr.mxu0 0.0
        %1965 = vmatpush1.msra.mxu0 0.0
        %1966 = vmatprep.subr.mxu0 0.0
        %1967 = vmatpush1.msra.mxu0 0.0
        %1968 = vmatprep.subr.mxu0 0.0
        %1969 = vmatpush1.msra.mxu0 0.0
        %1970 = vmatprep.subr.mxu0 0.0
        %1971 = vmatpush1.msra.mxu0 0.0
        %1972 = vmatprep.subr.mxu0 0.0
        %1973 = vmatpush1.msra.mxu0 0.0
        %1974 = vmatprep.subr.mxu0 0.0
        %1975 = vmatpush1.msra.mxu0 0.0
        %1976 = vmatprep.subr.mxu0 0.0
        %1977 = vmatpush1.msra.mxu0 0.0
        %1978 = vmatprep.subr.mxu0 0.0
        %1979 = vmatpush1.msra.mxu0 0.0
        %1980 = vmatprep.subr.mxu0 0.0
        %1981 = vmatpush1.msra.mxu0 0.0
        %1982 = vmatprep.mubr.f32.mxu0 0.0
        %1983 = vmatmul.mubr.f32.gmra.mrb[0].mxu0 %v1916
        %v1984 = vpop.f32.mrb[0].mxu0
        %v1985 = vadd.f32 0.0, %v1984
        %v1986 = vpop.f32.mrb[0].mxu0
        %1987 = vdwg.mxu0
        %v1988 = vadd.f32 %v1749, %v1985
        %v1989 = vlaneseq
        %v1990 = vshrl.u32 %v1989, 7
        %v1991 = vsub.s32 3, %v1990
        %v1992 = vrot.slane %v680, %v1991
        %v1993 = vadd.f32 %v1988, %v1992
        %v1994 = vadd.f32 %v679, %v1993
        %1995 = vadd.xlane.f32.xlu0 %v1994
        %v1996 = vpop.xlane.xlu0 %1995
        %v1997 = vrcp.pop 128.0
        %v1998 = vmul.f32 %v1996, %v1997
        %v1999 = vsub.f32 %v1994, %v1998
        %v2000 = vmul.f32 %v1999, %v1999
        %2001 = vadd.xlane.f32.xlu0 %v2000
        %v2002 = vpop.xlane.xlu0 %2001
        %v2003 = vmul.f32 %v2002, %v1997
        %v2004 = vadd.f32 %v2003, 1e-05
        %v2005 = vrsqrt.pop %v2004
        %v2006 = vmul.f32 %v1999, %v2005
        %v2007 = vlaneseq
        %v2008 = vshrl.u32 %v2007, 7
        %v2009 = vsub.s32 0, %v2008
        %v2010 = vrot.slane %v681, %v2009
        %v2011 = vmul.f32 %v2006, %v2010
        %v2012 = vlaneseq
        %v2013 = vshrl.u32 %v2012, 7
        %v2014 = vsub.s32 1, %v2013
        %v2015 = vrot.slane %v681, %v2014
        %v2016 = vadd.f32 %v2011, %v2015
        %v2017 = vld [vmem:[%s547] sm:$0xff]
        %v2018 = vld [vmem:[%s547 + $0x8] sm:$0xff]
        %v2019 = vld [vmem:[%s556] sm:$0xff]
        %v2020 = vld [vmem:[%s556 + $0x8] sm:$0xff]
        %s2021 = scalar_lea.vmem %s565, 256 [#allocation10]
        %v2022 = vld [vmem:[%s2021] sm:$0xf]
        %v2023 = vld [vmem:[%s2021 + $0x4] sm:$0xf]
        %v2024 = vld [vmem:[%s2021 + $0x8] sm:$0xf]
        %v2025 = vld [vmem:[%s2021 + $0xc] sm:$0xf]
        %v2026 = vld [vmem:[%s2021 + $0x10] sm:$0xf]
        %v2027 = vld [vmem:[%s2021 + $0x14] sm:$0xf]
        %v2028 = vld [vmem:[%s2021 + $0x18] sm:$0xf]
        %v2029 = vld [vmem:[%s2021 + $0x1c] sm:$0xf]
        %v2030 = vld [vmem:[%s2021 + $0x20] sm:$0xf]
        %v2031 = vld [vmem:[%s2021 + $0x24] sm:$0xf]
        %v2032 = vld [vmem:[%s2021 + $0x28] sm:$0xf]
        %v2033 = vld [vmem:[%s2021 + $0x2c] sm:$0xf]
        %v2034 = vld [vmem:[%s2021 + $0x30] sm:$0xf]
        %v2035 = vld [vmem:[%s2021 + $0x34] sm:$0xf]
        %v2036 = vld [vmem:[%s2021 + $0x38] sm:$0xf]
        %v2037 = vld [vmem:[%s2021 + $0x3c] sm:$0xf]
        %s2038 = scalar_lea.vmem %s565, 320 [#allocation10]
        %v2039 = vld [vmem:[%s2038] sm:$0xf]
        %v2040 = vld [vmem:[%s2038 + $0x4] sm:$0xf]
        %v2041 = vld [vmem:[%s2038 + $0x8] sm:$0xf]
        %v2042 = vld [vmem:[%s2038 + $0xc] sm:$0xf]
        %v2043 = vld [vmem:[%s2038 + $0x10] sm:$0xf]
        %v2044 = vld [vmem:[%s2038 + $0x14] sm:$0xf]
        %v2045 = vld [vmem:[%s2038 + $0x18] sm:$0xf]
        %v2046 = vld [vmem:[%s2038 + $0x1c] sm:$0xf]
        %v2047 = vld [vmem:[%s2038 + $0x20] sm:$0xf]
        %v2048 = vld [vmem:[%s2038 + $0x24] sm:$0xf]
        %v2049 = vld [vmem:[%s2038 + $0x28] sm:$0xf]
        %v2050 = vld [vmem:[%s2038 + $0x2c] sm:$0xf]
        %v2051 = vld [vmem:[%s2038 + $0x30] sm:$0xf]
        %v2052 = vld [vmem:[%s2038 + $0x34] sm:$0xf]
        %v2053 = vld [vmem:[%s2038 + $0x38] sm:$0xf]
        %v2054 = vld [vmem:[%s2038 + $0x3c] sm:$0xf]
        %s2055 = scalar_lea.vmem %s565, 384 [#allocation10]
        %v2056 = vld [vmem:[%s2055] sm:$0xf]
        %v2057 = vld [vmem:[%s2055 + $0x4] sm:$0xf]
        %v2058 = vld [vmem:[%s2055 + $0x8] sm:$0xf]
        %v2059 = vld [vmem:[%s2055 + $0xc] sm:$0xf]
        %v2060 = vld [vmem:[%s2055 + $0x10] sm:$0xf]
        %v2061 = vld [vmem:[%s2055 + $0x14] sm:$0xf]
        %v2062 = vld [vmem:[%s2055 + $0x18] sm:$0xf]
        %v2063 = vld [vmem:[%s2055 + $0x1c] sm:$0xf]
        %v2064 = vld [vmem:[%s2055 + $0x20] sm:$0xf]
        %v2065 = vld [vmem:[%s2055 + $0x24] sm:$0xf]
        %v2066 = vld [vmem:[%s2055 + $0x28] sm:$0xf]
        %v2067 = vld [vmem:[%s2055 + $0x2c] sm:$0xf]
        %v2068 = vld [vmem:[%s2055 + $0x30] sm:$0xf]
        %v2069 = vld [vmem:[%s2055 + $0x34] sm:$0xf]
        %v2070 = vld [vmem:[%s2055 + $0x38] sm:$0xf]
        %v2071 = vld [vmem:[%s2055 + $0x3c] sm:$0xf]
        %s2072 = scalar_lea.vmem %s565, 448 [#allocation10]
        %v2073 = vld [vmem:[%s2072] sm:$0xf]
        %v2074 = vld [vmem:[%s2072 + $0x4] sm:$0xf]
        %v2075 = vld [vmem:[%s2072 + $0x8] sm:$0xf]
        %v2076 = vld [vmem:[%s2072 + $0xc] sm:$0xf]
        %v2077 = vld [vmem:[%s2072 + $0x10] sm:$0xf]
        %v2078 = vld [vmem:[%s2072 + $0x14] sm:$0xf]
        %v2079 = vld [vmem:[%s2072 + $0x18] sm:$0xf]
        %v2080 = vld [vmem:[%s2072 + $0x1c] sm:$0xf]
        %v2081 = vld [vmem:[%s2072 + $0x20] sm:$0xf]
        %v2082 = vld [vmem:[%s2072 + $0x24] sm:$0xf]
        %v2083 = vld [vmem:[%s2072 + $0x28] sm:$0xf]
        %v2084 = vld [vmem:[%s2072 + $0x2c] sm:$0xf]
        %v2085 = vld [vmem:[%s2072 + $0x30] sm:$0xf]
        %v2086 = vld [vmem:[%s2072 + $0x34] sm:$0xf]
        %v2087 = vld [vmem:[%s2072 + $0x38] sm:$0xf]
        %v2088 = vld [vmem:[%s2072 + $0x3c] sm:$0xf]
        %v2089 = vlaneseq
        %v2090 = vshrl.u32 %v2089, 7
        %v2091 = vsub.s32 4, %v2090
        %v2092 = vrot.slane %v680, %v2091
        %v2109 = vunpack.c.l.b16 %v2022
        %v2110 = vunpack.c.l.b16 %v2023
        %v2111 = vunpack.c.l.b16 %v2024
        %v2112 = vunpack.c.l.b16 %v2025
        %v2113 = vunpack.c.l.b16 %v2026
        %v2114 = vunpack.c.l.b16 %v2027
        %v2115 = vunpack.c.l.b16 %v2028
        %v2116 = vunpack.c.l.b16 %v2029
        %v2117 = vunpack.c.l.b16 %v2030
        %v2118 = vunpack.c.l.b16 %v2031
        %v2119 = vunpack.c.l.b16 %v2032
        %v2120 = vunpack.c.l.b16 %v2033
        %v2121 = vunpack.c.l.b16 %v2034
        %v2122 = vunpack.c.l.b16 %v2035
        %v2123 = vunpack.c.l.b16 %v2036
        %v2124 = vunpack.c.l.b16 %v2037
        %v2125 = vpack.c.b16 %v2110, %v2109
        %v2126 = vpack.c.b16 %v2112, %v2111
        %v2127 = vpack.c.b16 %v2114, %v2113
        %v2128 = vpack.c.b16 %v2116, %v2115
        %v2129 = vpack.c.b16 %v2118, %v2117
        %v2130 = vpack.c.b16 %v2120, %v2119
        %v2131 = vpack.c.b16 %v2122, %v2121
        %v2132 = vpack.c.b16 %v2124, %v2123
        %2141 = vmatprep.subr.bf16.mxu0 0
        %2142 = vmatpush1.bf16.msra.mxu0 %v2125
        %2143 = vmatprep.subr.bf16.mxu0 0
        %2144 = vmatpush1.bf16.msra.mxu0 %v2126
        %2145 = vmatprep.subr.bf16.mxu0 0
        %2146 = vmatpush1.bf16.msra.mxu0 %v2127
        %2147 = vmatprep.subr.bf16.mxu0 0
        %2148 = vmatpush1.bf16.msra.mxu0 %v2128
        %2149 = vmatprep.subr.bf16.mxu0 0
        %2150 = vmatpush1.bf16.msra.mxu0 %v2129
        %2151 = vmatprep.subr.bf16.mxu0 0
        %2152 = vmatpush1.bf16.msra.mxu0 %v2130
        %2153 = vmatprep.subr.bf16.mxu0 0
        %2154 = vmatpush1.bf16.msra.mxu0 %v2131
        %2155 = vmatprep.subr.bf16.mxu0 0
        %2156 = vmatpush1.bf16.msra.mxu0 %v2132
        %2157 = vmatprep.subr.bf16.mxu0 0
        %2158 = vmatpush1.bf16.msra.mxu0 0
        %2159 = vmatprep.subr.bf16.mxu0 0
        %2160 = vmatpush1.bf16.msra.mxu0 0
        %2161 = vmatprep.subr.bf16.mxu0 0
        %2162 = vmatpush1.bf16.msra.mxu0 0
        %2163 = vmatprep.subr.bf16.mxu0 0
        %2164 = vmatpush1.bf16.msra.mxu0 0
        %2165 = vmatprep.subr.bf16.mxu0 0
        %2166 = vmatpush1.bf16.msra.mxu0 0
        %2167 = vmatprep.subr.bf16.mxu0 0
        %2168 = vmatpush1.bf16.msra.mxu0 0
        %2169 = vmatprep.subr.bf16.mxu0 0
        %2170 = vmatpush1.bf16.msra.mxu0 0
        %2171 = vmatprep.subr.bf16.mxu0 0
        %2172 = vmatpush1.bf16.msra.mxu0 0
        %2173 = vmatprep.mubr.f32.mxu0 0.0
        %2174 = vmatmul.mubr.f32.gmra.mrb[0].mxu0 %v2016
        %v2175 = vpop.f32.mrb[0].mxu0
        %v2176 = vadd.f32 %v2092, %v2175
        %v2177 = vpop.f32.mrb[0].mxu0
        %2178 = vdwg.mxu0
        %v2179 = vmul.f32 %v2176, 0.17677669
        %v2180 = vlaneseq
        %v2181 = vshrl.u32 %v2180, 7
        %v2182 = vsub.s32 5, %v2181
        %v2183 = vrot.slane %v680, %v2182
        %v2200 = vunpack.c.l.b16 %v2039
        %v2201 = vunpack.c.l.b16 %v2040
        %v2202 = vunpack.c.l.b16 %v2041
        %v2203 = vunpack.c.l.b16 %v2042
        %v2204 = vunpack.c.l.b16 %v2043
        %v2205 = vunpack.c.l.b16 %v2044
        %v2206 = vunpack.c.l.b16 %v2045
        %v2207 = vunpack.c.l.b16 %v2046
        %v2208 = vunpack.c.l.b16 %v2047
        %v2209 = vunpack.c.l.b16 %v2048
        %v2210 = vunpack.c.l.b16 %v2049
        %v2211 = vunpack.c.l.b16 %v2050
        %v2212 = vunpack.c.l.b16 %v2051
        %v2213 = vunpack.c.l.b16 %v2052
        %v2214 = vunpack.c.l.b16 %v2053
        %v2215 = vunpack.c.l.b16 %v2054
        %v2216 = vpack.c.b16 %v2201, %v2200
        %v2217 = vpack.c.b16 %v2203, %v2202
        %v2218 = vpack.c.b16 %v2205, %v2204
        %v2219 = vpack.c.b16 %v2207, %v2206
        %v2220 = vpack.c.b16 %v2209, %v2208
        %v2221 = vpack.c.b16 %v2211, %v2210
        %v2222 = vpack.c.b16 %v2213, %v2212
        %v2223 = vpack.c.b16 %v2215, %v2214
        %2232 = vmatprep.subr.bf16.mxu0 0
        %2233 = vmatpush1.bf16.msra.mxu0 %v2216
        %2234 = vmatprep.subr.bf16.mxu0 0
        %2235 = vmatpush1.bf16.msra.mxu0 %v2217
        %2236 = vmatprep.subr.bf16.mxu0 0
        %2237 = vmatpush1.bf16.msra.mxu0 %v2218
        %2238 = vmatprep.subr.bf16.mxu0 0
        %2239 = vmatpush1.bf16.msra.mxu0 %v2219
        %2240 = vmatprep.subr.bf16.mxu0 0
        %2241 = vmatpush1.bf16.msra.mxu0 %v2220
        %2242 = vmatprep.subr.bf16.mxu0 0
        %2243 = vmatpush1.bf16.msra.mxu0 %v2221
        %2244 = vmatprep.subr.bf16.mxu0 0
        %2245 = vmatpush1.bf16.msra.mxu0 %v2222
        %2246 = vmatprep.subr.bf16.mxu0 0
        %2247 = vmatpush1.bf16.msra.mxu0 %v2223
        %2248 = vmatprep.subr.bf16.mxu0 0
        %2249 = vmatpush1.bf16.msra.mxu0 0
        %2250 = vmatprep.subr.bf16.mxu0 0
        %2251 = vmatpush1.bf16.msra.mxu0 0
        %2252 = vmatprep.subr.bf16.mxu0 0
        %2253 = vmatpush1.bf16.msra.mxu0 0
        %2254 = vmatprep.subr.bf16.mxu0 0
        %2255 = vmatpush1.bf16.msra.mxu0 0
        %2256 = vmatprep.subr.bf16.mxu0 0
        %2257 = vmatpush1.bf16.msra.mxu0 0
        %2258 = vmatprep.subr.bf16.mxu0 0
        %2259 = vmatpush1.bf16.msra.mxu0 0
        %2260 = vmatprep.subr.bf16.mxu0 0
        %2261 = vmatpush1.bf16.msra.mxu0 0
        %2262 = vmatprep.subr.bf16.mxu0 0
        %2263 = vmatpush1.bf16.msra.mxu0 0
        %2264 = vmatprep.mubr.f32.mxu0 0.0
        %2265 = vmatmul.mubr.f32.gmra.mrb[0].mxu0 %v2017
        %v2266 = vpop.f32.mrb[0].mxu0
        %v2267 = vadd.f32 %v2183, %v2266
        %v2268 = vpop.f32.mrb[0].mxu0
        %2269 = vmatprep.mubr.f32.mxu0 0.0
        %2270 = vmatmul.mubr.f32.gmra.mrb[0].mxu0 %v2018
        %v2271 = vpop.f32.mrb[0].mxu0
        %v2272 = vadd.f32 %v2183, %v2271
        %v2273 = vpop.f32.mrb[0].mxu0
        %2274 = vdwg.mxu0
        %v2275 = vlaneseq
        %v2276 = vshrl.u32 %v2275, 7
        %v2277 = vsub.s32 6, %v2276
        %v2278 = vrot.slane %v680, %v2277
        %v2295 = vunpack.c.l.b16 %v2056
        %v2296 = vunpack.c.l.b16 %v2057
        %v2297 = vunpack.c.l.b16 %v2058
        %v2298 = vunpack.c.l.b16 %v2059
        %v2299 = vunpack.c.l.b16 %v2060
        %v2300 = vunpack.c.l.b16 %v2061
        %v2301 = vunpack.c.l.b16 %v2062
        %v2302 = vunpack.c.l.b16 %v2063
        %v2303 = vunpack.c.l.b16 %v2064
        %v2304 = vunpack.c.l.b16 %v2065
        %v2305 = vunpack.c.l.b16 %v2066
        %v2306 = vunpack.c.l.b16 %v2067
        %v2307 = vunpack.c.l.b16 %v2068
        %v2308 = vunpack.c.l.b16 %v2069
        %v2309 = vunpack.c.l.b16 %v2070
        %v2310 = vunpack.c.l.b16 %v2071
        %v2311 = vpack.c.b16 %v2296, %v2295
        %v2312 = vpack.c.b16 %v2298, %v2297
        %v2313 = vpack.c.b16 %v2300, %v2299
        %v2314 = vpack.c.b16 %v2302, %v2301
        %v2315 = vpack.c.b16 %v2304, %v2303
        %v2316 = vpack.c.b16 %v2306, %v2305
        %v2317 = vpack.c.b16 %v2308, %v2307
        %v2318 = vpack.c.b16 %v2310, %v2309
        %2327 = vmatprep.subr.bf16.mxu0 0
        %2328 = vmatpush1.bf16.msra.mxu0 %v2311
        %2329 = vmatprep.subr.bf16.mxu0 0
        %2330 = vmatpush1.bf16.msra.mxu0 %v2312
        %2331 = vmatprep.subr.bf16.mxu0 0
        %2332 = vmatpush1.bf16.msra.mxu0 %v2313
        %2333 = vmatprep.subr.bf16.mxu0 0
        %2334 = vmatpush1.bf16.msra.mxu0 %v2314
        %2335 = vmatprep.subr.bf16.mxu0 0
        %2336 = vmatpush1.bf16.msra.mxu0 %v2315
        %2337 = vmatprep.subr.bf16.mxu0 0
        %2338 = vmatpush1.bf16.msra.mxu0 %v2316
        %2339 = vmatprep.subr.bf16.mxu0 0
        %2340 = vmatpush1.bf16.msra.mxu0 %v2317
        %2341 = vmatprep.subr.bf16.mxu0 0
        %2342 = vmatpush1.bf16.msra.mxu0 %v2318
        %2343 = vmatprep.subr.bf16.mxu0 0
        %2344 = vmatpush1.bf16.msra.mxu0 0
        %2345 = vmatprep.subr.bf16.mxu0 0
        %2346 = vmatpush1.bf16.msra.mxu0 0
        %2347 = vmatprep.subr.bf16.mxu0 0
        %2348 = vmatpush1.bf16.msra.mxu0 0
        %2349 = vmatprep.subr.bf16.mxu0 0
        %2350 = vmatpush1.bf16.msra.mxu0 0
        %2351 = vmatprep.subr.bf16.mxu0 0
        %2352 = vmatpush1.bf16.msra.mxu0 0
        %2353 = vmatprep.subr.bf16.mxu0 0
        %2354 = vmatpush1.bf16.msra.mxu0 0
        %2355 = vmatprep.subr.bf16.mxu0 0
        %2356 = vmatpush1.bf16.msra.mxu0 0
        %2357 = vmatprep.subr.bf16.mxu0 0
        %2358 = vmatpush1.bf16.msra.mxu0 0
        %2359 = vmatprep.mubr.f32.mxu0 0.0
        %2360 = vmatmul.mubr.f32.gmra.mrb[0].mxu0 %v2019
        %v2361 = vpop.f32.mrb[0].mxu0
        %v2362 = vadd.f32 %v2278, %v2361
        %v2363 = vpop.f32.mrb[0].mxu0
        %2364 = vmatprep.mubr.f32.mxu0 0.0
        %2365 = vmatmul.mubr.f32.gmra.mrb[0].mxu0 %v2020
        %v2366 = vpop.f32.mrb[0].mxu0
        %v2367 = vadd.f32 %v2278, %v2366
        %v2368 = vpop.f32.mrb[0].mxu0
        %2369 = vdwg.mxu0
        %v2370 = vunpack.c.l.bf16 %v2073
        %v2371 = vunpack.c.l.bf16 %v2074
        %v2372 = vunpack.c.l.bf16 %v2075
        %v2373 = vunpack.c.l.bf16 %v2076
        %v2374 = vunpack.c.l.bf16 %v2077
        %v2375 = vunpack.c.l.bf16 %v2078
        %v2376 = vunpack.c.l.bf16 %v2079
        %v2377 = vunpack.c.l.bf16 %v2080
        %v2378 = vunpack.c.l.bf16 %v2081
        %v2379 = vunpack.c.l.bf16 %v2082
        %v2380 = vunpack.c.l.bf16 %v2083
        %v2381 = vunpack.c.l.bf16 %v2084
        %v2382 = vunpack.c.l.bf16 %v2085
        %v2383 = vunpack.c.l.bf16 %v2086
        %v2384 = vunpack.c.l.bf16 %v2087
        %v2385 = vunpack.c.l.bf16 %v2088
        %v2387 = vsel %vm1037, %v2179, 0
        %v2390 = vsel %vm1037, %v2267, 0
        %v2393 = vsel %vm1037, %v2272, 0
        %2395 = vmatprep.subr.mxu0 0.0
        %2396 = vmatpush1.xpose.msra.mxu0 %v2390
        %2397 = vmatprep.subr.mxu0 0.0
        %2398 = vmatpush1.xpose.msra.mxu0 %v2393
        %2399 = vmatprep.subr.mxu0 0.0
        %2400 = vmatpush1.xpose.msra.mxu0 0.0
        %2401 = vmatprep.subr.mxu0 0.0
        %2402 = vmatpush1.xpose.msra.mxu0 0.0
        %2403 = vmatprep.subr.mxu0 0.0
        %2404 = vmatpush1.xpose.msra.mxu0 0.0
        %2405 = vmatprep.subr.mxu0 0.0
        %2406 = vmatpush1.xpose.msra.mxu0 0.0
        %2407 = vmatprep.subr.mxu0 0.0
        %2408 = vmatpush1.xpose.msra.mxu0 0.0
        %2409 = vmatprep.subr.mxu0 0.0
        %2410 = vmatpush1.xpose.msra.mxu0 0.0
        %2411 = vmatprep.subr.mxu0 0.0
        %2412 = vmatpush1.xpose.msra.mxu0 0.0
        %2413 = vmatprep.subr.mxu0 0.0
        %2414 = vmatpush1.xpose.msra.mxu0 0.0
        %2415 = vmatprep.subr.mxu0 0.0
        %2416 = vmatpush1.xpose.msra.mxu0 0.0
        %2417 = vmatprep.subr.mxu0 0.0
        %2418 = vmatpush1.xpose.msra.mxu0 0.0
        %2419 = vmatprep.subr.mxu0 0.0
        %2420 = vmatpush1.xpose.msra.mxu0 0.0
        %2421 = vmatprep.subr.mxu0 0.0
        %2422 = vmatpush1.xpose.msra.mxu0 0.0
        %2423 = vmatprep.subr.mxu0 0.0
        %2424 = vmatpush1.xpose.msra.mxu0 0.0
        %2425 = vmatprep.subr.mxu0 0.0
        %2426 = vmatpush1.xpose.msra.mxu0 0.0
        %2427 = vmatprep.subr.mxu0 0.0
        %2428 = vmatpush1.xpose.msra.mxu0 0.0
        %2429 = vmatprep.subr.mxu0 0.0
        %2430 = vmatpush1.xpose.msra.mxu0 0.0
        %2431 = vmatprep.subr.mxu0 0.0
        %2432 = vmatpush1.xpose.msra.mxu0 0.0
        %2433 = vmatprep.subr.mxu0 0.0
        %2434 = vmatpush1.xpose.msra.mxu0 0.0
        %2435 = vmatprep.subr.mxu0 0.0
        %2436 = vmatpush1.xpose.msra.mxu0 0.0
        %2437 = vmatprep.subr.mxu0 0.0
        %2438 = vmatpush1.xpose.msra.mxu0 0.0
        %2439 = vmatprep.subr.mxu0 0.0
        %2440 = vmatpush1.xpose.msra.mxu0 0.0
        %2441 = vmatprep.subr.mxu0 0.0
        %2442 = vmatpush1.xpose.msra.mxu0 0.0
        %2443 = vmatprep.subr.mxu0 0.0
        %2444 = vmatpush1.xpose.msra.mxu0 0.0
        %2445 = vmatprep.subr.mxu0 0.0
        %2446 = vmatpush1.xpose.msra.mxu0 0.0
        %2447 = vmatprep.subr.mxu0 0.0
        %2448 = vmatpush1.xpose.msra.mxu0 0.0
        %2449 = vmatprep.subr.mxu0 0.0
        %2450 = vmatpush1.xpose.msra.mxu0 0.0
        %2451 = vmatprep.subr.mxu0 0.0
        %2452 = vmatpush1.xpose.msra.mxu0 0.0
        %2453 = vmatprep.subr.mxu0 0.0
        %2454 = vmatpush1.xpose.msra.mxu0 0.0
        %2455 = vmatprep.subr.mxu0 0.0
        %2456 = vmatpush1.xpose.msra.mxu0 0.0
        %2457 = vmatprep.subr.mxu0 0.0
        %2458 = vmatpush1.xpose.msra.mxu0 0.0
        %2459 = vmatprep.mubr.f32.mxu0 0.0
        %2460 = vmatmul.mubr.f32.gmra.mrb[0].mxu0 %v2387
        %v2461 = vpop.f32.mrb[0].mxu0
        %v2462 = vadd.f32 0.0, %v2461
        %v2463 = vpop.f32.mrb[0].mxu0
        %2464 = vdwg.mxu0
        %vm2465 = vcmask 130048
        %v2466 = vsel %vm2465, %v2462, -inf
        %2467 = vmax.xlane.f32.xlu0 %v2466
        %v2468 = vpop.xlane.xlu0 %2467
        %v2469 = vsub.f32 %v2462, %v2468
        %v2470 = vmul.f32 %v2469, 1.442695
        %v2471 = vpow.pop %v2470
        %v2472 = vsel %vm2465, %v2471, 0.0
        %2473 = vadd.xlane.f32.xlu0 %v2472
        %v2474 = vpop.xlane.xlu0 %2473
        %v2475 = vrcp.pop %v2474
        %v2476 = vmul.f32 %v2471, %v2475
        %v2478 = vsel %vm2465, %v2476, 0
        %2480 = vmatprep.subr.mxu0 0.0
        %2481 = vmatpush1.msra.mxu0 %v2362
        %2482 = vmatprep.subr.mxu0 0.0
        %2483 = vmatpush1.msra.mxu0 %v2367
        %2484 = vmatprep.subr.mxu0 0.0
        %2485 = vmatpush1.msra.mxu0 0.0
        %2486 = vmatprep.subr.mxu0 0.0
        %2487 = vmatpush1.msra.mxu0 0.0
        %2488 = vmatprep.subr.mxu0 0.0
        %2489 = vmatpush1.msra.mxu0 0.0
        %2490 = vmatprep.subr.mxu0 0.0
        %2491 = vmatpush1.msra.mxu0 0.0
        %2492 = vmatprep.subr.mxu0 0.0
        %2493 = vmatpush1.msra.mxu0 0.0
        %2494 = vmatprep.subr.mxu0 0.0
        %2495 = vmatpush1.msra.mxu0 0.0
        %2496 = vmatprep.subr.mxu0 0.0
        %2497 = vmatpush1.msra.mxu0 0.0
        %2498 = vmatprep.subr.mxu0 0.0
        %2499 = vmatpush1.msra.mxu0 0.0
        %2500 = vmatprep.subr.mxu0 0.0
        %2501 = vmatpush1.msra.mxu0 0.0
        %2502 = vmatprep.subr.mxu0 0.0
        %2503 = vmatpush1.msra.mxu0 0.0
        %2504 = vmatprep.subr.mxu0 0.0
        %2505 = vmatpush1.msra.mxu0 0.0
        %2506 = vmatprep.subr.mxu0 0.0
        %2507 = vmatpush1.msra.mxu0 0.0
        %2508 = vmatprep.subr.mxu0 0.0
        %2509 = vmatpush1.msra.mxu0 0.0
        %2510 = vmatprep.subr.mxu0 0.0
        %2511 = vmatpush1.msra.mxu0 0.0
        %2512 = vmatprep.subr.mxu0 0.0
        %2513 = vmatpush1.msra.mxu0 0.0
        %2514 = vmatprep.subr.mxu0 0.0
        %2515 = vmatpush1.msra.mxu0 0.0
        %2516 = vmatprep.subr.mxu0 0.0
        %2517 = vmatpush1.msra.mxu0 0.0
        %2518 = vmatprep.subr.mxu0 0.0
        %2519 = vmatpush1.msra.mxu0 0.0
        %2520 = vmatprep.subr.mxu0 0.0
        %2521 = vmatpush1.msra.mxu0 0.0
        %2522 = vmatprep.subr.mxu0 0.0
        %2523 = vmatpush1.msra.mxu0 0.0
        %2524 = vmatprep.subr.mxu0 0.0
        %2525 = vmatpush1.msra.mxu0 0.0
        %2526 = vmatprep.subr.mxu0 0.0
        %2527 = vmatpush1.msra.mxu0 0.0
        %2528 = vmatprep.subr.mxu0 0.0
        %2529 = vmatpush1.msra.mxu0 0.0
        %2530 = vmatprep.subr.mxu0 0.0
        %2531 = vmatpush1.msra.mxu0 0.0
        %2532 = vmatprep.subr.mxu0 0.0
        %2533 = vmatpush1.msra.mxu0 0.0
        %2534 = vmatprep.subr.mxu0 0.0
        %2535 = vmatpush1.msra.mxu0 0.0
        %2536 = vmatprep.subr.mxu0 0.0
        %2537 = vmatpush1.msra.mxu0 0.0
        %2538 = vmatprep.subr.mxu0 0.0
        %2539 = vmatpush1.msra.mxu0 0.0
        %2540 = vmatprep.subr.mxu0 0.0
        %2541 = vmatpush1.msra.mxu0 0.0
        %2542 = vmatprep.subr.mxu0 0.0
        %2543 = vmatpush1.msra.mxu0 0.0
        %2544 = vmatprep.mubr.f32.mxu0 0.0
        %2545 = vmatmul.mubr.f32.gmra.mrb[0].mxu0 %v2478
        %v2546 = vpop.f32.mrb[0].mxu0
        %v2547 = vadd.f32 0.0, %v2546
        %v2548 = vpop.f32.mrb[0].mxu0
        %2549 = vdwg.mxu0
        %2550 = vrot.lane.b32.xlu0 %v2179, 96
        %v2551 = vpop.permute.xlu0 %2550
        %2552 = vrot.lane.b32.xlu0 %v2267, 96
        %v2553 = vpop.permute.xlu0 %2552
        %2554 = vrot.lane.b32.xlu0 %v2272, 96
        %v2555 = vpop.permute.xlu0 %2554
        %v2556 = vsel %vm1037, %v2551, 0
        %v2558 = vsel %vm1037, %v2553, 0
        %v2560 = vsel %vm1037, %v2555, 0
        %2562 = vmatprep.subr.mxu0 0.0
        %2563 = vmatpush1.xpose.msra.mxu0 %v2558
        %2564 = vmatprep.subr.mxu0 0.0
        %2565 = vmatpush1.xpose.msra.mxu0 %v2560
        %2566 = vmatprep.subr.mxu0 0.0
        %2567 = vmatpush1.xpose.msra.mxu0 0.0
        %2568 = vmatprep.subr.mxu0 0.0
        %2569 = vmatpush1.xpose.msra.mxu0 0.0
        %2570 = vmatprep.subr.mxu0 0.0
        %2571 = vmatpush1.xpose.msra.mxu0 0.0
        %2572 = vmatprep.subr.mxu0 0.0
        %2573 = vmatpush1.xpose.msra.mxu0 0.0
        %2574 = vmatprep.subr.mxu0 0.0
        %2575 = vmatpush1.xpose.msra.mxu0 0.0
        %2576 = vmatprep.subr.mxu0 0.0
        %2577 = vmatpush1.xpose.msra.mxu0 0.0
        %2578 = vmatprep.subr.mxu0 0.0
        %2579 = vmatpush1.xpose.msra.mxu0 0.0
        %2580 = vmatprep.subr.mxu0 0.0
        %2581 = vmatpush1.xpose.msra.mxu0 0.0
        %2582 = vmatprep.subr.mxu0 0.0
        %2583 = vmatpush1.xpose.msra.mxu0 0.0
        %2584 = vmatprep.subr.mxu0 0.0
        %2585 = vmatpush1.xpose.msra.mxu0 0.0
        %2586 = vmatprep.subr.mxu0 0.0
        %2587 = vmatpush1.xpose.msra.mxu0 0.0
        %2588 = vmatprep.subr.mxu0 0.0
        %2589 = vmatpush1.xpose.msra.mxu0 0.0
        %2590 = vmatprep.subr.mxu0 0.0
        %2591 = vmatpush1.xpose.msra.mxu0 0.0
        %2592 = vmatprep.subr.mxu0 0.0
        %2593 = vmatpush1.xpose.msra.mxu0 0.0
        %2594 = vmatprep.subr.mxu0 0.0
        %2595 = vmatpush1.xpose.msra.mxu0 0.0
        %2596 = vmatprep.subr.mxu0 0.0
        %2597 = vmatpush1.xpose.msra.mxu0 0.0
        %2598 = vmatprep.subr.mxu0 0.0
        %2599 = vmatpush1.xpose.msra.mxu0 0.0
        %2600 = vmatprep.subr.mxu0 0.0
        %2601 = vmatpush1.xpose.msra.mxu0 0.0
        %2602 = vmatprep.subr.mxu0 0.0
        %2603 = vmatpush1.xpose.msra.mxu0 0.0
        %2604 = vmatprep.subr.mxu0 0.0
        %2605 = vmatpush1.xpose.msra.mxu0 0.0
        %2606 = vmatprep.subr.mxu0 0.0
        %2607 = vmatpush1.xpose.msra.mxu0 0.0
        %2608 = vmatprep.subr.mxu0 0.0
        %2609 = vmatpush1.xpose.msra.mxu0 0.0
        %2610 = vmatprep.subr.mxu0 0.0
        %2611 = vmatpush1.xpose.msra.mxu0 0.0
        %2612 = vmatprep.subr.mxu0 0.0
        %2613 = vmatpush1.xpose.msra.mxu0 0.0
        %2614 = vmatprep.subr.mxu0 0.0
        %2615 = vmatpush1.xpose.msra.mxu0 0.0
        %2616 = vmatprep.subr.mxu0 0.0
        %2617 = vmatpush1.xpose.msra.mxu0 0.0
        %2618 = vmatprep.subr.mxu0 0.0
        %2619 = vmatpush1.xpose.msra.mxu0 0.0
        %2620 = vmatprep.subr.mxu0 0.0
        %2621 = vmatpush1.xpose.msra.mxu0 0.0
        %2622 = vmatprep.subr.mxu0 0.0
        %2623 = vmatpush1.xpose.msra.mxu0 0.0
        %2624 = vmatprep.subr.mxu0 0.0
        %2625 = vmatpush1.xpose.msra.mxu0 0.0
        %2626 = vmatprep.mubr.f32.mxu0 0.0
        %2627 = vmatmul.mubr.f32.gmra.mrb[0].mxu0 %v2556
        %v2628 = vpop.f32.mrb[0].mxu0
        %v2629 = vadd.f32 0.0, %v2628
        %v2630 = vpop.f32.mrb[0].mxu0
        %2631 = vdwg.mxu0
        %v2632 = vsel %vm2465, %v2629, -inf
        %2633 = vmax.xlane.f32.xlu0 %v2632
        %v2634 = vpop.xlane.xlu0 %2633
        %v2635 = vsub.f32 %v2629, %v2634
        %v2636 = vmul.f32 %v2635, 1.442695
        %v2637 = vpow.pop %v2636
        %v2638 = vsel %vm2465, %v2637, 0.0
        %2639 = vadd.xlane.f32.xlu0 %v2638
        %v2640 = vpop.xlane.xlu0 %2639
        %v2641 = vrcp.pop %v2640
        %v2642 = vmul.f32 %v2637, %v2641
        %2645 = vrot.lane.b32.xlu0 %v2362, 96
        %v2646 = vpop.permute.xlu0 %2645
        %2647 = vrot.lane.b32.xlu0 %v2367, 96
        %v2648 = vpop.permute.xlu0 %2647
        %v2652 = vsel %vm2465, %v2642, 0
        %2654 = vmatprep.subr.mxu0 0.0
        %2655 = vmatpush1.msra.mxu0 %v2646
        %2656 = vmatprep.subr.mxu0 0.0
        %2657 = vmatpush1.msra.mxu0 %v2648
        %2658 = vmatprep.subr.mxu0 0.0
        %2659 = vmatpush1.msra.mxu0 0.0
        %2660 = vmatprep.subr.mxu0 0.0
        %2661 = vmatpush1.msra.mxu0 0.0
        %2662 = vmatprep.subr.mxu0 0.0
        %2663 = vmatpush1.msra.mxu0 0.0
        %2664 = vmatprep.subr.mxu0 0.0
        %2665 = vmatpush1.msra.mxu0 0.0
        %2666 = vmatprep.subr.mxu0 0.0
        %2667 = vmatpush1.msra.mxu0 0.0
        %2668 = vmatprep.subr.mxu0 0.0
        %2669 = vmatpush1.msra.mxu0 0.0
        %2670 = vmatprep.subr.mxu0 0.0
        %2671 = vmatpush1.msra.mxu0 0.0
        %2672 = vmatprep.subr.mxu0 0.0
        %2673 = vmatpush1.msra.mxu0 0.0
        %2674 = vmatprep.subr.mxu0 0.0
        %2675 = vmatpush1.msra.mxu0 0.0
        %2676 = vmatprep.subr.mxu0 0.0
        %2677 = vmatpush1.msra.mxu0 0.0
        %2678 = vmatprep.subr.mxu0 0.0
        %2679 = vmatpush1.msra.mxu0 0.0
        %2680 = vmatprep.subr.mxu0 0.0
        %2681 = vmatpush1.msra.mxu0 0.0
        %2682 = vmatprep.subr.mxu0 0.0
        %2683 = vmatpush1.msra.mxu0 0.0
        %2684 = vmatprep.subr.mxu0 0.0
        %2685 = vmatpush1.msra.mxu0 0.0
        %2686 = vmatprep.subr.mxu0 0.0
        %2687 = vmatpush1.msra.mxu0 0.0
        %2688 = vmatprep.subr.mxu0 0.0
        %2689 = vmatpush1.msra.mxu0 0.0
        %2690 = vmatprep.subr.mxu0 0.0
        %2691 = vmatpush1.msra.mxu0 0.0
        %2692 = vmatprep.subr.mxu0 0.0
        %2693 = vmatpush1.msra.mxu0 0.0
        %2694 = vmatprep.subr.mxu0 0.0
        %2695 = vmatpush1.msra.mxu0 0.0
        %2696 = vmatprep.subr.mxu0 0.0
        %2697 = vmatpush1.msra.mxu0 0.0
        %2698 = vmatprep.subr.mxu0 0.0
        %2699 = vmatpush1.msra.mxu0 0.0
        %2700 = vmatprep.subr.mxu0 0.0
        %2701 = vmatpush1.msra.mxu0 0.0
        %2702 = vmatprep.subr.mxu0 0.0
        %2703 = vmatpush1.msra.mxu0 0.0
        %2704 = vmatprep.subr.mxu0 0.0
        %2705 = vmatpush1.msra.mxu0 0.0
        %2706 = vmatprep.subr.mxu0 0.0
        %2707 = vmatpush1.msra.mxu0 0.0
        %2708 = vmatprep.subr.mxu0 0.0
        %2709 = vmatpush1.msra.mxu0 0.0
        %2710 = vmatprep.subr.mxu0 0.0
        %2711 = vmatpush1.msra.mxu0 0.0
        %2712 = vmatprep.subr.mxu0 0.0
        %2713 = vmatpush1.msra.mxu0 0.0
        %2714 = vmatprep.subr.mxu0 0.0
        %2715 = vmatpush1.msra.mxu0 0.0
        %2716 = vmatprep.subr.mxu0 0.0
        %2717 = vmatpush1.msra.mxu0 0.0
        %2718 = vmatprep.mubr.f32.mxu0 0.0
        %2719 = vmatmul.mubr.f32.gmra.mrb[0].mxu0 %v2652
        %v2720 = vpop.f32.mrb[0].mxu0
        %v2721 = vadd.f32 0.0, %v2720
        %v2722 = vpop.f32.mrb[0].mxu0
        %2723 = vdwg.mxu0
        %v2725 = vsel %vm1037, %v2721, 0
        %2727 = vmatprep.subr.mxu0 0.0
        %2728 = vmatpush1.msra.mxu0 %v2374
        %2729 = vmatprep.subr.mxu0 0.0
        %2730 = vmatpush1.msra.mxu0 %v2375
        %2731 = vmatprep.subr.mxu0 0.0
        %2732 = vmatpush1.msra.mxu0 %v2376
        %2733 = vmatprep.subr.mxu0 0.0
        %2734 = vmatpush1.msra.mxu0 %v2377
        %2735 = vmatprep.subr.mxu0 0.0
        %2736 = vmatpush1.msra.mxu0 0.0
        %2737 = vmatprep.subr.mxu0 0.0
        %2738 = vmatpush1.msra.mxu0 0.0
        %2739 = vmatprep.subr.mxu0 0.0
        %2740 = vmatpush1.msra.mxu0 0.0
        %2741 = vmatprep.subr.mxu0 0.0
        %2742 = vmatpush1.msra.mxu0 0.0
        %2743 = vmatprep.subr.mxu0 0.0
        %2744 = vmatpush1.msra.mxu0 0.0
        %2745 = vmatprep.subr.mxu0 0.0
        %2746 = vmatpush1.msra.mxu0 0.0
        %2747 = vmatprep.subr.mxu0 0.0
        %2748 = vmatpush1.msra.mxu0 0.0
        %2749 = vmatprep.subr.mxu0 0.0
        %2750 = vmatpush1.msra.mxu0 0.0
        %2751 = vmatprep.subr.mxu0 0.0
        %2752 = vmatpush1.msra.mxu0 0.0
        %2753 = vmatprep.subr.mxu0 0.0
        %2754 = vmatpush1.msra.mxu0 0.0
        %2755 = vmatprep.subr.mxu0 0.0
        %2756 = vmatpush1.msra.mxu0 0.0
        %2757 = vmatprep.subr.mxu0 0.0
        %2758 = vmatpush1.msra.mxu0 0.0
        %2759 = vmatprep.subr.mxu0 0.0
        %2760 = vmatpush1.msra.mxu0 0.0
        %2761 = vmatprep.subr.mxu0 0.0
        %2762 = vmatpush1.msra.mxu0 0.0
        %2763 = vmatprep.subr.mxu0 0.0
        %2764 = vmatpush1.msra.mxu0 0.0
        %2765 = vmatprep.subr.mxu0 0.0
        %2766 = vmatpush1.msra.mxu0 0.0
        %2767 = vmatprep.subr.mxu0 0.0
        %2768 = vmatpush1.msra.mxu0 0.0
        %2769 = vmatprep.subr.mxu0 0.0
        %2770 = vmatpush1.msra.mxu0 0.0
        %2771 = vmatprep.subr.mxu0 0.0
        %2772 = vmatpush1.msra.mxu0 0.0
        %2773 = vmatprep.subr.mxu0 0.0
        %2774 = vmatpush1.msra.mxu0 0.0
        %2775 = vmatprep.subr.mxu0 0.0
        %2776 = vmatpush1.msra.mxu0 0.0
        %2777 = vmatprep.subr.mxu0 0.0
        %2778 = vmatpush1.msra.mxu0 0.0
        %2779 = vmatprep.subr.mxu0 0.0
        %2780 = vmatpush1.msra.mxu0 0.0
        %2781 = vmatprep.subr.mxu0 0.0
        %2782 = vmatpush1.msra.mxu0 0.0
        %2783 = vmatprep.subr.mxu0 0.0
        %2784 = vmatpush1.msra.mxu0 0.0
        %2785 = vmatprep.subr.mxu0 0.0
        %2786 = vmatpush1.msra.mxu0 0.0
        %2787 = vmatprep.subr.mxu0 0.0
        %2788 = vmatpush1.msra.mxu0 0.0
        %2789 = vmatprep.subr.mxu0 0.0
        %2790 = vmatpush1.msra.mxu0 0.0
        %2791 = vmatprep.mubr.f32.mxu0 0.0
        %2792 = vmatmul.mubr.f32.gmra.mrb[0].mxu0 %v2725
        %v2793 = vpop.f32.mrb[0].mxu0
        %v2794 = vadd.f32 0.0, %v2793
        %v2795 = vpop.f32.mrb[0].mxu0
        %2796 = vdwg.mxu0
        %v2798 = vsel %vm1037, %v2547, 0
        %2800 = vmatprep.subr.mxu0 0.0
        %2801 = vmatpush1.msra.mxu0 %v2370
        %2802 = vmatprep.subr.mxu0 0.0
        %2803 = vmatpush1.msra.mxu0 %v2371
        %2804 = vmatprep.subr.mxu0 0.0
        %2805 = vmatpush1.msra.mxu0 %v2372
        %2806 = vmatprep.subr.mxu0 0.0
        %2807 = vmatpush1.msra.mxu0 %v2373
        %2808 = vmatprep.subr.mxu0 0.0
        %2809 = vmatpush1.msra.mxu0 0.0
        %2810 = vmatprep.subr.mxu0 0.0
        %2811 = vmatpush1.msra.mxu0 0.0
        %2812 = vmatprep.subr.mxu0 0.0
        %2813 = vmatpush1.msra.mxu0 0.0
        %2814 = vmatprep.subr.mxu0 0.0
        %2815 = vmatpush1.msra.mxu0 0.0
        %2816 = vmatprep.subr.mxu0 0.0
        %2817 = vmatpush1.msra.mxu0 0.0
        %2818 = vmatprep.subr.mxu0 0.0
        %2819 = vmatpush1.msra.mxu0 0.0
        %2820 = vmatprep.subr.mxu0 0.0
        %2821 = vmatpush1.msra.mxu0 0.0
        %2822 = vmatprep.subr.mxu0 0.0
        %2823 = vmatpush1.msra.mxu0 0.0
        %2824 = vmatprep.subr.mxu0 0.0
        %2825 = vmatpush1.msra.mxu0 0.0
        %2826 = vmatprep.subr.mxu0 0.0
        %2827 = vmatpush1.msra.mxu0 0.0
        %2828 = vmatprep.subr.mxu0 0.0
        %2829 = vmatpush1.msra.mxu0 0.0
        %2830 = vmatprep.subr.mxu0 0.0
        %2831 = vmatpush1.msra.mxu0 0.0
        %2832 = vmatprep.subr.mxu0 0.0
        %2833 = vmatpush1.msra.mxu0 0.0
        %2834 = vmatprep.subr.mxu0 0.0
        %2835 = vmatpush1.msra.mxu0 0.0
        %2836 = vmatprep.subr.mxu0 0.0
        %2837 = vmatpush1.msra.mxu0 0.0
        %2838 = vmatprep.subr.mxu0 0.0
        %2839 = vmatpush1.msra.mxu0 0.0
        %2840 = vmatprep.subr.mxu0 0.0
        %2841 = vmatpush1.msra.mxu0 0.0
        %2842 = vmatprep.subr.mxu0 0.0
        %2843 = vmatpush1.msra.mxu0 0.0
        %2844 = vmatprep.subr.mxu0 0.0
        %2845 = vmatpush1.msra.mxu0 0.0
        %2846 = vmatprep.subr.mxu0 0.0
        %2847 = vmatpush1.msra.mxu0 0.0
        %2848 = vmatprep.subr.mxu0 0.0
        %2849 = vmatpush1.msra.mxu0 0.0
        %2850 = vmatprep.subr.mxu0 0.0
        %2851 = vmatpush1.msra.mxu0 0.0
        %2852 = vmatprep.subr.mxu0 0.0
        %2853 = vmatpush1.msra.mxu0 0.0
        %2854 = vmatprep.subr.mxu0 0.0
        %2855 = vmatpush1.msra.mxu0 0.0
        %2856 = vmatprep.subr.mxu0 0.0
        %2857 = vmatpush1.msra.mxu0 0.0
        %2858 = vmatprep.subr.mxu0 0.0
        %2859 = vmatpush1.msra.mxu0 0.0
        %2860 = vmatprep.subr.mxu0 0.0
        %2861 = vmatpush1.msra.mxu0 0.0
        %2862 = vmatprep.subr.mxu0 0.0
        %2863 = vmatpush1.msra.mxu0 0.0
        %2864 = vmatprep.mubr.f32.mxu0 0.0
        %2865 = vmatmul.mubr.f32.gmra.mrb[0].mxu0 %v2798
        %v2866 = vpop.f32.mrb[0].mxu0
        %v2867 = vadd.f32 %v2794, %v2866
        %v2868 = vpop.f32.mrb[0].mxu0
        %2869 = vdwg.mxu0
        %2870 = vrot.lane.b32.xlu0 %v2179, 64
        %v2871 = vpop.permute.xlu0 %2870
        %2872 = vrot.lane.b32.xlu0 %v2267, 64
        %v2873 = vpop.permute.xlu0 %2872
        %2874 = vrot.lane.b32.xlu0 %v2272, 64
        %v2875 = vpop.permute.xlu0 %2874
        %v2876 = vsel %vm1037, %v2871, 0
        %v2878 = vsel %vm1037, %v2873, 0
        %v2880 = vsel %vm1037, %v2875, 0
        %2882 = vmatprep.subr.mxu0 0.0
        %2883 = vmatpush1.xpose.msra.mxu0 %v2878
        %2884 = vmatprep.subr.mxu0 0.0
        %2885 = vmatpush1.xpose.msra.mxu0 %v2880
        %2886 = vmatprep.subr.mxu0 0.0
        %2887 = vmatpush1.xpose.msra.mxu0 0.0
        %2888 = vmatprep.subr.mxu0 0.0
        %2889 = vmatpush1.xpose.msra.mxu0 0.0
        %2890 = vmatprep.subr.mxu0 0.0
        %2891 = vmatpush1.xpose.msra.mxu0 0.0
        %2892 = vmatprep.subr.mxu0 0.0
        %2893 = vmatpush1.xpose.msra.mxu0 0.0
        %2894 = vmatprep.subr.mxu0 0.0
        %2895 = vmatpush1.xpose.msra.mxu0 0.0
        %2896 = vmatprep.subr.mxu0 0.0
        %2897 = vmatpush1.xpose.msra.mxu0 0.0
        %2898 = vmatprep.subr.mxu0 0.0
        %2899 = vmatpush1.xpose.msra.mxu0 0.0
        %2900 = vmatprep.subr.mxu0 0.0
        %2901 = vmatpush1.xpose.msra.mxu0 0.0
        %2902 = vmatprep.subr.mxu0 0.0
        %2903 = vmatpush1.xpose.msra.mxu0 0.0
        %2904 = vmatprep.subr.mxu0 0.0
        %2905 = vmatpush1.xpose.msra.mxu0 0.0
        %2906 = vmatprep.subr.mxu0 0.0
        %2907 = vmatpush1.xpose.msra.mxu0 0.0
        %2908 = vmatprep.subr.mxu0 0.0
        %2909 = vmatpush1.xpose.msra.mxu0 0.0
        %2910 = vmatprep.subr.mxu0 0.0
        %2911 = vmatpush1.xpose.msra.mxu0 0.0
        %2912 = vmatprep.subr.mxu0 0.0
        %2913 = vmatpush1.xpose.msra.mxu0 0.0
        %2914 = vmatprep.subr.mxu0 0.0
        %2915 = vmatpush1.xpose.msra.mxu0 0.0
        %2916 = vmatprep.subr.mxu0 0.0
        %2917 = vmatpush1.xpose.msra.mxu0 0.0
        %2918 = vmatprep.subr.mxu0 0.0
        %2919 = vmatpush1.xpose.msra.mxu0 0.0
        %2920 = vmatprep.subr.mxu0 0.0
        %2921 = vmatpush1.xpose.msra.mxu0 0.0
        %2922 = vmatprep.subr.mxu0 0.0
        %2923 = vmatpush1.xpose.msra.mxu0 0.0
        %2924 = vmatprep.subr.mxu0 0.0
        %2925 = vmatpush1.xpose.msra.mxu0 0.0
        %2926 = vmatprep.subr.mxu0 0.0
        %2927 = vmatpush1.xpose.msra.mxu0 0.0
        %2928 = vmatprep.subr.mxu0 0.0
        %2929 = vmatpush1.xpose.msra.mxu0 0.0
        %2930 = vmatprep.subr.mxu0 0.0
        %2931 = vmatpush1.xpose.msra.mxu0 0.0
        %2932 = vmatprep.subr.mxu0 0.0
        %2933 = vmatpush1.xpose.msra.mxu0 0.0
        %2934 = vmatprep.subr.mxu0 0.0
        %2935 = vmatpush1.xpose.msra.mxu0 0.0
        %2936 = vmatprep.subr.mxu0 0.0
        %2937 = vmatpush1.xpose.msra.mxu0 0.0
        %2938 = vmatprep.subr.mxu0 0.0
        %2939 = vmatpush1.xpose.msra.mxu0 0.0
        %2940 = vmatprep.subr.mxu0 0.0
        %2941 = vmatpush1.xpose.msra.mxu0 0.0
        %2942 = vmatprep.subr.mxu0 0.0
        %2943 = vmatpush1.xpose.msra.mxu0 0.0
        %2944 = vmatprep.subr.mxu0 0.0
        %2945 = vmatpush1.xpose.msra.mxu0 0.0
        %2946 = vmatprep.mubr.f32.mxu0 0.0
        %2947 = vmatmul.mubr.f32.gmra.mrb[0].mxu0 %v2876
        %v2948 = vpop.f32.mrb[0].mxu0
        %v2949 = vadd.f32 0.0, %v2948
        %v2950 = vpop.f32.mrb[0].mxu0
        %2951 = vdwg.mxu0
        %v2952 = vsel %vm2465, %v2949, -inf
        %2953 = vmax.xlane.f32.xlu0 %v2952
        %v2954 = vpop.xlane.xlu0 %2953
        %v2955 = vsub.f32 %v2949, %v2954
        %v2956 = vmul.f32 %v2955, 1.442695
        %v2957 = vpow.pop %v2956
        %v2958 = vsel %vm2465, %v2957, 0.0
        %2959 = vadd.xlane.f32.xlu0 %v2958
        %v2960 = vpop.xlane.xlu0 %2959
        %v2961 = vrcp.pop %v2960
        %v2962 = vmul.f32 %v2957, %v2961
        %2963 = vrot.lane.b32.xlu0 %v2362, 64
        %v2964 = vpop.permute.xlu0 %2963
        %2965 = vrot.lane.b32.xlu0 %v2367, 64
        %v2966 = vpop.permute.xlu0 %2965
        %v2970 = vsel %vm2465, %v2962, 0
        %2972 = vmatprep.subr.mxu0 0.0
        %2973 = vmatpush1.msra.mxu0 %v2964
        %2974 = vmatprep.subr.mxu0 0.0
        %2975 = vmatpush1.msra.mxu0 %v2966
        %2976 = vmatprep.subr.mxu0 0.0
        %2977 = vmatpush1.msra.mxu0 0.0
        %2978 = vmatprep.subr.mxu0 0.0
        %2979 = vmatpush1.msra.mxu0 0.0
        %2980 = vmatprep.subr.mxu0 0.0
        %2981 = vmatpush1.msra.mxu0 0.0
        %2982 = vmatprep.subr.mxu0 0.0
        %2983 = vmatpush1.msra.mxu0 0.0
        %2984 = vmatprep.subr.mxu0 0.0
        %2985 = vmatpush1.msra.mxu0 0.0
        %2986 = vmatprep.subr.mxu0 0.0
        %2987 = vmatpush1.msra.mxu0 0.0
        %2988 = vmatprep.subr.mxu0 0.0
        %2989 = vmatpush1.msra.mxu0 0.0
        %2990 = vmatprep.subr.mxu0 0.0
        %2991 = vmatpush1.msra.mxu0 0.0
        %2992 = vmatprep.subr.mxu0 0.0
        %2993 = vmatpush1.msra.mxu0 0.0
        %2994 = vmatprep.subr.mxu0 0.0
        %2995 = vmatpush1.msra.mxu0 0.0
        %2996 = vmatprep.subr.mxu0 0.0
        %2997 = vmatpush1.msra.mxu0 0.0
        %2998 = vmatprep.subr.mxu0 0.0
        %2999 = vmatpush1.msra.mxu0 0.0
        %3000 = vmatprep.subr.mxu0 0.0
        %3001 = vmatpush1.msra.mxu0 0.0
        %3002 = vmatprep.subr.mxu0 0.0
        %3003 = vmatpush1.msra.mxu0 0.0
        %3004 = vmatprep.subr.mxu0 0.0
        %3005 = vmatpush1.msra.mxu0 0.0
        %3006 = vmatprep.subr.mxu0 0.0
        %3007 = vmatpush1.msra.mxu0 0.0
        %3008 = vmatprep.subr.mxu0 0.0
        %3009 = vmatpush1.msra.mxu0 0.0
        %3010 = vmatprep.subr.mxu0 0.0
        %3011 = vmatpush1.msra.mxu0 0.0
        %3012 = vmatprep.subr.mxu0 0.0
        %3013 = vmatpush1.msra.mxu0 0.0
        %3014 = vmatprep.subr.mxu0 0.0
        %3015 = vmatpush1.msra.mxu0 0.0
        %3016 = vmatprep.subr.mxu0 0.0
        %3017 = vmatpush1.msra.mxu0 0.0
        %3018 = vmatprep.subr.mxu0 0.0
        %3019 = vmatpush1.msra.mxu0 0.0
        %3020 = vmatprep.subr.mxu0 0.0
        %3021 = vmatpush1.msra.mxu0 0.0
        %3022 = vmatprep.subr.mxu0 0.0
        %3023 = vmatpush1.msra.mxu0 0.0
        %3024 = vmatprep.subr.mxu0 0.0
        %3025 = vmatpush1.msra.mxu0 0.0
        %3026 = vmatprep.subr.mxu0 0.0
        %3027 = vmatpush1.msra.mxu0 0.0
        %3028 = vmatprep.subr.mxu0 0.0
        %3029 = vmatpush1.msra.mxu0 0.0
        %3030 = vmatprep.subr.mxu0 0.0
        %3031 = vmatpush1.msra.mxu0 0.0
        %3032 = vmatprep.subr.mxu0 0.0
        %3033 = vmatpush1.msra.mxu0 0.0
        %3034 = vmatprep.subr.mxu0 0.0
        %3035 = vmatpush1.msra.mxu0 0.0
        %3036 = vmatprep.mubr.f32.mxu0 0.0
        %3037 = vmatmul.mubr.f32.gmra.mrb[0].mxu0 %v2970
        %v3038 = vpop.f32.mrb[0].mxu0
        %v3039 = vadd.f32 0.0, %v3038
        %v3040 = vpop.f32.mrb[0].mxu0
        %3041 = vdwg.mxu0
        %v3043 = vsel %vm1037, %v3039, 0
        %3045 = vmatprep.subr.mxu0 0.0
        %3046 = vmatpush1.msra.mxu0 %v2378
        %3047 = vmatprep.subr.mxu0 0.0
        %3048 = vmatpush1.msra.mxu0 %v2379
        %3049 = vmatprep.subr.mxu0 0.0
        %3050 = vmatpush1.msra.mxu0 %v2380
        %3051 = vmatprep.subr.mxu0 0.0
        %3052 = vmatpush1.msra.mxu0 %v2381
        %3053 = vmatprep.subr.mxu0 0.0
        %3054 = vmatpush1.msra.mxu0 0.0
        %3055 = vmatprep.subr.mxu0 0.0
        %3056 = vmatpush1.msra.mxu0 0.0
        %3057 = vmatprep.subr.mxu0 0.0
        %3058 = vmatpush1.msra.mxu0 0.0
        %3059 = vmatprep.subr.mxu0 0.0
        %3060 = vmatpush1.msra.mxu0 0.0
        %3061 = vmatprep.subr.mxu0 0.0
        %3062 = vmatpush1.msra.mxu0 0.0
        %3063 = vmatprep.subr.mxu0 0.0
        %3064 = vmatpush1.msra.mxu0 0.0
        %3065 = vmatprep.subr.mxu0 0.0
        %3066 = vmatpush1.msra.mxu0 0.0
        %3067 = vmatprep.subr.mxu0 0.0
        %3068 = vmatpush1.msra.mxu0 0.0
        %3069 = vmatprep.subr.mxu0 0.0
        %3070 = vmatpush1.msra.mxu0 0.0
        %3071 = vmatprep.subr.mxu0 0.0
        %3072 = vmatpush1.msra.mxu0 0.0
        %3073 = vmatprep.subr.mxu0 0.0
        %3074 = vmatpush1.msra.mxu0 0.0
        %3075 = vmatprep.subr.mxu0 0.0
        %3076 = vmatpush1.msra.mxu0 0.0
        %3077 = vmatprep.subr.mxu0 0.0
        %3078 = vmatpush1.msra.mxu0 0.0
        %3079 = vmatprep.subr.mxu0 0.0
        %3080 = vmatpush1.msra.mxu0 0.0
        %3081 = vmatprep.subr.mxu0 0.0
        %3082 = vmatpush1.msra.mxu0 0.0
        %3083 = vmatprep.subr.mxu0 0.0
        %3084 = vmatpush1.msra.mxu0 0.0
        %3085 = vmatprep.subr.mxu0 0.0
        %3086 = vmatpush1.msra.mxu0 0.0
        %3087 = vmatprep.subr.mxu0 0.0
        %3088 = vmatpush1.msra.mxu0 0.0
        %3089 = vmatprep.subr.mxu0 0.0
        %3090 = vmatpush1.msra.mxu0 0.0
        %3091 = vmatprep.subr.mxu0 0.0
        %3092 = vmatpush1.msra.mxu0 0.0
        %3093 = vmatprep.subr.mxu0 0.0
        %3094 = vmatpush1.msra.mxu0 0.0
        %3095 = vmatprep.subr.mxu0 0.0
        %3096 = vmatpush1.msra.mxu0 0.0
        %3097 = vmatprep.subr.mxu0 0.0
        %3098 = vmatpush1.msra.mxu0 0.0
        %3099 = vmatprep.subr.mxu0 0.0
        %3100 = vmatpush1.msra.mxu0 0.0
        %3101 = vmatprep.subr.mxu0 0.0
        %3102 = vmatpush1.msra.mxu0 0.0
        %3103 = vmatprep.subr.mxu0 0.0
        %3104 = vmatpush1.msra.mxu0 0.0
        %3105 = vmatprep.subr.mxu0 0.0
        %3106 = vmatpush1.msra.mxu0 0.0
        %3107 = vmatprep.subr.mxu0 0.0
        %3108 = vmatpush1.msra.mxu0 0.0
        %3109 = vmatprep.mubr.f32.mxu0 0.0
        %3110 = vmatmul.mubr.f32.gmra.mrb[0].mxu0 %v3043
        %v3111 = vpop.f32.mrb[0].mxu0
        %v3112 = vadd.f32 0.0, %v3111
        %v3113 = vpop.f32.mrb[0].mxu0
        %3114 = vdwg.mxu0
        %v3115 = vadd.f32 %v2867, %v3112
        %3116 = vrot.lane.b32.xlu0 %v2179, 32
        %v3117 = vpop.permute.xlu0 %3116
        %3118 = vrot.lane.b32.xlu0 %v2267, 32
        %v3119 = vpop.permute.xlu0 %3118
        %3120 = vrot.lane.b32.xlu0 %v2272, 32
        %v3121 = vpop.permute.xlu0 %3120
        %v3122 = vsel %vm1037, %v3117, 0
        %v3124 = vsel %vm1037, %v3119, 0
        %v3126 = vsel %vm1037, %v3121, 0
        %3128 = vmatprep.subr.mxu0 0.0
        %3129 = vmatpush1.xpose.msra.mxu0 %v3124
        %3130 = vmatprep.subr.mxu0 0.0
        %3131 = vmatpush1.xpose.msra.mxu0 %v3126
        %3132 = vmatprep.subr.mxu0 0.0
        %3133 = vmatpush1.xpose.msra.mxu0 0.0
        %3134 = vmatprep.subr.mxu0 0.0
        %3135 = vmatpush1.xpose.msra.mxu0 0.0
        %3136 = vmatprep.subr.mxu0 0.0
        %3137 = vmatpush1.xpose.msra.mxu0 0.0
        %3138 = vmatprep.subr.mxu0 0.0
        %3139 = vmatpush1.xpose.msra.mxu0 0.0
        %3140 = vmatprep.subr.mxu0 0.0
        %3141 = vmatpush1.xpose.msra.mxu0 0.0
        %3142 = vmatprep.subr.mxu0 0.0
        %3143 = vmatpush1.xpose.msra.mxu0 0.0
        %3144 = vmatprep.subr.mxu0 0.0
        %3145 = vmatpush1.xpose.msra.mxu0 0.0
        %3146 = vmatprep.subr.mxu0 0.0
        %3147 = vmatpush1.xpose.msra.mxu0 0.0
        %3148 = vmatprep.subr.mxu0 0.0
        %3149 = vmatpush1.xpose.msra.mxu0 0.0
        %3150 = vmatprep.subr.mxu0 0.0
        %3151 = vmatpush1.xpose.msra.mxu0 0.0
        %3152 = vmatprep.subr.mxu0 0.0
        %3153 = vmatpush1.xpose.msra.mxu0 0.0
        %3154 = vmatprep.subr.mxu0 0.0
        %3155 = vmatpush1.xpose.msra.mxu0 0.0
        %3156 = vmatprep.subr.mxu0 0.0
        %3157 = vmatpush1.xpose.msra.mxu0 0.0
        %3158 = vmatprep.subr.mxu0 0.0
        %3159 = vmatpush1.xpose.msra.mxu0 0.0
        %3160 = vmatprep.subr.mxu0 0.0
        %3161 = vmatpush1.xpose.msra.mxu0 0.0
        %3162 = vmatprep.subr.mxu0 0.0
        %3163 = vmatpush1.xpose.msra.mxu0 0.0
        %3164 = vmatprep.subr.mxu0 0.0
        %3165 = vmatpush1.xpose.msra.mxu0 0.0
        %3166 = vmatprep.subr.mxu0 0.0
        %3167 = vmatpush1.xpose.msra.mxu0 0.0
        %3168 = vmatprep.subr.mxu0 0.0
        %3169 = vmatpush1.xpose.msra.mxu0 0.0
        %3170 = vmatprep.subr.mxu0 0.0
        %3171 = vmatpush1.xpose.msra.mxu0 0.0
        %3172 = vmatprep.subr.mxu0 0.0
        %3173 = vmatpush1.xpose.msra.mxu0 0.0
        %3174 = vmatprep.subr.mxu0 0.0
        %3175 = vmatpush1.xpose.msra.mxu0 0.0
        %3176 = vmatprep.subr.mxu0 0.0
        %3177 = vmatpush1.xpose.msra.mxu0 0.0
        %3178 = vmatprep.subr.mxu0 0.0
        %3179 = vmatpush1.xpose.msra.mxu0 0.0
        %3180 = vmatprep.subr.mxu0 0.0
        %3181 = vmatpush1.xpose.msra.mxu0 0.0
        %3182 = vmatprep.subr.mxu0 0.0
        %3183 = vmatpush1.xpose.msra.mxu0 0.0
        %3184 = vmatprep.subr.mxu0 0.0
        %3185 = vmatpush1.xpose.msra.mxu0 0.0
        %3186 = vmatprep.subr.mxu0 0.0
        %3187 = vmatpush1.xpose.msra.mxu0 0.0
        %3188 = vmatprep.subr.mxu0 0.0
        %3189 = vmatpush1.xpose.msra.mxu0 0.0
        %3190 = vmatprep.subr.mxu0 0.0
        %3191 = vmatpush1.xpose.msra.mxu0 0.0
        %3192 = vmatprep.mubr.f32.mxu0 0.0
        %3193 = vmatmul.mubr.f32.gmra.mrb[0].mxu0 %v3122
        %v3194 = vpop.f32.mrb[0].mxu0
        %v3195 = vadd.f32 0.0, %v3194
        %v3196 = vpop.f32.mrb[0].mxu0
        %3197 = vdwg.mxu0
        %v3198 = vsel %vm2465, %v3195, -inf
        %3199 = vmax.xlane.f32.xlu0 %v3198
        %v3200 = vpop.xlane.xlu0 %3199
        %v3201 = vsub.f32 %v3195, %v3200
        %v3202 = vmul.f32 %v3201, 1.442695
        %v3203 = vpow.pop %v3202
        %v3204 = vsel %vm2465, %v3203, 0.0
        %3205 = vadd.xlane.f32.xlu0 %v3204
        %v3206 = vpop.xlane.xlu0 %3205
        %v3207 = vrcp.pop %v3206
        %v3208 = vmul.f32 %v3203, %v3207
        %3209 = vrot.lane.b32.xlu0 %v2362, 32
        %v3210 = vpop.permute.xlu0 %3209
        %3211 = vrot.lane.b32.xlu0 %v2367, 32
        %v3212 = vpop.permute.xlu0 %3211
        %v3216 = vsel %vm2465, %v3208, 0
        %3218 = vmatprep.subr.mxu0 0.0
        %3219 = vmatpush1.msra.mxu0 %v3210
        %3220 = vmatprep.subr.mxu0 0.0
        %3221 = vmatpush1.msra.mxu0 %v3212
        %3222 = vmatprep.subr.mxu0 0.0
        %3223 = vmatpush1.msra.mxu0 0.0
        %3224 = vmatprep.subr.mxu0 0.0
        %3225 = vmatpush1.msra.mxu0 0.0
        %3226 = vmatprep.subr.mxu0 0.0
        %3227 = vmatpush1.msra.mxu0 0.0
        %3228 = vmatprep.subr.mxu0 0.0
        %3229 = vmatpush1.msra.mxu0 0.0
        %3230 = vmatprep.subr.mxu0 0.0
        %3231 = vmatpush1.msra.mxu0 0.0
        %3232 = vmatprep.subr.mxu0 0.0
        %3233 = vmatpush1.msra.mxu0 0.0
        %3234 = vmatprep.subr.mxu0 0.0
        %3235 = vmatpush1.msra.mxu0 0.0
        %3236 = vmatprep.subr.mxu0 0.0
        %3237 = vmatpush1.msra.mxu0 0.0
        %3238 = vmatprep.subr.mxu0 0.0
        %3239 = vmatpush1.msra.mxu0 0.0
        %3240 = vmatprep.subr.mxu0 0.0
        %3241 = vmatpush1.msra.mxu0 0.0
        %3242 = vmatprep.subr.mxu0 0.0
        %3243 = vmatpush1.msra.mxu0 0.0
        %3244 = vmatprep.subr.mxu0 0.0
        %3245 = vmatpush1.msra.mxu0 0.0
        %3246 = vmatprep.subr.mxu0 0.0
        %3247 = vmatpush1.msra.mxu0 0.0
        %3248 = vmatprep.subr.mxu0 0.0
        %3249 = vmatpush1.msra.mxu0 0.0
        %3250 = vmatprep.subr.mxu0 0.0
        %3251 = vmatpush1.msra.mxu0 0.0
        %3252 = vmatprep.subr.mxu0 0.0
        %3253 = vmatpush1.msra.mxu0 0.0
        %3254 = vmatprep.subr.mxu0 0.0
        %3255 = vmatpush1.msra.mxu0 0.0
        %3256 = vmatprep.subr.mxu0 0.0
        %3257 = vmatpush1.msra.mxu0 0.0
        %3258 = vmatprep.subr.mxu0 0.0
        %3259 = vmatpush1.msra.mxu0 0.0
        %3260 = vmatprep.subr.mxu0 0.0
        %3261 = vmatpush1.msra.mxu0 0.0
        %3262 = vmatprep.subr.mxu0 0.0
        %3263 = vmatpush1.msra.mxu0 0.0
        %3264 = vmatprep.subr.mxu0 0.0
        %3265 = vmatpush1.msra.mxu0 0.0
        %3266 = vmatprep.subr.mxu0 0.0
        %3267 = vmatpush1.msra.mxu0 0.0
        %3268 = vmatprep.subr.mxu0 0.0
        %3269 = vmatpush1.msra.mxu0 0.0
        %3270 = vmatprep.subr.mxu0 0.0
        %3271 = vmatpush1.msra.mxu0 0.0
        %3272 = vmatprep.subr.mxu0 0.0
        %3273 = vmatpush1.msra.mxu0 0.0
        %3274 = vmatprep.subr.mxu0 0.0
        %3275 = vmatpush1.msra.mxu0 0.0
        %3276 = vmatprep.subr.mxu0 0.0
        %3277 = vmatpush1.msra.mxu0 0.0
        %3278 = vmatprep.subr.mxu0 0.0
        %3279 = vmatpush1.msra.mxu0 0.0
        %3280 = vmatprep.subr.mxu0 0.0
        %3281 = vmatpush1.msra.mxu0 0.0
        %3282 = vmatprep.mubr.f32.mxu0 0.0
        %3283 = vmatmul.mubr.f32.gmra.mrb[0].mxu0 %v3216
        %v3284 = vpop.f32.mrb[0].mxu0
        %v3285 = vadd.f32 0.0, %v3284
        %v3286 = vpop.f32.mrb[0].mxu0
        %3287 = vdwg.mxu0
        %v3289 = vsel %vm1037, %v3285, 0
        %3291 = vmatprep.subr.mxu0 0.0
        %3292 = vmatpush1.msra.mxu0 %v2382
        %3293 = vmatprep.subr.mxu0 0.0
        %3294 = vmatpush1.msra.mxu0 %v2383
        %3295 = vmatprep.subr.mxu0 0.0
        %3296 = vmatpush1.msra.mxu0 %v2384
        %3297 = vmatprep.subr.mxu0 0.0
        %3298 = vmatpush1.msra.mxu0 %v2385
        %3299 = vmatprep.subr.mxu0 0.0
        %3300 = vmatpush1.msra.mxu0 0.0
        %3301 = vmatprep.subr.mxu0 0.0
        %3302 = vmatpush1.msra.mxu0 0.0
        %3303 = vmatprep.subr.mxu0 0.0
        %3304 = vmatpush1.msra.mxu0 0.0
        %3305 = vmatprep.subr.mxu0 0.0
        %3306 = vmatpush1.msra.mxu0 0.0
        %3307 = vmatprep.subr.mxu0 0.0
        %3308 = vmatpush1.msra.mxu0 0.0
        %3309 = vmatprep.subr.mxu0 0.0
        %3310 = vmatpush1.msra.mxu0 0.0
        %3311 = vmatprep.subr.mxu0 0.0
        %3312 = vmatpush1.msra.mxu0 0.0
        %3313 = vmatprep.subr.mxu0 0.0
        %3314 = vmatpush1.msra.mxu0 0.0
        %3315 = vmatprep.subr.mxu0 0.0
        %3316 = vmatpush1.msra.mxu0 0.0
        %3317 = vmatprep.subr.mxu0 0.0
        %3318 = vmatpush1.msra.mxu0 0.0
        %3319 = vmatprep.subr.mxu0 0.0
        %3320 = vmatpush1.msra.mxu0 0.0
        %3321 = vmatprep.subr.mxu0 0.0
        %3322 = vmatpush1.msra.mxu0 0.0
        %3323 = vmatprep.subr.mxu0 0.0
        %3324 = vmatpush1.msra.mxu0 0.0
        %3325 = vmatprep.subr.mxu0 0.0
        %3326 = vmatpush1.msra.mxu0 0.0
        %3327 = vmatprep.subr.mxu0 0.0
        %3328 = vmatpush1.msra.mxu0 0.0
        %3329 = vmatprep.subr.mxu0 0.0
        %3330 = vmatpush1.msra.mxu0 0.0
        %3331 = vmatprep.subr.mxu0 0.0
        %3332 = vmatpush1.msra.mxu0 0.0
        %3333 = vmatprep.subr.mxu0 0.0
        %3334 = vmatpush1.msra.mxu0 0.0
        %3335 = vmatprep.subr.mxu0 0.0
        %3336 = vmatpush1.msra.mxu0 0.0
        %3337 = vmatprep.subr.mxu0 0.0
        %3338 = vmatpush1.msra.mxu0 0.0
        %3339 = vmatprep.subr.mxu0 0.0
        %3340 = vmatpush1.msra.mxu0 0.0
        %3341 = vmatprep.subr.mxu0 0.0
        %3342 = vmatpush1.msra.mxu0 0.0
        %3343 = vmatprep.subr.mxu0 0.0
        %3344 = vmatpush1.msra.mxu0 0.0
        %3345 = vmatprep.subr.mxu0 0.0
        %3346 = vmatpush1.msra.mxu0 0.0
        %3347 = vmatprep.subr.mxu0 0.0
        %3348 = vmatpush1.msra.mxu0 0.0
        %3349 = vmatprep.subr.mxu0 0.0
        %3350 = vmatpush1.msra.mxu0 0.0
        %3351 = vmatprep.subr.mxu0 0.0
        %3352 = vmatpush1.msra.mxu0 0.0
        %3353 = vmatprep.subr.mxu0 0.0
        %3354 = vmatpush1.msra.mxu0 0.0
        %3355 = vmatprep.mubr.f32.mxu0 0.0
        %3356 = vmatmul.mubr.f32.gmra.mrb[0].mxu0 %v3289
        %v3357 = vpop.f32.mrb[0].mxu0
        %v3358 = vadd.f32 0.0, %v3357
        %v3359 = vpop.f32.mrb[0].mxu0
        %3360 = vdwg.mxu0
        %v3361 = vadd.f32 %v3115, %v3358
        %v3362 = vlaneseq
        %v3363 = vshrl.u32 %v3362, 7
        %v3364 = vsub.s32 7, %v3363
        %v3365 = vrot.slane %v680, %v3364
        %v3366 = vadd.f32 %v3361, %v3365
        %v3367 = vadd.f32 %v2016, %v3366
        %3368 = vadd.xlane.f32.xlu0 %v3367
        %v3369 = vpop.xlane.xlu0 %3368
        %v3370 = vmul.f32 %v3369, %v1997
        %v3371 = vsub.f32 %v3367, %v3370
        %v3372 = vmul.f32 %v3371, %v3371
        %3373 = vadd.xlane.f32.xlu0 %v3372
        %v3374 = vpop.xlane.xlu0 %3373
        %v3375 = vmul.f32 %v3374, %v1997
        %v3376 = vadd.f32 %v3375, 1e-05
        %v3377 = vrsqrt.pop %v3376
        %v3378 = vmul.f32 %v3371, %v3377
        %v3379 = vlaneseq
        %v3380 = vshrl.u32 %v3379, 7
        %v3381 = vsub.s32 2, %v3380
        %v3382 = vrot.slane %v681, %v3381
        %v3383 = vmul.f32 %v3378, %v3382
        %v3384 = vlaneseq
        %v3385 = vshrl.u32 %v3384, 7
        %v3386 = vsub.s32 3, %v3385
        %v3387 = vrot.slane %v681, %v3386
        %v3388 = vadd.f32 %v3383, %v3387
        %v3389 = vld [vmem:[%s574] sm:$0xff]
        %v3390 = vld [vmem:[%s574 + $0x8] sm:$0xff]
        %v3391 = vld [vmem:[%s574 + $0x10] sm:$0xff]
        %v3392 = vld [vmem:[%s574 + $0x18] sm:$0xff]
        %v3393 = vld [vmem:[%s574 + $0x20] sm:$0xff]
        %v3394 = vld [vmem:[%s574 + $0x28] sm:$0xff]
        %v3395 = vld [vmem:[%s574 + $0x30] sm:$0xff]
        %v3396 = vld [vmem:[%s574 + $0x38] sm:$0xff]
        %v3397 = vld [vmem:[%s574 + $0x40] sm:$0xff]
        %v3398 = vld [vmem:[%s574 + $0x48] sm:$0xff]
        %v3399 = vld [vmem:[%s574 + $0x50] sm:$0xff]
        %v3400 = vld [vmem:[%s574 + $0x58] sm:$0xff]
        %v3401 = vld [vmem:[%s574 + $0x60] sm:$0xff]
        %v3402 = vld [vmem:[%s574 + $0x68] sm:$0xff]
        %v3403 = vld [vmem:[%s574 + $0x70] sm:$0xff]
        %v3404 = vld [vmem:[%s574 + $0x78] sm:$0xff]
        %v3405 = vld [vmem:[%s671] sm:$0x3]
        %v3407 = vlaneseq
        %v3408 = vshrl.u32 %v3407, 7
        %v3409 = vsub.s32 0, %v3408
        %v3410 = vrot.slane %v3405, %v3409
        %v3411 = vlaneseq
        %v3412 = vshrl.u32 %v3411, 7
        %v3413 = vsub.s32 1, %v3412
        %v3414 = vrot.slane %v3405, %v3413
        %v3433 = vunpack.c.l.b16 %v3389
        %v3434 = vunpack.c.h.b16 %v3389
        %v3435 = vunpack.c.l.b16 %v3390
        %v3436 = vunpack.c.h.b16 %v3390
        %v3437 = vunpack.c.l.b16 %v3391
        %v3438 = vunpack.c.h.b16 %v3391
        %v3439 = vunpack.c.l.b16 %v3392
        %v3440 = vunpack.c.h.b16 %v3392
        %v3441 = vunpack.c.l.b16 %v3393
        %v3442 = vunpack.c.h.b16 %v3393
        %v3443 = vunpack.c.l.b16 %v3394
        %v3444 = vunpack.c.h.b16 %v3394
        %v3445 = vunpack.c.l.b16 %v3395
        %v3446 = vunpack.c.h.b16 %v3395
        %v3447 = vunpack.c.l.b16 %v3396
        %v3448 = vunpack.c.h.b16 %v3396
        %v3449 = vunpack.c.l.b16 %v3397
        %v3450 = vunpack.c.h.b16 %v3397
        %v3451 = vunpack.c.l.b16 %v3398
        %v3452 = vunpack.c.h.b16 %v3398
        %v3453 = vunpack.c.l.b16 %v3399
        %v3454 = vunpack.c.h.b16 %v3399
        %v3455 = vunpack.c.l.b16 %v3400
        %v3456 = vunpack.c.h.b16 %v3400
        %v3457 = vunpack.c.l.b16 %v3401
        %v3458 = vunpack.c.h.b16 %v3401
        %v3459 = vunpack.c.l.b16 %v3402
        %v3460 = vunpack.c.h.b16 %v3402
        %v3461 = vunpack.c.l.b16 %v3403
        %v3462 = vunpack.c.h.b16 %v3403
        %v3463 = vunpack.c.l.b16 %v3404
        %v3464 = vunpack.c.h.b16 %v3404
        %v3465 = vpack.c.b16 %v3435, %v3433
        %v3466 = vpack.c.b16 %v3436, %v3434
        %v3467 = vpack.c.b16 %v3439, %v3437
        %v3468 = vpack.c.b16 %v3440, %v3438
        %v3469 = vpack.c.b16 %v3443, %v3441
        %v3470 = vpack.c.b16 %v3444, %v3442
        %v3471 = vpack.c.b16 %v3447, %v3445
        %v3472 = vpack.c.b16 %v3448, %v3446
        %v3473 = vpack.c.b16 %v3451, %v3449
        %v3474 = vpack.c.b16 %v3452, %v3450
        %v3475 = vpack.c.b16 %v3455, %v3453
        %v3476 = vpack.c.b16 %v3456, %v3454
        %v3477 = vpack.c.b16 %v3459, %v3457
        %v3478 = vpack.c.b16 %v3460, %v3458
        %v3479 = vpack.c.b16 %v3463, %v3461
        %v3480 = vpack.c.b16 %v3464, %v3462
        %3497 = vmatprep.subr.bf16.mxu0 %v3466
        %3498 = vmatpush1.bf16.msra.mxu0 %v3465
        %3499 = vmatprep.subr.bf16.mxu0 %v3468
        %3500 = vmatpush1.bf16.msra.mxu0 %v3467
        %3501 = vmatprep.subr.bf16.mxu0 %v3470
        %3502 = vmatpush1.bf16.msra.mxu0 %v3469
        %3503 = vmatprep.subr.bf16.mxu0 %v3472
        %3504 = vmatpush1.bf16.msra.mxu0 %v3471
        %3505 = vmatprep.subr.bf16.mxu0 %v3474
        %3506 = vmatpush1.bf16.msra.mxu0 %v3473
        %3507 = vmatprep.subr.bf16.mxu0 %v3476
        %3508 = vmatpush1.bf16.msra.mxu0 %v3475
        %3509 = vmatprep.subr.bf16.mxu0 %v3478
        %3510 = vmatpush1.bf16.msra.mxu0 %v3477
        %3511 = vmatprep.subr.bf16.mxu0 %v3480
        %3512 = vmatpush1.bf16.msra.mxu0 %v3479
        %3513 = vmatprep.subr.bf16.mxu0 0
        %3514 = vmatpush1.bf16.msra.mxu0 0
        %3515 = vmatprep.subr.bf16.mxu0 0
        %3516 = vmatpush1.bf16.msra.mxu0 0
        %3517 = vmatprep.subr.bf16.mxu0 0
        %3518 = vmatpush1.bf16.msra.mxu0 0
        %3519 = vmatprep.subr.bf16.mxu0 0
        %3520 = vmatpush1.bf16.msra.mxu0 0
        %3521 = vmatprep.subr.bf16.mxu0 0
        %3522 = vmatpush1.bf16.msra.mxu0 0
        %3523 = vmatprep.subr.bf16.mxu0 0
        %3524 = vmatpush1.bf16.msra.mxu0 0
        %3525 = vmatprep.subr.bf16.mxu0 0
        %3526 = vmatpush1.bf16.msra.mxu0 0
        %3527 = vmatprep.subr.bf16.mxu0 0
        %3528 = vmatpush1.bf16.msra.mxu0 0
        %3529 = vmatprep.mubr.f32.mxu0 0.0
        %3530 = vmatmul.mubr.f32.gmra.mrb[0].mxu0 %v3388
        %v3531 = vpop.f32.mrb[0].mxu0
        %v3532 = vadd.f32 %v3410, %v3531
        %v3533 = vpop.f32.mrb[0].mxu0
        %v3534 = vadd.f32 %v3414, %v3533
        %3535 = vdwg.mxu0
        %v3536 = vmax.f32 %v3532, 0.0
        %v3537 = vmax.f32 %v3534, 0.0
        %v3538 = vld [vmem:[%s583] sm:$0xf]
        %v3539 = vld [vmem:[%s583 + $0x4] sm:$0xf]
        %v3540 = vld [vmem:[%s583 + $0x8] sm:$0xf]
        %v3541 = vld [vmem:[%s583 + $0xc] sm:$0xf]
        %v3542 = vld [vmem:[%s583 + $0x10] sm:$0xf]
        %v3543 = vld [vmem:[%s583 + $0x14] sm:$0xf]
        %v3544 = vld [vmem:[%s583 + $0x18] sm:$0xf]
        %v3545 = vld [vmem:[%s583 + $0x1c] sm:$0xf]
        %v3546 = vld [vmem:[%s583 + $0x20] sm:$0xf]
        %v3547 = vld [vmem:[%s583 + $0x24] sm:$0xf]
        %v3548 = vld [vmem:[%s583 + $0x28] sm:$0xf]
        %v3549 = vld [vmem:[%s583 + $0x2c] sm:$0xf]
        %v3550 = vld [vmem:[%s583 + $0x30] sm:$0xf]
        %v3551 = vld [vmem:[%s583 + $0x34] sm:$0xf]
        %v3552 = vld [vmem:[%s583 + $0x38] sm:$0xf]
        %v3553 = vld [vmem:[%s583 + $0x3c] sm:$0xf]
        %v3554 = vld [vmem:[%s583 + $0x40] sm:$0xf]
        %v3555 = vld [vmem:[%s583 + $0x44] sm:$0xf]
        %v3556 = vld [vmem:[%s583 + $0x48] sm:$0xf]
        %v3557 = vld [vmem:[%s583 + $0x4c] sm:$0xf]
        %v3558 = vld [vmem:[%s583 + $0x50] sm:$0xf]
        %v3559 = vld [vmem:[%s583 + $0x54] sm:$0xf]
        %v3560 = vld [vmem:[%s583 + $0x58] sm:$0xf]
        %v3561 = vld [vmem:[%s583 + $0x5c] sm:$0xf]
        %v3562 = vld [vmem:[%s583 + $0x60] sm:$0xf]
        %v3563 = vld [vmem:[%s583 + $0x64] sm:$0xf]
        %v3564 = vld [vmem:[%s583 + $0x68] sm:$0xf]
        %v3565 = vld [vmem:[%s583 + $0x6c] sm:$0xf]
        %v3566 = vld [vmem:[%s583 + $0x70] sm:$0xf]
        %v3567 = vld [vmem:[%s583 + $0x74] sm:$0xf]
        %v3568 = vld [vmem:[%s583 + $0x78] sm:$0xf]
        %v3569 = vld [vmem:[%s583 + $0x7c] sm:$0xf]
        %v3570 = vlaneseq
        %v3571 = vshrl.u32 %v3570, 7
        %v3572 = vsub.s32 6, %v3571
        %v3573 = vrot.slane %v681, %v3572
        %v3606 = vunpack.c.l.b16 %v3538
        %v3607 = vunpack.c.l.b16 %v3539
        %v3608 = vunpack.c.l.b16 %v3540
        %v3609 = vunpack.c.l.b16 %v3541
        %v3610 = vunpack.c.l.b16 %v3542
        %v3611 = vunpack.c.l.b16 %v3543
        %v3612 = vunpack.c.l.b16 %v3544
        %v3613 = vunpack.c.l.b16 %v3545
        %v3614 = vunpack.c.l.b16 %v3546
        %v3615 = vunpack.c.l.b16 %v3547
        %v3616 = vunpack.c.l.b16 %v3548
        %v3617 = vunpack.c.l.b16 %v3549
        %v3618 = vunpack.c.l.b16 %v3550
        %v3619 = vunpack.c.l.b16 %v3551
        %v3620 = vunpack.c.l.b16 %v3552
        %v3621 = vunpack.c.l.b16 %v3553
        %v3622 = vunpack.c.l.b16 %v3554
        %v3623 = vunpack.c.l.b16 %v3555
        %v3624 = vunpack.c.l.b16 %v3556
        %v3625 = vunpack.c.l.b16 %v3557
        %v3626 = vunpack.c.l.b16 %v3558
        %v3627 = vunpack.c.l.b16 %v3559
        %v3628 = vunpack.c.l.b16 %v3560
        %v3629 = vunpack.c.l.b16 %v3561
        %v3630 = vunpack.c.l.b16 %v3562
        %v3631 = vunpack.c.l.b16 %v3563
        %v3632 = vunpack.c.l.b16 %v3564
        %v3633 = vunpack.c.l.b16 %v3565
        %v3634 = vunpack.c.l.b16 %v3566
        %v3635 = vunpack.c.l.b16 %v3567
        %v3636 = vunpack.c.l.b16 %v3568
        %v3637 = vunpack.c.l.b16 %v3569
        %v3638 = vpack.c.b16 %v3607, %v3606
        %v3639 = vpack.c.b16 %v3609, %v3608
        %v3640 = vpack.c.b16 %v3611, %v3610
        %v3641 = vpack.c.b16 %v3613, %v3612
        %v3642 = vpack.c.b16 %v3615, %v3614
        %v3643 = vpack.c.b16 %v3617, %v3616
        %v3644 = vpack.c.b16 %v3619, %v3618
        %v3645 = vpack.c.b16 %v3621, %v3620
        %v3646 = vpack.c.b16 %v3623, %v3622
        %v3647 = vpack.c.b16 %v3625, %v3624
        %v3648 = vpack.c.b16 %v3627, %v3626
        %v3649 = vpack.c.b16 %v3629, %v3628
        %v3650 = vpack.c.b16 %v3631, %v3630
        %v3651 = vpack.c.b16 %v3633, %v3632
        %v3652 = vpack.c.b16 %v3635, %v3634
        %v3653 = vpack.c.b16 %v3637, %v3636
        %3670 = vmatprep.subr.bf16.mxu0 0
        %3671 = vmatpush1.bf16.msra.mxu0 %v3638
        %3672 = vmatprep.subr.bf16.mxu0 0
        %3673 = vmatpush1.bf16.msra.mxu0 %v3639
        %3674 = vmatprep.subr.bf16.mxu0 0
        %3675 = vmatpush1.bf16.msra.mxu0 %v3640
        %3676 = vmatprep.subr.bf16.mxu0 0
        %3677 = vmatpush1.bf16.msra.mxu0 %v3641
        %3678 = vmatprep.subr.bf16.mxu0 0
        %3679 = vmatpush1.bf16.msra.mxu0 %v3642
        %3680 = vmatprep.subr.bf16.mxu0 0
        %3681 = vmatpush1.bf16.msra.mxu0 %v3643
        %3682 = vmatprep.subr.bf16.mxu0 0
        %3683 = vmatpush1.bf16.msra.mxu0 %v3644
        %3684 = vmatprep.subr.bf16.mxu0 0
        %3685 = vmatpush1.bf16.msra.mxu0 %v3645
        %3686 = vmatprep.subr.bf16.mxu0 0
        %3687 = vmatpush1.bf16.msra.mxu0 %v3646
        %3688 = vmatprep.subr.bf16.mxu0 0
        %3689 = vmatpush1.bf16.msra.mxu0 %v3647
        %3690 = vmatprep.subr.bf16.mxu0 0
        %3691 = vmatpush1.bf16.msra.mxu0 %v3648
        %3692 = vmatprep.subr.bf16.mxu0 0
        %3693 = vmatpush1.bf16.msra.mxu0 %v3649
        %3694 = vmatprep.subr.bf16.mxu0 0
        %3695 = vmatpush1.bf16.msra.mxu0 %v3650
        %3696 = vmatprep.subr.bf16.mxu0 0
        %3697 = vmatpush1.bf16.msra.mxu0 %v3651
        %3698 = vmatprep.subr.bf16.mxu0 0
        %3699 = vmatpush1.bf16.msra.mxu0 %v3652
        %3700 = vmatprep.subr.bf16.mxu0 0
        %3701 = vmatpush1.bf16.msra.mxu0 %v3653
        %3702 = vmatprep.mubr.f32.mxu0 %v3537
        %3703 = vmatmul.mubr.f32.gmra.mrb[0].mxu0 %v3536
        %v3704 = vpop.f32.mrb[0].mxu0
        %v3705 = vadd.f32 %v3573, %v3704
        %v3706 = vpop.f32.mrb[0].mxu0
        %3707 = vdwg.mxu0
        %v3708 = vadd.f32 %v3388, %v3705
        %3709 = vadd.xlane.f32.xlu0 %v3708
        %v3710 = vpop.xlane.xlu0 %3709
        %v3711 = vmul.f32 %v3710, %v1997
        %v3712 = vsub.f32 %v3708, %v3711
        %v3713 = vmul.f32 %v3712, %v3712
        %3714 = vadd.xlane.f32.xlu0 %v3713
        %v3715 = vpop.xlane.xlu0 %3714
        %v3716 = vmul.f32 %v3715, %v1997
        %v3717 = vadd.f32 %v3716, 1e-05
        %v3718 = vrsqrt.pop %v3717
        %v3719 = vmul.f32 %v3712, %v3718
        %v3720 = vlaneseq
        %v3721 = vshrl.u32 %v3720, 7
        %v3722 = vsub.s32 4, %v3721
        %v3723 = vrot.slane %v681, %v3722
        %v3724 = vmul.f32 %v3719, %v3723
        %v3725 = vlaneseq
        %v3726 = vshrl.u32 %v3725, 7
        %v3727 = vsub.s32 5, %v3726
        %v3728 = vrot.slane %v681, %v3727
        %v3729 = vadd.f32 %v3724, %v3728
        %3730 = vst [vmem:[%s667] sm:$0xff] %v3729
        %p3731 = scmp.eq.s32.totalorder %s44, 1
        // Predicated region
        $region97: #{tpu_custom_call.1} parent=59 // pred_check
          %p3732 = pneg %p3731
        $region98: #{tpu_custom_call.1} parent=59 // pred_check_branch
          %3734 = sbr.rel (%p3732) target = $region100
        $region99: #{tpu_custom_call.1} parent=59 // pred_region
          %v3735 = vld [vmem:[%s9] sm:$0x3]
          %3736 = vadd.xlane.f32.xlu0 %v3729
          %v3737 = vpop.xlane.xlu0 %3736
          %v3738 = vmul.f32 %v3737, %v1997
          %v3739 = vsub.f32 %v3729, %v3738
          %v3740 = vmul.f32 %v3739, %v3739
          %3741 = vadd.xlane.f32.xlu0 %v3740
          %v3742 = vpop.xlane.xlu0 %3741
          %v3743 = vmul.f32 %v3742, %v1997
          %v3744 = vadd.f32 %v3743, 1e-05
          %v3745 = vrsqrt.pop %v3744
          %v3746 = vmul.f32 %v3739, %v3745
          %v3747 = vlaneseq
          %v3748 = vshrl.u32 %v3747, 7
          %v3749 = vsub.s32 0, %v3748
          %v3750 = vrot.slane %v3735, %v3749
          %v3751 = vmul.f32 %v3746, %v3750
          %v3752 = vlaneseq
          %v3753 = vshrl.u32 %v3752, 7
          %v3754 = vsub.s32 1, %v3753
          %v3755 = vrot.slane %v3735, %v3754
          %v3756 = vadd.f32 %v3751, %v3755
          %3757 = vst [vmem:[%s667] sm:$0xff] %v3756
        $region100: #{tpu_custom_call.1} parent=59 // pred_fallthru
          _
        %s3758 = sand.u32 %s314, 1
        %s3759 = scalar_lea.sflag [#allocation4], %s3758
        %s3760 = sand.u32 %s314, 1
        %s3761 = smul.addr %s3760, 8
        %s3762 = scalar_lea.vmem [#allocation16], %s3761
        // Predicated region
        $region101: #{tpu_custom_call.1} parent=59 // pred_check
          %p3763 = pneg %p324
        $region102: #{tpu_custom_call.1} parent=59 // pred_check_branch
          %3765 = sbr.rel (%p3763) target = $region104
        $region103: #{tpu_custom_call.1} parent=59 // pred_region
          %s3767 = ssub.s32 128, 128
          %3768 = vsyncadd %s3759, %s3767
          %s3769 = smul.addr %s43, 128
          %s3770 = scalar_lea.hbm %s10, %s3769
          %s3772 = sshll.u32 %s3762, 4
          %s3773 = int_to_ptr.vmem [resolvable:$true] %s3772
          %3775 = dma.vmem_to_hbm [thread:$0]  %s3773, 128, %s3770, %s3759
        $region104: #{tpu_custom_call.1} parent=59 // pred_fallthru
          _
      $region60: #{tpu_custom_call.1} parent=5 // pred_fallthru
        _
      %p3776 = scmp.le.s32.totalorder 2, %s34
      // Predicated region
      $region105: #{tpu_custom_call.1} parent=5 // pred_check
        %p3777 = pneg %p3776
      $region106: #{tpu_custom_call.1} parent=5 // pred_check_branch
        %3779 = sbr.rel (%p3777) target = $region108
      $region107: #{tpu_custom_call.1} parent=5 // pred_region
        %s3780 = ssub.s32 %s34, 2
        // Predicated region
        $region109: #{tpu_custom_call.1} parent=107 // pred_check
          %p3781 = pneg %p330
        $region110: #{tpu_custom_call.1} parent=107 // pred_check_branch
          %3783 = sbr.rel (%p3781) target = $region112
        $region111: #{tpu_custom_call.1} parent=107 // pred_region
          %s3784 = sand.u32 %s315, 1
          %s3785 = scalar_lea.sflag [#allocation4], %s3784
          %s3786 = sand.u32 %s315, 1
          %s3787 = smul.addr %s3786, 8
          %s3788 = scalar_lea.vmem [#allocation16], %s3787
          %3789 = dma.done %s3785, 128
        $region112: #{tpu_custom_call.1} parent=107 // pred_fallthru
          _
      $region108: #{tpu_custom_call.1} parent=5 // pred_fallthru
        _
    $region6: #{tpu_custom_call.1} parent=1 // loop_footer
      %s38 = sadd.s32 1, %s34
    $region7: #{tpu_custom_call.1} parent=1 // loop_footer_branch
      %33 = sbr.rel target = $region3
    $region8: #{tpu_custom_call.1} parent=1 // loop_exit
      _
    %3790 = vsyncpa [#allocation3], 1
    %s3791 = scalar_lea.sflag [#allocation3], 1
    %3792 = vsyncpa %s3791, 1
    %3793 = vsyncpa [#allocation6], 1
    %s3794 = scalar_lea.sflag [#allocation6], 1
    %3795 = vsyncpa %s3794, 1
    %3796 = vsyncpa [#allocation9], 1
    %s3797 = scalar_lea.sflag [#allocation9], 1
    %3798 = vsyncpa %s3797, 1
    %3799 = vsyncpa [#allocation12], 1
    %s3800 = scalar_lea.sflag [#allocation12], 1
    %3801 = vsyncpa %s3800, 1
    %3802 = vsyncpa [#allocation15], 1
    %s3803 = scalar_lea.sflag [#allocation15], 1
    %3804 = vsyncpa %s3803, 1
    %3805 = vsyncpa [#allocation4], 1
    %s3806 = scalar_lea.sflag [#allocation4], 1
    %3807 = vsyncpa %s3806, 1

</llo_original>
